<compile_context>
chip_gen: v6e
topology: v6e:2x2x1
jax: 0.10.0
libtpu: 0.0.40
codegen_flags: <defaults>
</compile_context>

<pallas_src>
import functools
import math

import jax
import jax.numpy as jnp
from jax.experimental import pallas as pl
from jax.experimental.pallas import tpu as pltpu


def _layernorm(x, gamma, beta, eps=1e-5):
    """LayerNorm over the last dim (PyTorch nn.LayerNorm defaults)."""
    mean = jnp.mean(x, axis=-1, keepdims=True)
    var = jnp.mean(jnp.square(x - mean), axis=-1, keepdims=True)
    return (x - mean) * jax.lax.rsqrt(var + eps) * gamma + beta


def _encoder_chunk_kernel(x_ref,
                          pw_ref, pb_ref,
                          wq_ref, wk_ref, wv_ref,
                          wo_ref, bo_ref,
                          g1_ref, be1_ref, g2_ref, be2_ref,
                          w1_ref, fb1_ref, w2_ref, fb2_ref,
                          out_ref,
                          *, num_layers, num_heads, head_dim):
    """One (batch-element, chunk) of the TransformerEncoder, fully in VMEM."""
    scale = 1.0 / math.sqrt(head_dim)

    # Input projection (Identity case handled by an identity weight in the wrapper).
    x = x_ref[0].astype(jnp.bfloat16)                      # (Lc, F) bf16
    h = jnp.dot(x, pw_ref[...],
                preferred_element_type=jnp.float32) + pb_ref[...]   # (Lc, E) f32

    for l in range(num_layers):
        # ---------------- multi-head self-attention (mask is None) -------------
        hb = h.astype(jnp.bfloat16)                        # (Lc, E)
        wq_l = wq_ref[l]                                   # (D, D) bf16
        wk_l = wk_ref[l]
        wv_l = wv_ref[l]
        wo_l = wo_ref[l]                                   # (E, E) bf16

        attn_out = jnp.zeros(h.shape, jnp.float32)
        for hh in range(num_heads):
            s = hh * head_dim
            xh = hb[:, s:s + head_dim]                     # (Lc, D) bf16
            qh = jnp.dot(xh, wq_l, preferred_element_type=jnp.float32)
            kh = jnp.dot(xh, wk_l, preferred_element_type=jnp.float32)
            vh = jnp.dot(xh, wv_l, preferred_element_type=jnp.float32)

            # scores: (Lc, Lc) = q . k^T / sqrt(D)   (contract last dims, no transpose)
            logits = jax.lax.dot_general(
                qh.astype(jnp.bfloat16), kh.astype(jnp.bfloat16),
                dimension_numbers=(((1,), (1,)), ((), ())),
                preferred_element_type=jnp.float32) * scale

            m = jnp.max(logits, axis=-1, keepdims=True)
            p = jnp.exp(logits - m)
            denom = jnp.sum(p, axis=-1, keepdims=True)
            attn = p * pl.reciprocal(denom, approx=True)

            ctx_h = jnp.dot(attn.astype(jnp.bfloat16), vh.astype(jnp.bfloat16),
                            preferred_element_type=jnp.float32)       # (Lc, D)

            # fc_out applied head-wise:  ctx @ Wo  ==  sum_h ctx_h @ Wo[s:s+D, :]
            attn_out = attn_out + jnp.dot(
                ctx_h.astype(jnp.bfloat16), wo_l[s:s + head_dim, :],
                preferred_element_type=jnp.float32)
        attn_out = attn_out + bo_ref[l]

        # residual + LayerNorm1 (Dropout = identity at eval)
        x1 = _layernorm(attn_out + h, g1_ref[l], be1_ref[l])

        # ---------------- feed-forward -----------------------------------------
        f = jnp.dot(x1.astype(jnp.bfloat16), w1_ref[l],
                    preferred_element_type=jnp.float32) + fb1_ref[l]
        f = jnp.maximum(f, 0.0)
        f = jnp.dot(f.astype(jnp.bfloat16), w2_ref[l],
                    preferred_element_type=jnp.float32) + fb2_ref[l]

        # residual + LayerNorm2
        h = _layernorm(f + x1, g2_ref[l], be2_ref[l])

    out_ref[0] = h.astype(out_ref.dtype)


def transformer_encoder_forward(x, params, *, num_heads, chunk_size=128):
    """x: (N, S, feature_dim) f32.  Returns (N, S, embed_size) f32."""
    N, S, F = x.shape
    num_layers, _, embed = params['wo'].shape
    head_dim = embed // num_heads

    bf = lambda a: a.astype(jnp.bfloat16)
    if params.get('proj_w') is None:
        # feature_dim == embed_size -> nn.Identity();  identity weight keeps one kernel.
        proj_w = jnp.eye(F, embed, dtype=jnp.float32)
        proj_b = jnp.zeros((1, embed), jnp.float32)
    else:
        proj_w, proj_b = params['proj_w'], params['proj_b']

    weights = [
        bf(proj_w), proj_b,
        bf(params['wq']), bf(params['wk']), bf(params['wv']),
        bf(params['wo']), params['bo'],
        params['ln1_g'], params['ln1_b'], params['ln2_g'], params['ln2_b'],
        bf(params['ffn_w1']), params['ffn_b1'],
        bf(params['ffn_w2']), params['ffn_b2'],
    ]

    def resident_spec(a):
        # Full-array block, constant index_map => fetched once, stays VMEM-resident.
        return pl.BlockSpec(a.shape, lambda b, _n=a.ndim: (0,) * _n)

    kernel = functools.partial(_encoder_chunk_kernel,
                               num_layers=num_layers,
                               num_heads=num_heads,
                               head_dim=head_dim)

    outs = []
    for i in range(0, S, chunk_size):
        x_chunk = x[:, i:i + chunk_size]
        Lc = x_chunk.shape[1]
        out = pl.pallas_call(
            kernel,
            out_shape=jax.ShapeDtypeStruct((N, Lc, embed), jnp.float32),
            grid_spec=pltpu.PrefetchScalarGridSpec(
                num_scalar_prefetch=0,
                grid=(N,),
                in_specs=[pl.BlockSpec((1, Lc, F), lambda b: (b, 0, 0))]
                         + [resident_spec(w) for w in weights],
                out_specs=pl.BlockSpec((1, Lc, embed), lambda b: (b, 0, 0)),
            ),
            compiler_params=pltpu.CompilerParams(
                dimension_semantics=("parallel",)),
        )(x_chunk, *weights)
        outs.append(out)
    return outs[0] if len(outs) == 1 else jnp.concatenate(outs, axis=1)


def init_params(key, feature_dim, embed_size, num_layers, num_heads,
                forward_expansion):
    """Deterministic init mimicking nn.Linear default U(-1/sqrt(fan_in), +)."""
    head_dim = embed_size // num_heads
    ff = forward_expansion * embed_size

    def uniform(k, shape, fan_in):
        bound = 1.0 / math.sqrt(fan_in)
        return jax.random.uniform(k, shape, jnp.float32, -bound, bound)

    keys = jax.random.split(key, 12)
    p = {}
    if feature_dim != embed_size:
        p['proj_w'] = uniform(keys[0], (feature_dim, embed_size), feature_dim)
        p['proj_b'] = uniform(keys[1], (1, embed_size), feature_dim)
    else:
        p['proj_w'] = None
        p['proj_b'] = None
    p['wq'] = uniform(keys[2], (num_layers, head_dim, head_dim), head_dim)
    p['wk'] = uniform(keys[3], (num_layers, head_dim, head_dim), head_dim)
    p['wv'] = uniform(keys[4], (num_layers, head_dim, head_dim), head_dim)
    p['wo'] = uniform(keys[5], (num_layers, embed_size, embed_size), embed_size)
    p['bo'] = uniform(keys[6], (num_layers, 1, embed_size), embed_size)
    p['ln1_g'] = jnp.ones((num_layers, 1, embed_size), jnp.float32)
    p['ln1_b'] = jnp.zeros((num_layers, 1, embed_size), jnp.float32)
    p['ln2_g'] = jnp.ones((num_layers, 1, embed_size), jnp.float32)
    p['ln2_b'] = jnp.zeros((num_layers, 1, embed_size), jnp.float32)
    p['ffn_w1'] = uniform(keys[7], (num_layers, embed_size, ff), embed_size)
    p['ffn_b1'] = uniform(keys[8], (num_layers, 1, ff), embed_size)
    p['ffn_w2'] = uniform(keys[9], (num_layers, ff, embed_size), ff)
    p['ffn_b2'] = uniform(keys[10], (num_layers, 1, embed_size), ff)
    return p


def encoder_reference(x, params, *, num_heads, chunk_size=128):
    """Pure-JAX f32 reference mirroring the PyTorch module (eval, mask=None)."""
    N, S, F = x.shape
    num_layers, _, embed = params['wo'].shape
    head_dim = embed // num_heads

    if params.get('proj_w') is not None:
        h = x @ params['proj_w'] + params['proj_b']
    else:
        h = x

    outs = []
    for i in range(0, S, chunk_size):
        c = h[:, i:i + chunk_size]
        for l in range(num_layers):
            Lc = c.shape[1]
            qkv = c.reshape(N, Lc, num_heads, head_dim)
            q = qkv @ params['wq'][l]
            k = qkv @ params['wk'][l]
            v = qkv @ params['wv'][l]
            energy = jnp.einsum('nqhd,nkhd->nhqk', q, k) / math.sqrt(head_dim)
            attn = jax.nn.softmax(energy, axis=-1)
            ctx = jnp.einsum('nhqk,nkhd->nqhd', attn, v).reshape(N, Lc, embed)
            a = ctx @ params['wo'][l] + params['bo'][l]
            x1 = _layernorm(a + c, params['ln1_g'][l], params['ln1_b'][l])
            f = jnp.maximum(x1 @ params['ffn_w1'][l] + params['ffn_b1'][l], 0.0)
            f = f @ params['ffn_w2'][l] + params['ffn_b2'][l]
            c = _layernorm(f + x1, params['ln2_g'][l], params['ln2_b'][l])
        outs.append(c)
    return jnp.concatenate(outs, axis=1)


if __name__ == "__main__":
    key = jax.random.PRNGKey(0)
    batch, seq, feature_dim = 2, 8, 64
    embed_size, num_heads, num_layers, forward_expansion = 128, 4, 2, 2
    chunk_size = 128

    k_x, k_p = jax.random.split(key)
    x = jax.random.normal(k_x, (batch, seq, feature_dim), jnp.float32)
    params = init_params(k_p, feature_dim, embed_size, num_layers, num_heads,
                         forward_expansion)

    y = transformer_encoder_forward(x, params, num_heads=num_heads,
                                    chunk_size=chunk_size)
    y = jax.block_until_ready(y)

    y_ref = encoder_reference(x, params, num_heads=num_heads,
                              chunk_size=chunk_size)
    assert y.shape == (batch, seq, embed_size)
    max_err = float(jnp.max(jnp.abs(y - y_ref)))
    assert jnp.allclose(y, y_ref, atol=5e-2, rtol=5e-2), max_err

    print("KERNEL_OK")
</pallas_src>

<mosaic_0001>
module attributes {stable_mosaic.version = 11 : i64} {
  func.func @_encoder_chunk_kernel(%arg0: i32, %arg1: memref<1x8x64xf32, #tpu.memory_space<vmem>>, %arg2: memref<64x128xbf16, #tpu.memory_space<vmem>>, %arg3: memref<1x128xf32, #tpu.memory_space<vmem>>, %arg4: memref<2x32x32xbf16, #tpu.memory_space<vmem>>, %arg5: memref<2x32x32xbf16, #tpu.memory_space<vmem>>, %arg6: memref<2x32x32xbf16, #tpu.memory_space<vmem>>, %arg7: memref<2x128x128xbf16, #tpu.memory_space<vmem>>, %arg8: memref<2x1x128xf32, #tpu.memory_space<vmem>>, %arg9: memref<2x1x128xf32, #tpu.memory_space<vmem>>, %arg10: memref<2x1x128xf32, #tpu.memory_space<vmem>>, %arg11: memref<2x1x128xf32, #tpu.memory_space<vmem>>, %arg12: memref<2x1x128xf32, #tpu.memory_space<vmem>>, %arg13: memref<2x128x256xbf16, #tpu.memory_space<vmem>>, %arg14: memref<2x1x256xf32, #tpu.memory_space<vmem>>, %arg15: memref<2x256x128xbf16, #tpu.memory_space<vmem>>, %arg16: memref<2x1x128xf32, #tpu.memory_space<vmem>>, %arg17: memref<1x8x128xf32, #tpu.memory_space<vmem>>) attributes {dimension_semantics = [#tpu.dimension_semantics<parallel>], iteration_bounds = array<i64: 2>, scalar_prefetch = 0 : i64, scratch_operands = 0 : i64, tpu.core_type = #tpu.core_type<tc>, window_params = [{transform_indices = @transform_0, window_bounds = array<i64: 1, 8, 64>}, {pipeline_mode = #tpu.pipeline_mode<synchronous>, transform_indices = @transform_1, window_bounds = array<i64: 64, 128>}, {pipeline_mode = #tpu.pipeline_mode<synchronous>, transform_indices = @transform_2, window_bounds = array<i64: 1, 128>}, {pipeline_mode = #tpu.pipeline_mode<synchronous>, transform_indices = @transform_3, window_bounds = array<i64: 2, 32, 32>}, {pipeline_mode = #tpu.pipeline_mode<synchronous>, transform_indices = @transform_4, window_bounds = array<i64: 2, 32, 32>}, {pipeline_mode = #tpu.pipeline_mode<synchronous>, transform_indices = @transform_5, window_bounds = array<i64: 2, 32, 32>}, {pipeline_mode = #tpu.pipeline_mode<synchronous>, transform_indices = @transform_6, window_bounds = array<i64: 2, 128, 128>}, {pipeline_mode = #tpu.pipeline_mode<synchronous>, transform_indices = @transform_7, window_bounds = array<i64: 2, 1, 128>}, {pipeline_mode = #tpu.pipeline_mode<synchronous>, transform_indices = @transform_8, window_bounds = array<i64: 2, 1, 128>}, {pipeline_mode = #tpu.pipeline_mode<synchronous>, transform_indices = @transform_9, window_bounds = array<i64: 2, 1, 128>}, {pipeline_mode = #tpu.pipeline_mode<synchronous>, transform_indices = @transform_10, window_bounds = array<i64: 2, 1, 128>}, {pipeline_mode = #tpu.pipeline_mode<synchronous>, transform_indices = @transform_11, window_bounds = array<i64: 2, 1, 128>}, {pipeline_mode = #tpu.pipeline_mode<synchronous>, transform_indices = @transform_12, window_bounds = array<i64: 2, 128, 256>}, {pipeline_mode = #tpu.pipeline_mode<synchronous>, transform_indices = @transform_13, window_bounds = array<i64: 2, 1, 256>}, {pipeline_mode = #tpu.pipeline_mode<synchronous>, transform_indices = @transform_14, window_bounds = array<i64: 2, 256, 128>}, {pipeline_mode = #tpu.pipeline_mode<synchronous>, transform_indices = @transform_15, window_bounds = array<i64: 2, 1, 128>}, {transform_indices = @transform_16, window_bounds = array<i64: 1, 8, 128>}]} {
    %c0 = arith.constant 0 : index
    %c0_0 = arith.constant 0 : index
    %c0_1 = arith.constant 0 : index
    %0 = vector.load %arg1[%c0, %c0_0, %c0_1] : memref<1x8x64xf32, #tpu.memory_space<vmem>>, vector<1x8x64xf32>
    %1 = vector.shape_cast %0 : vector<1x8x64xf32> to vector<8x64xf32>
    %2 = arith.truncf %1 : vector<8x64xf32> to vector<8x64xbf16>
    %c0_2 = arith.constant 0 : index
    %c0_3 = arith.constant 0 : index
    %3 = vector.load %arg2[%c0_2, %c0_3] : memref<64x128xbf16, #tpu.memory_space<vmem>>, vector<64x128xbf16>
    %cst = arith.constant dense<0.000000e+00> : vector<8x128xf32>
    %4 = tpu.matmul %2, %3, %cst {dimension_numbers = #tpu.dot_dimension_numbers<[1], [0], [0], [1], [0, 0, 1, 1], [], []>} : vector<8x64xbf16>, vector<64x128xbf16>, vector<8x128xf32> -> vector<8x128xf32>
    %c0_4 = arith.constant 0 : index
    %c0_5 = arith.constant 0 : index
    %5 = vector.load %arg3[%c0_4, %c0_5] : memref<1x128xf32, #tpu.memory_space<vmem>>, vector<1x128xf32>
    %6 = vector.broadcast %5 : vector<1x128xf32> to vector<8x128xf32>
    %7 = arith.addf %4, %6 : vector<8x128xf32>
    %8 = arith.truncf %7 : vector<8x128xf32> to vector<8x128xbf16>
    %c0_6 = arith.constant 0 : index
    %c0_7 = arith.constant 0 : index
    %c0_8 = arith.constant 0 : index
    %9 = vector.load %arg4[%c0_6, %c0_7, %c0_8] : memref<2x32x32xbf16, #tpu.memory_space<vmem>>, vector<1x32x32xbf16>
    %10 = vector.shape_cast %9 : vector<1x32x32xbf16> to vector<32x32xbf16>
    %c0_9 = arith.constant 0 : index
    %c0_10 = arith.constant 0 : index
    %c0_11 = arith.constant 0 : index
    %11 = vector.load %arg5[%c0_9, %c0_10, %c0_11] : memref<2x32x32xbf16, #tpu.memory_space<vmem>>, vector<1x32x32xbf16>
    %12 = vector.shape_cast %11 : vector<1x32x32xbf16> to vector<32x32xbf16>
    %c0_12 = arith.constant 0 : index
    %c0_13 = arith.constant 0 : index
    %c0_14 = arith.constant 0 : index
    %13 = vector.load %arg6[%c0_12, %c0_13, %c0_14] : memref<2x32x32xbf16, #tpu.memory_space<vmem>>, vector<1x32x32xbf16>
    %14 = vector.shape_cast %13 : vector<1x32x32xbf16> to vector<32x32xbf16>
    %c0_15 = arith.constant 0 : index
    %c0_16 = arith.constant 0 : index
    %c0_17 = arith.constant 0 : index
    %15 = vector.load %arg7[%c0_15, %c0_16, %c0_17] : memref<2x128x128xbf16, #tpu.memory_space<vmem>>, vector<1x128x128xbf16>
    %16 = vector.shape_cast %15 : vector<1x128x128xbf16> to vector<128x128xbf16>
    %cst_18 = arith.constant 0.000000e+00 : f32
    %17 = vector.broadcast %cst_18 : f32 to vector<8x128xf32>
    %18 = vector.extract_strided_slice %8 {offsets = [0, 0], sizes = [8, 32], strides = [1, 1]} : vector<8x128xbf16> to vector<8x32xbf16>
    %cst_19 = arith.constant dense<0.000000e+00> : vector<8x32xf32>
    %19 = tpu.matmul %18, %10, %cst_19 {dimension_numbers = #tpu.dot_dimension_numbers<[1], [0], [0], [1], [0, 0, 1, 1], [], []>} : vector<8x32xbf16>, vector<32x32xbf16>, vector<8x32xf32> -> vector<8x32xf32>
    %cst_20 = arith.constant dense<0.000000e+00> : vector<8x32xf32>
    %20 = tpu.matmul %18, %12, %cst_20 {dimension_numbers = #tpu.dot_dimension_numbers<[1], [0], [0], [1], [0, 0, 1, 1], [], []>} : vector<8x32xbf16>, vector<32x32xbf16>, vector<8x32xf32> -> vector<8x32xf32>
    %cst_21 = arith.constant dense<0.000000e+00> : vector<8x32xf32>
    %21 = tpu.matmul %18, %14, %cst_21 {dimension_numbers = #tpu.dot_dimension_numbers<[1], [0], [0], [1], [0, 0, 1, 1], [], []>} : vector<8x32xbf16>, vector<32x32xbf16>, vector<8x32xf32> -> vector<8x32xf32>
    %22 = arith.truncf %19 : vector<8x32xf32> to vector<8x32xbf16>
    %23 = arith.truncf %20 : vector<8x32xf32> to vector<8x32xbf16>
    %cst_22 = arith.constant dense<0.000000e+00> : vector<8x8xf32>
    %24 = tpu.matmul %22, %23, %cst_22 {dimension_numbers = #tpu.dot_dimension_numbers<[1], [1], [0], [0], [0, 0, 1, 0], [], []>} : vector<8x32xbf16>, vector<8x32xbf16>, vector<8x8xf32> -> vector<8x8xf32>
    %cst_23 = arith.constant 0.176776692 : f32
    %25 = vector.broadcast %cst_23 : f32 to vector<8x8xf32>
    %26 = arith.mulf %24, %25 : vector<8x8xf32>
    %cst_24 = arith.constant dense<0xFF800000> : vector<8xf32>
    %27 = vector.multi_reduction <maximumf>, %26, %cst_24 [1] : vector<8x8xf32> to vector<8xf32>
    %28 = vector.shape_cast %27 : vector<8xf32> to vector<8x1xf32>
    %29 = vector.broadcast %28 : vector<8x1xf32> to vector<8x8xf32>
    %30 = arith.subf %26, %29 : vector<8x8xf32>
    %31 = math.exp %30 : vector<8x8xf32>
    %cst_25 = arith.constant dense<0.000000e+00> : vector<8xf32>
    %32 = vector.multi_reduction <add>, %31, %cst_25 [1] : vector<8x8xf32> to vector<8xf32>
    %33 = vector.shape_cast %32 : vector<8xf32> to vector<8x1xf32>
    %34 = tpu.reciprocal %33 {approx = true} : vector<8x1xf32> -> vector<8x1xf32>
    %35 = vector.broadcast %34 : vector<8x1xf32> to vector<8x8xf32>
    %36 = arith.mulf %31, %35 : vector<8x8xf32>
    %37 = arith.truncf %36 : vector<8x8xf32> to vector<8x8xbf16>
    %38 = arith.truncf %21 : vector<8x32xf32> to vector<8x32xbf16>
    %cst_26 = arith.constant dense<0.000000e+00> : vector<8x32xf32>
    %39 = tpu.matmul %37, %38, %cst_26 {dimension_numbers = #tpu.dot_dimension_numbers<[1], [0], [0], [1], [0, 0, 1, 1], [], []>} : vector<8x8xbf16>, vector<8x32xbf16>, vector<8x32xf32> -> vector<8x32xf32>
    %40 = arith.truncf %39 : vector<8x32xf32> to vector<8x32xbf16>
    %41 = vector.extract_strided_slice %16 {offsets = [0, 0], sizes = [32, 128], strides = [1, 1]} : vector<128x128xbf16> to vector<32x128xbf16>
    %cst_27 = arith.constant dense<0.000000e+00> : vector<8x128xf32>
    %42 = tpu.matmul %40, %41, %cst_27 {dimension_numbers = #tpu.dot_dimension_numbers<[1], [0], [0], [1], [0, 0, 1, 1], [], []>} : vector<8x32xbf16>, vector<32x128xbf16>, vector<8x128xf32> -> vector<8x128xf32>
    %43 = arith.addf %17, %42 : vector<8x128xf32>
    %44 = vector.extract_strided_slice %8 {offsets = [0, 32], sizes = [8, 32], strides = [1, 1]} : vector<8x128xbf16> to vector<8x32xbf16>
    %cst_28 = arith.constant dense<0.000000e+00> : vector<8x32xf32>
    %45 = tpu.matmul %44, %10, %cst_28 {dimension_numbers = #tpu.dot_dimension_numbers<[1], [0], [0], [1], [0, 0, 1, 1], [], []>} : vector<8x32xbf16>, vector<32x32xbf16>, vector<8x32xf32> -> vector<8x32xf32>
    %cst_29 = arith.constant dense<0.000000e+00> : vector<8x32xf32>
    %46 = tpu.matmul %44, %12, %cst_29 {dimension_numbers = #tpu.dot_dimension_numbers<[1], [0], [0], [1], [0, 0, 1, 1], [], []>} : vector<8x32xbf16>, vector<32x32xbf16>, vector<8x32xf32> -> vector<8x32xf32>
    %cst_30 = arith.constant dense<0.000000e+00> : vector<8x32xf32>
    %47 = tpu.matmul %44, %14, %cst_30 {dimension_numbers = #tpu.dot_dimension_numbers<[1], [0], [0], [1], [0, 0, 1, 1], [], []>} : vector<8x32xbf16>, vector<32x32xbf16>, vector<8x32xf32> -> vector<8x32xf32>
    %48 = arith.truncf %45 : vector<8x32xf32> to vector<8x32xbf16>
    %49 = arith.truncf %46 : vector<8x32xf32> to vector<8x32xbf16>
    %cst_31 = arith.constant dense<0.000000e+00> : vector<8x8xf32>
    %50 = tpu.matmul %48, %49, %cst_31 {dimension_numbers = #tpu.dot_dimension_numbers<[1], [1], [0], [0], [0, 0, 1, 0], [], []>} : vector<8x32xbf16>, vector<8x32xbf16>, vector<8x8xf32> -> vector<8x8xf32>
    %cst_32 = arith.constant 0.176776692 : f32
    %51 = vector.broadcast %cst_32 : f32 to vector<8x8xf32>
    %52 = arith.mulf %50, %51 : vector<8x8xf32>
    %cst_33 = arith.constant dense<0xFF800000> : vector<8xf32>
    %53 = vector.multi_reduction <maximumf>, %52, %cst_33 [1] : vector<8x8xf32> to vector<8xf32>
    %54 = vector.shape_cast %53 : vector<8xf32> to vector<8x1xf32>
    %55 = vector.broadcast %54 : vector<8x1xf32> to vector<8x8xf32>
    %56 = arith.subf %52, %55 : vector<8x8xf32>
    %57 = math.exp %56 : vector<8x8xf32>
    %cst_34 = arith.constant dense<0.000000e+00> : vector<8xf32>
    %58 = vector.multi_reduction <add>, %57, %cst_34 [1] : vector<8x8xf32> to vector<8xf32>
    %59 = vector.shape_cast %58 : vector<8xf32> to vector<8x1xf32>
    %60 = tpu.reciprocal %59 {approx = true} : vector<8x1xf32> -> vector<8x1xf32>
    %61 = vector.broadcast %60 : vector<8x1xf32> to vector<8x8xf32>
    %62 = arith.mulf %57, %61 : vector<8x8xf32>
    %63 = arith.truncf %62 : vector<8x8xf32> to vector<8x8xbf16>
    %64 = arith.truncf %47 : vector<8x32xf32> to vector<8x32xbf16>
    %cst_35 = arith.constant dense<0.000000e+00> : vector<8x32xf32>
    %65 = tpu.matmul %63, %64, %cst_35 {dimension_numbers = #tpu.dot_dimension_numbers<[1], [0], [0], [1], [0, 0, 1, 1], [], []>} : vector<8x8xbf16>, vector<8x32xbf16>, vector<8x32xf32> -> vector<8x32xf32>
    %66 = arith.truncf %65 : vector<8x32xf32> to vector<8x32xbf16>
    %67 = vector.extract_strided_slice %16 {offsets = [32, 0], sizes = [32, 128], strides = [1, 1]} : vector<128x128xbf16> to vector<32x128xbf16>
    %cst_36 = arith.constant dense<0.000000e+00> : vector<8x128xf32>
    %68 = tpu.matmul %66, %67, %cst_36 {dimension_numbers = #tpu.dot_dimension_numbers<[1], [0], [0], [1], [0, 0, 1, 1], [], []>} : vector<8x32xbf16>, vector<32x128xbf16>, vector<8x128xf32> -> vector<8x128xf32>
    %69 = arith.addf %43, %68 : vector<8x128xf32>
    %70 = vector.extract_strided_slice %8 {offsets = [0, 64], sizes = [8, 32], strides = [1, 1]} : vector<8x128xbf16> to vector<8x32xbf16>
    %cst_37 = arith.constant dense<0.000000e+00> : vector<8x32xf32>
    %71 = tpu.matmul %70, %10, %cst_37 {dimension_numbers = #tpu.dot_dimension_numbers<[1], [0], [0], [1], [0, 0, 1, 1], [], []>} : vector<8x32xbf16>, vector<32x32xbf16>, vector<8x32xf32> -> vector<8x32xf32>
    %cst_38 = arith.constant dense<0.000000e+00> : vector<8x32xf32>
    %72 = tpu.matmul %70, %12, %cst_38 {dimension_numbers = #tpu.dot_dimension_numbers<[1], [0], [0], [1], [0, 0, 1, 1], [], []>} : vector<8x32xbf16>, vector<32x32xbf16>, vector<8x32xf32> -> vector<8x32xf32>
    %cst_39 = arith.constant dense<0.000000e+00> : vector<8x32xf32>
    %73 = tpu.matmul %70, %14, %cst_39 {dimension_numbers = #tpu.dot_dimension_numbers<[1], [0], [0], [1], [0, 0, 1, 1], [], []>} : vector<8x32xbf16>, vector<32x32xbf16>, vector<8x32xf32> -> vector<8x32xf32>
    %74 = arith.truncf %71 : vector<8x32xf32> to vector<8x32xbf16>
    %75 = arith.truncf %72 : vector<8x32xf32> to vector<8x32xbf16>
    %cst_40 = arith.constant dense<0.000000e+00> : vector<8x8xf32>
    %76 = tpu.matmul %74, %75, %cst_40 {dimension_numbers = #tpu.dot_dimension_numbers<[1], [1], [0], [0], [0, 0, 1, 0], [], []>} : vector<8x32xbf16>, vector<8x32xbf16>, vector<8x8xf32> -> vector<8x8xf32>
    %cst_41 = arith.constant 0.176776692 : f32
    %77 = vector.broadcast %cst_41 : f32 to vector<8x8xf32>
    %78 = arith.mulf %76, %77 : vector<8x8xf32>
    %cst_42 = arith.constant dense<0xFF800000> : vector<8xf32>
    %79 = vector.multi_reduction <maximumf>, %78, %cst_42 [1] : vector<8x8xf32> to vector<8xf32>
    %80 = vector.shape_cast %79 : vector<8xf32> to vector<8x1xf32>
    %81 = vector.broadcast %80 : vector<8x1xf32> to vector<8x8xf32>
    %82 = arith.subf %78, %81 : vector<8x8xf32>
    %83 = math.exp %82 : vector<8x8xf32>
    %cst_43 = arith.constant dense<0.000000e+00> : vector<8xf32>
    %84 = vector.multi_reduction <add>, %83, %cst_43 [1] : vector<8x8xf32> to vector<8xf32>
    %85 = vector.shape_cast %84 : vector<8xf32> to vector<8x1xf32>
    %86 = tpu.reciprocal %85 {approx = true} : vector<8x1xf32> -> vector<8x1xf32>
    %87 = vector.broadcast %86 : vector<8x1xf32> to vector<8x8xf32>
    %88 = arith.mulf %83, %87 : vector<8x8xf32>
    %89 = arith.truncf %88 : vector<8x8xf32> to vector<8x8xbf16>
    %90 = arith.truncf %73 : vector<8x32xf32> to vector<8x32xbf16>
    %cst_44 = arith.constant dense<0.000000e+00> : vector<8x32xf32>
    %91 = tpu.matmul %89, %90, %cst_44 {dimension_numbers = #tpu.dot_dimension_numbers<[1], [0], [0], [1], [0, 0, 1, 1], [], []>} : vector<8x8xbf16>, vector<8x32xbf16>, vector<8x32xf32> -> vector<8x32xf32>
    %92 = arith.truncf %91 : vector<8x32xf32> to vector<8x32xbf16>
    %93 = vector.extract_strided_slice %16 {offsets = [64, 0], sizes = [32, 128], strides = [1, 1]} : vector<128x128xbf16> to vector<32x128xbf16>
    %cst_45 = arith.constant dense<0.000000e+00> : vector<8x128xf32>
    %94 = tpu.matmul %92, %93, %cst_45 {dimension_numbers = #tpu.dot_dimension_numbers<[1], [0], [0], [1], [0, 0, 1, 1], [], []>} : vector<8x32xbf16>, vector<32x128xbf16>, vector<8x128xf32> -> vector<8x128xf32>
    %95 = arith.addf %69, %94 : vector<8x128xf32>
    %96 = vector.extract_strided_slice %8 {offsets = [0, 96], sizes = [8, 32], strides = [1, 1]} : vector<8x128xbf16> to vector<8x32xbf16>
    %cst_46 = arith.constant dense<0.000000e+00> : vector<8x32xf32>
    %97 = tpu.matmul %96, %10, %cst_46 {dimension_numbers = #tpu.dot_dimension_numbers<[1], [0], [0], [1], [0, 0, 1, 1], [], []>} : vector<8x32xbf16>, vector<32x32xbf16>, vector<8x32xf32> -> vector<8x32xf32>
    %cst_47 = arith.constant dense<0.000000e+00> : vector<8x32xf32>
    %98 = tpu.matmul %96, %12, %cst_47 {dimension_numbers = #tpu.dot_dimension_numbers<[1], [0], [0], [1], [0, 0, 1, 1], [], []>} : vector<8x32xbf16>, vector<32x32xbf16>, vector<8x32xf32> -> vector<8x32xf32>
    %cst_48 = arith.constant dense<0.000000e+00> : vector<8x32xf32>
    %99 = tpu.matmul %96, %14, %cst_48 {dimension_numbers = #tpu.dot_dimension_numbers<[1], [0], [0], [1], [0, 0, 1, 1], [], []>} : vector<8x32xbf16>, vector<32x32xbf16>, vector<8x32xf32> -> vector<8x32xf32>
    %100 = arith.truncf %97 : vector<8x32xf32> to vector<8x32xbf16>
    %101 = arith.truncf %98 : vector<8x32xf32> to vector<8x32xbf16>
    %cst_49 = arith.constant dense<0.000000e+00> : vector<8x8xf32>
    %102 = tpu.matmul %100, %101, %cst_49 {dimension_numbers = #tpu.dot_dimension_numbers<[1], [1], [0], [0], [0, 0, 1, 0], [], []>} : vector<8x32xbf16>, vector<8x32xbf16>, vector<8x8xf32> -> vector<8x8xf32>
    %cst_50 = arith.constant 0.176776692 : f32
    %103 = vector.broadcast %cst_50 : f32 to vector<8x8xf32>
    %104 = arith.mulf %102, %103 : vector<8x8xf32>
    %cst_51 = arith.constant dense<0xFF800000> : vector<8xf32>
    %105 = vector.multi_reduction <maximumf>, %104, %cst_51 [1] : vector<8x8xf32> to vector<8xf32>
    %106 = vector.shape_cast %105 : vector<8xf32> to vector<8x1xf32>
    %107 = vector.broadcast %106 : vector<8x1xf32> to vector<8x8xf32>
    %108 = arith.subf %104, %107 : vector<8x8xf32>
    %109 = math.exp %108 : vector<8x8xf32>
    %cst_52 = arith.constant dense<0.000000e+00> : vector<8xf32>
    %110 = vector.multi_reduction <add>, %109, %cst_52 [1] : vector<8x8xf32> to vector<8xf32>
    %111 = vector.shape_cast %110 : vector<8xf32> to vector<8x1xf32>
    %112 = tpu.reciprocal %111 {approx = true} : vector<8x1xf32> -> vector<8x1xf32>
    %113 = vector.broadcast %112 : vector<8x1xf32> to vector<8x8xf32>
    %114 = arith.mulf %109, %113 : vector<8x8xf32>
    %115 = arith.truncf %114 : vector<8x8xf32> to vector<8x8xbf16>
    %116 = arith.truncf %99 : vector<8x32xf32> to vector<8x32xbf16>
    %cst_53 = arith.constant dense<0.000000e+00> : vector<8x32xf32>
    %117 = tpu.matmul %115, %116, %cst_53 {dimension_numbers = #tpu.dot_dimension_numbers<[1], [0], [0], [1], [0, 0, 1, 1], [], []>} : vector<8x8xbf16>, vector<8x32xbf16>, vector<8x32xf32> -> vector<8x32xf32>
    %118 = arith.truncf %117 : vector<8x32xf32> to vector<8x32xbf16>
    %119 = vector.extract_strided_slice %16 {offsets = [96, 0], sizes = [32, 128], strides = [1, 1]} : vector<128x128xbf16> to vector<32x128xbf16>
    %cst_54 = arith.constant dense<0.000000e+00> : vector<8x128xf32>
    %120 = tpu.matmul %118, %119, %cst_54 {dimension_numbers = #tpu.dot_dimension_numbers<[1], [0], [0], [1], [0, 0, 1, 1], [], []>} : vector<8x32xbf16>, vector<32x128xbf16>, vector<8x128xf32> -> vector<8x128xf32>
    %121 = arith.addf %95, %120 : vector<8x128xf32>
    %c0_55 = arith.constant 0 : index
    %c0_56 = arith.constant 0 : index
    %c0_57 = arith.constant 0 : index
    %122 = vector.load %arg8[%c0_55, %c0_56, %c0_57] : memref<2x1x128xf32, #tpu.memory_space<vmem>>, vector<1x1x128xf32>
    %123 = vector.shape_cast %122 : vector<1x1x128xf32> to vector<1x128xf32>
    %124 = vector.broadcast %123 : vector<1x128xf32> to vector<8x128xf32>
    %125 = arith.addf %121, %124 : vector<8x128xf32>
    %126 = arith.addf %125, %7 : vector<8x128xf32>
    %c0_58 = arith.constant 0 : index
    %c0_59 = arith.constant 0 : index
    %c0_60 = arith.constant 0 : index
    %127 = vector.load %arg9[%c0_58, %c0_59, %c0_60] : memref<2x1x128xf32, #tpu.memory_space<vmem>>, vector<1x1x128xf32>
    %128 = vector.shape_cast %127 : vector<1x1x128xf32> to vector<1x128xf32>
    %c0_61 = arith.constant 0 : index
    %c0_62 = arith.constant 0 : index
    %c0_63 = arith.constant 0 : index
    %129 = vector.load %arg10[%c0_61, %c0_62, %c0_63] : memref<2x1x128xf32, #tpu.memory_space<vmem>>, vector<1x1x128xf32>
    %130 = vector.shape_cast %129 : vector<1x1x128xf32> to vector<1x128xf32>
    %cst_64 = arith.constant dense<0.000000e+00> : vector<8xf32>
    %131 = vector.multi_reduction <add>, %126, %cst_64 [1] : vector<8x128xf32> to vector<8xf32>
    %132 = vector.shape_cast %131 : vector<8xf32> to vector<8x1xf32>
    %cst_65 = arith.constant 1.280000e+02 : f32
    %133 = vector.broadcast %cst_65 : f32 to vector<8x1xf32>
    %134 = arith.divf %132, %133 : vector<8x1xf32>
    %135 = vector.broadcast %134 : vector<8x1xf32> to vector<8x128xf32>
    %136 = arith.subf %126, %135 : vector<8x128xf32>
    %137 = arith.mulf %136, %136 : vector<8x128xf32>
    %cst_66 = arith.constant dense<0.000000e+00> : vector<8xf32>
    %138 = vector.multi_reduction <add>, %137, %cst_66 [1] : vector<8x128xf32> to vector<8xf32>
    %139 = vector.shape_cast %138 : vector<8xf32> to vector<8x1xf32>
    %cst_67 = arith.constant 1.280000e+02 : f32
    %140 = vector.broadcast %cst_67 : f32 to vector<8x1xf32>
    %141 = arith.divf %139, %140 : vector<8x1xf32>
    %142 = vector.broadcast %134 : vector<8x1xf32> to vector<8x128xf32>
    %143 = arith.subf %126, %142 : vector<8x128xf32>
    %cst_68 = arith.constant 9.99999974E-6 : f32
    %144 = vector.broadcast %cst_68 : f32 to vector<8x1xf32>
    %145 = arith.addf %141, %144 : vector<8x1xf32>
    %146 = math.rsqrt %145 : vector<8x1xf32>
    %147 = vector.broadcast %146 : vector<8x1xf32> to vector<8x128xf32>
    %148 = arith.mulf %143, %147 : vector<8x128xf32>
    %149 = vector.broadcast %128 : vector<1x128xf32> to vector<8x128xf32>
    %150 = arith.mulf %148, %149 : vector<8x128xf32>
    %151 = vector.broadcast %130 : vector<1x128xf32> to vector<8x128xf32>
    %152 = arith.addf %150, %151 : vector<8x128xf32>
    %153 = arith.truncf %152 : vector<8x128xf32> to vector<8x128xbf16>
    %c0_69 = arith.constant 0 : index
    %c0_70 = arith.constant 0 : index
    %c0_71 = arith.constant 0 : index
    %154 = vector.load %arg13[%c0_69, %c0_70, %c0_71] : memref<2x128x256xbf16, #tpu.memory_space<vmem>>, vector<1x128x256xbf16>
    %155 = vector.shape_cast %154 : vector<1x128x256xbf16> to vector<128x256xbf16>
    %cst_72 = arith.constant dense<0.000000e+00> : vector<8x256xf32>
    %156 = tpu.matmul %153, %155, %cst_72 {dimension_numbers = #tpu.dot_dimension_numbers<[1], [0], [0], [1], [0, 0, 1, 1], [], []>} : vector<8x128xbf16>, vector<128x256xbf16>, vector<8x256xf32> -> vector<8x256xf32>
    %c0_73 = arith.constant 0 : index
    %c0_74 = arith.constant 0 : index
    %c0_75 = arith.constant 0 : index
    %157 = vector.load %arg14[%c0_73, %c0_74, %c0_75] : memref<2x1x256xf32, #tpu.memory_space<vmem>>, vector<1x1x256xf32>
    %158 = vector.shape_cast %157 : vector<1x1x256xf32> to vector<1x256xf32>
    %159 = vector.broadcast %158 : vector<1x256xf32> to vector<8x256xf32>
    %160 = arith.addf %156, %159 : vector<8x256xf32>
    %cst_76 = arith.constant 0.000000e+00 : f32
    %161 = vector.broadcast %cst_76 : f32 to vector<8x256xf32>
    %162 = arith.maximumf %160, %161 : vector<8x256xf32>
    %163 = arith.truncf %162 : vector<8x256xf32> to vector<8x256xbf16>
    %c0_77 = arith.constant 0 : index
    %c0_78 = arith.constant 0 : index
    %c0_79 = arith.constant 0 : index
    %164 = vector.load %arg15[%c0_77, %c0_78, %c0_79] : memref<2x256x128xbf16, #tpu.memory_space<vmem>>, vector<1x256x128xbf16>
    %165 = vector.shape_cast %164 : vector<1x256x128xbf16> to vector<256x128xbf16>
    %cst_80 = arith.constant dense<0.000000e+00> : vector<8x128xf32>
    %166 = tpu.matmul %163, %165, %cst_80 {dimension_numbers = #tpu.dot_dimension_numbers<[1], [0], [0], [1], [0, 0, 1, 1], [], []>} : vector<8x256xbf16>, vector<256x128xbf16>, vector<8x128xf32> -> vector<8x128xf32>
    %c0_81 = arith.constant 0 : index
    %c0_82 = arith.constant 0 : index
    %c0_83 = arith.constant 0 : index
    %167 = vector.load %arg16[%c0_81, %c0_82, %c0_83] : memref<2x1x128xf32, #tpu.memory_space<vmem>>, vector<1x1x128xf32>
    %168 = vector.shape_cast %167 : vector<1x1x128xf32> to vector<1x128xf32>
    %169 = vector.broadcast %168 : vector<1x128xf32> to vector<8x128xf32>
    %170 = arith.addf %166, %169 : vector<8x128xf32>
    %171 = arith.addf %170, %152 : vector<8x128xf32>
    %c0_84 = arith.constant 0 : index
    %c0_85 = arith.constant 0 : index
    %c0_86 = arith.constant 0 : index
    %172 = vector.load %arg11[%c0_84, %c0_85, %c0_86] : memref<2x1x128xf32, #tpu.memory_space<vmem>>, vector<1x1x128xf32>
    %173 = vector.shape_cast %172 : vector<1x1x128xf32> to vector<1x128xf32>
    %c0_87 = arith.constant 0 : index
    %c0_88 = arith.constant 0 : index
    %c0_89 = arith.constant 0 : index
    %174 = vector.load %arg12[%c0_87, %c0_88, %c0_89] : memref<2x1x128xf32, #tpu.memory_space<vmem>>, vector<1x1x128xf32>
    %175 = vector.shape_cast %174 : vector<1x1x128xf32> to vector<1x128xf32>
    %cst_90 = arith.constant dense<0.000000e+00> : vector<8xf32>
    %176 = vector.multi_reduction <add>, %171, %cst_90 [1] : vector<8x128xf32> to vector<8xf32>
    %177 = vector.shape_cast %176 : vector<8xf32> to vector<8x1xf32>
    %cst_91 = arith.constant 1.280000e+02 : f32
    %178 = vector.broadcast %cst_91 : f32 to vector<8x1xf32>
    %179 = arith.divf %177, %178 : vector<8x1xf32>
    %180 = vector.broadcast %179 : vector<8x1xf32> to vector<8x128xf32>
    %181 = arith.subf %171, %180 : vector<8x128xf32>
    %182 = arith.mulf %181, %181 : vector<8x128xf32>
    %cst_92 = arith.constant dense<0.000000e+00> : vector<8xf32>
    %183 = vector.multi_reduction <add>, %182, %cst_92 [1] : vector<8x128xf32> to vector<8xf32>
    %184 = vector.shape_cast %183 : vector<8xf32> to vector<8x1xf32>
    %cst_93 = arith.constant 1.280000e+02 : f32
    %185 = vector.broadcast %cst_93 : f32 to vector<8x1xf32>
    %186 = arith.divf %184, %185 : vector<8x1xf32>
    %187 = vector.broadcast %179 : vector<8x1xf32> to vector<8x128xf32>
    %188 = arith.subf %171, %187 : vector<8x128xf32>
    %cst_94 = arith.constant 9.99999974E-6 : f32
    %189 = vector.broadcast %cst_94 : f32 to vector<8x1xf32>
    %190 = arith.addf %186, %189 : vector<8x1xf32>
    %191 = math.rsqrt %190 : vector<8x1xf32>
    %192 = vector.broadcast %191 : vector<8x1xf32> to vector<8x128xf32>
    %193 = arith.mulf %188, %192 : vector<8x128xf32>
    %194 = vector.broadcast %173 : vector<1x128xf32> to vector<8x128xf32>
    %195 = arith.mulf %193, %194 : vector<8x128xf32>
    %196 = vector.broadcast %175 : vector<1x128xf32> to vector<8x128xf32>
    %197 = arith.addf %195, %196 : vector<8x128xf32>
    %198 = arith.truncf %197 : vector<8x128xf32> to vector<8x128xbf16>
    %c1 = arith.constant 1 : index
    %c0_95 = arith.constant 0 : index
    %c0_96 = arith.constant 0 : index
    %199 = vector.load %arg4[%c1, %c0_95, %c0_96] : memref<2x32x32xbf16, #tpu.memory_space<vmem>>, vector<1x32x32xbf16>
    %200 = vector.shape_cast %199 : vector<1x32x32xbf16> to vector<32x32xbf16>
    %c1_97 = arith.constant 1 : index
    %c0_98 = arith.constant 0 : index
    %c0_99 = arith.constant 0 : index
    %201 = vector.load %arg5[%c1_97, %c0_98, %c0_99] : memref<2x32x32xbf16, #tpu.memory_space<vmem>>, vector<1x32x32xbf16>
    %202 = vector.shape_cast %201 : vector<1x32x32xbf16> to vector<32x32xbf16>
    %c1_100 = arith.constant 1 : index
    %c0_101 = arith.constant 0 : index
    %c0_102 = arith.constant 0 : index
    %203 = vector.load %arg6[%c1_100, %c0_101, %c0_102] : memref<2x32x32xbf16, #tpu.memory_space<vmem>>, vector<1x32x32xbf16>
    %204 = vector.shape_cast %203 : vector<1x32x32xbf16> to vector<32x32xbf16>
    %c1_103 = arith.constant 1 : index
    %c0_104 = arith.constant 0 : index
    %c0_105 = arith.constant 0 : index
    %205 = vector.load %arg7[%c1_103, %c0_104, %c0_105] : memref<2x128x128xbf16, #tpu.memory_space<vmem>>, vector<1x128x128xbf16>
    %206 = vector.shape_cast %205 : vector<1x128x128xbf16> to vector<128x128xbf16>
    %cst_106 = arith.constant 0.000000e+00 : f32
    %207 = vector.broadcast %cst_106 : f32 to vector<8x128xf32>
    %208 = vector.extract_strided_slice %198 {offsets = [0, 0], sizes = [8, 32], strides = [1, 1]} : vector<8x128xbf16> to vector<8x32xbf16>
    %cst_107 = arith.constant dense<0.000000e+00> : vector<8x32xf32>
    %209 = tpu.matmul %208, %200, %cst_107 {dimension_numbers = #tpu.dot_dimension_numbers<[1], [0], [0], [1], [0, 0, 1, 1], [], []>} : vector<8x32xbf16>, vector<32x32xbf16>, vector<8x32xf32> -> vector<8x32xf32>
    %cst_108 = arith.constant dense<0.000000e+00> : vector<8x32xf32>
    %210 = tpu.matmul %208, %202, %cst_108 {dimension_numbers = #tpu.dot_dimension_numbers<[1], [0], [0], [1], [0, 0, 1, 1], [], []>} : vector<8x32xbf16>, vector<32x32xbf16>, vector<8x32xf32> -> vector<8x32xf32>
    %cst_109 = arith.constant dense<0.000000e+00> : vector<8x32xf32>
    %211 = tpu.matmul %208, %204, %cst_109 {dimension_numbers = #tpu.dot_dimension_numbers<[1], [0], [0], [1], [0, 0, 1, 1], [], []>} : vector<8x32xbf16>, vector<32x32xbf16>, vector<8x32xf32> -> vector<8x32xf32>
    %212 = arith.truncf %209 : vector<8x32xf32> to vector<8x32xbf16>
    %213 = arith.truncf %210 : vector<8x32xf32> to vector<8x32xbf16>
    %cst_110 = arith.constant dense<0.000000e+00> : vector<8x8xf32>
    %214 = tpu.matmul %212, %213, %cst_110 {dimension_numbers = #tpu.dot_dimension_numbers<[1], [1], [0], [0], [0, 0, 1, 0], [], []>} : vector<8x32xbf16>, vector<8x32xbf16>, vector<8x8xf32> -> vector<8x8xf32>
    %cst_111 = arith.constant 0.176776692 : f32
    %215 = vector.broadcast %cst_111 : f32 to vector<8x8xf32>
    %216 = arith.mulf %214, %215 : vector<8x8xf32>
    %cst_112 = arith.constant dense<0xFF800000> : vector<8xf32>
    %217 = vector.multi_reduction <maximumf>, %216, %cst_112 [1] : vector<8x8xf32> to vector<8xf32>
    %218 = vector.shape_cast %217 : vector<8xf32> to vector<8x1xf32>
    %219 = vector.broadcast %218 : vector<8x1xf32> to vector<8x8xf32>
    %220 = arith.subf %216, %219 : vector<8x8xf32>
    %221 = math.exp %220 : vector<8x8xf32>
    %cst_113 = arith.constant dense<0.000000e+00> : vector<8xf32>
    %222 = vector.multi_reduction <add>, %221, %cst_113 [1] : vector<8x8xf32> to vector<8xf32>
    %223 = vector.shape_cast %222 : vector<8xf32> to vector<8x1xf32>
    %224 = tpu.reciprocal %223 {approx = true} : vector<8x1xf32> -> vector<8x1xf32>
    %225 = vector.broadcast %224 : vector<8x1xf32> to vector<8x8xf32>
    %226 = arith.mulf %221, %225 : vector<8x8xf32>
    %227 = arith.truncf %226 : vector<8x8xf32> to vector<8x8xbf16>
    %228 = arith.truncf %211 : vector<8x32xf32> to vector<8x32xbf16>
    %cst_114 = arith.constant dense<0.000000e+00> : vector<8x32xf32>
    %229 = tpu.matmul %227, %228, %cst_114 {dimension_numbers = #tpu.dot_dimension_numbers<[1], [0], [0], [1], [0, 0, 1, 1], [], []>} : vector<8x8xbf16>, vector<8x32xbf16>, vector<8x32xf32> -> vector<8x32xf32>
    %230 = arith.truncf %229 : vector<8x32xf32> to vector<8x32xbf16>
    %231 = vector.extract_strided_slice %206 {offsets = [0, 0], sizes = [32, 128], strides = [1, 1]} : vector<128x128xbf16> to vector<32x128xbf16>
    %cst_115 = arith.constant dense<0.000000e+00> : vector<8x128xf32>
    %232 = tpu.matmul %230, %231, %cst_115 {dimension_numbers = #tpu.dot_dimension_numbers<[1], [0], [0], [1], [0, 0, 1, 1], [], []>} : vector<8x32xbf16>, vector<32x128xbf16>, vector<8x128xf32> -> vector<8x128xf32>
    %233 = arith.addf %207, %232 : vector<8x128xf32>
    %234 = vector.extract_strided_slice %198 {offsets = [0, 32], sizes = [8, 32], strides = [1, 1]} : vector<8x128xbf16> to vector<8x32xbf16>
    %cst_116 = arith.constant dense<0.000000e+00> : vector<8x32xf32>
    %235 = tpu.matmul %234, %200, %cst_116 {dimension_numbers = #tpu.dot_dimension_numbers<[1], [0], [0], [1], [0, 0, 1, 1], [], []>} : vector<8x32xbf16>, vector<32x32xbf16>, vector<8x32xf32> -> vector<8x32xf32>
    %cst_117 = arith.constant dense<0.000000e+00> : vector<8x32xf32>
    %236 = tpu.matmul %234, %202, %cst_117 {dimension_numbers = #tpu.dot_dimension_numbers<[1], [0], [0], [1], [0, 0, 1, 1], [], []>} : vector<8x32xbf16>, vector<32x32xbf16>, vector<8x32xf32> -> vector<8x32xf32>
    %cst_118 = arith.constant dense<0.000000e+00> : vector<8x32xf32>
    %237 = tpu.matmul %234, %204, %cst_118 {dimension_numbers = #tpu.dot_dimension_numbers<[1], [0], [0], [1], [0, 0, 1, 1], [], []>} : vector<8x32xbf16>, vector<32x32xbf16>, vector<8x32xf32> -> vector<8x32xf32>
    %238 = arith.truncf %235 : vector<8x32xf32> to vector<8x32xbf16>
    %239 = arith.truncf %236 : vector<8x32xf32> to vector<8x32xbf16>
    %cst_119 = arith.constant dense<0.000000e+00> : vector<8x8xf32>
    %240 = tpu.matmul %238, %239, %cst_119 {dimension_numbers = #tpu.dot_dimension_numbers<[1], [1], [0], [0], [0, 0, 1, 0], [], []>} : vector<8x32xbf16>, vector<8x32xbf16>, vector<8x8xf32> -> vector<8x8xf32>
    %cst_120 = arith.constant 0.176776692 : f32
    %241 = vector.broadcast %cst_120 : f32 to vector<8x8xf32>
    %242 = arith.mulf %240, %241 : vector<8x8xf32>
    %cst_121 = arith.constant dense<0xFF800000> : vector<8xf32>
    %243 = vector.multi_reduction <maximumf>, %242, %cst_121 [1] : vector<8x8xf32> to vector<8xf32>
    %244 = vector.shape_cast %243 : vector<8xf32> to vector<8x1xf32>
    %245 = vector.broadcast %244 : vector<8x1xf32> to vector<8x8xf32>
    %246 = arith.subf %242, %245 : vector<8x8xf32>
    %247 = math.exp %246 : vector<8x8xf32>
    %cst_122 = arith.constant dense<0.000000e+00> : vector<8xf32>
    %248 = vector.multi_reduction <add>, %247, %cst_122 [1] : vector<8x8xf32> to vector<8xf32>
    %249 = vector.shape_cast %248 : vector<8xf32> to vector<8x1xf32>
    %250 = tpu.reciprocal %249 {approx = true} : vector<8x1xf32> -> vector<8x1xf32>
    %251 = vector.broadcast %250 : vector<8x1xf32> to vector<8x8xf32>
    %252 = arith.mulf %247, %251 : vector<8x8xf32>
    %253 = arith.truncf %252 : vector<8x8xf32> to vector<8x8xbf16>
    %254 = arith.truncf %237 : vector<8x32xf32> to vector<8x32xbf16>
    %cst_123 = arith.constant dense<0.000000e+00> : vector<8x32xf32>
    %255 = tpu.matmul %253, %254, %cst_123 {dimension_numbers = #tpu.dot_dimension_numbers<[1], [0], [0], [1], [0, 0, 1, 1], [], []>} : vector<8x8xbf16>, vector<8x32xbf16>, vector<8x32xf32> -> vector<8x32xf32>
    %256 = arith.truncf %255 : vector<8x32xf32> to vector<8x32xbf16>
    %257 = vector.extract_strided_slice %206 {offsets = [32, 0], sizes = [32, 128], strides = [1, 1]} : vector<128x128xbf16> to vector<32x128xbf16>
    %cst_124 = arith.constant dense<0.000000e+00> : vector<8x128xf32>
    %258 = tpu.matmul %256, %257, %cst_124 {dimension_numbers = #tpu.dot_dimension_numbers<[1], [0], [0], [1], [0, 0, 1, 1], [], []>} : vector<8x32xbf16>, vector<32x128xbf16>, vector<8x128xf32> -> vector<8x128xf32>
    %259 = arith.addf %233, %258 : vector<8x128xf32>
    %260 = vector.extract_strided_slice %198 {offsets = [0, 64], sizes = [8, 32], strides = [1, 1]} : vector<8x128xbf16> to vector<8x32xbf16>
    %cst_125 = arith.constant dense<0.000000e+00> : vector<8x32xf32>
    %261 = tpu.matmul %260, %200, %cst_125 {dimension_numbers = #tpu.dot_dimension_numbers<[1], [0], [0], [1], [0, 0, 1, 1], [], []>} : vector<8x32xbf16>, vector<32x32xbf16>, vector<8x32xf32> -> vector<8x32xf32>
    %cst_126 = arith.constant dense<0.000000e+00> : vector<8x32xf32>
    %262 = tpu.matmul %260, %202, %cst_126 {dimension_numbers = #tpu.dot_dimension_numbers<[1], [0], [0], [1], [0, 0, 1, 1], [], []>} : vector<8x32xbf16>, vector<32x32xbf16>, vector<8x32xf32> -> vector<8x32xf32>
    %cst_127 = arith.constant dense<0.000000e+00> : vector<8x32xf32>
    %263 = tpu.matmul %260, %204, %cst_127 {dimension_numbers = #tpu.dot_dimension_numbers<[1], [0], [0], [1], [0, 0, 1, 1], [], []>} : vector<8x32xbf16>, vector<32x32xbf16>, vector<8x32xf32> -> vector<8x32xf32>
    %264 = arith.truncf %261 : vector<8x32xf32> to vector<8x32xbf16>
    %265 = arith.truncf %262 : vector<8x32xf32> to vector<8x32xbf16>
    %cst_128 = arith.constant dense<0.000000e+00> : vector<8x8xf32>
    %266 = tpu.matmul %264, %265, %cst_128 {dimension_numbers = #tpu.dot_dimension_numbers<[1], [1], [0], [0], [0, 0, 1, 0], [], []>} : vector<8x32xbf16>, vector<8x32xbf16>, vector<8x8xf32> -> vector<8x8xf32>
    %cst_129 = arith.constant 0.176776692 : f32
    %267 = vector.broadcast %cst_129 : f32 to vector<8x8xf32>
    %268 = arith.mulf %266, %267 : vector<8x8xf32>
    %cst_130 = arith.constant dense<0xFF800000> : vector<8xf32>
    %269 = vector.multi_reduction <maximumf>, %268, %cst_130 [1] : vector<8x8xf32> to vector<8xf32>
    %270 = vector.shape_cast %269 : vector<8xf32> to vector<8x1xf32>
    %271 = vector.broadcast %270 : vector<8x1xf32> to vector<8x8xf32>
    %272 = arith.subf %268, %271 : vector<8x8xf32>
    %273 = math.exp %272 : vector<8x8xf32>
    %cst_131 = arith.constant dense<0.000000e+00> : vector<8xf32>
    %274 = vector.multi_reduction <add>, %273, %cst_131 [1] : vector<8x8xf32> to vector<8xf32>
    %275 = vector.shape_cast %274 : vector<8xf32> to vector<8x1xf32>
    %276 = tpu.reciprocal %275 {approx = true} : vector<8x1xf32> -> vector<8x1xf32>
    %277 = vector.broadcast %276 : vector<8x1xf32> to vector<8x8xf32>
    %278 = arith.mulf %273, %277 : vector<8x8xf32>
    %279 = arith.truncf %278 : vector<8x8xf32> to vector<8x8xbf16>
    %280 = arith.truncf %263 : vector<8x32xf32> to vector<8x32xbf16>
    %cst_132 = arith.constant dense<0.000000e+00> : vector<8x32xf32>
    %281 = tpu.matmul %279, %280, %cst_132 {dimension_numbers = #tpu.dot_dimension_numbers<[1], [0], [0], [1], [0, 0, 1, 1], [], []>} : vector<8x8xbf16>, vector<8x32xbf16>, vector<8x32xf32> -> vector<8x32xf32>
    %282 = arith.truncf %281 : vector<8x32xf32> to vector<8x32xbf16>
    %283 = vector.extract_strided_slice %206 {offsets = [64, 0], sizes = [32, 128], strides = [1, 1]} : vector<128x128xbf16> to vector<32x128xbf16>
    %cst_133 = arith.constant dense<0.000000e+00> : vector<8x128xf32>
    %284 = tpu.matmul %282, %283, %cst_133 {dimension_numbers = #tpu.dot_dimension_numbers<[1], [0], [0], [1], [0, 0, 1, 1], [], []>} : vector<8x32xbf16>, vector<32x128xbf16>, vector<8x128xf32> -> vector<8x128xf32>
    %285 = arith.addf %259, %284 : vector<8x128xf32>
    %286 = vector.extract_strided_slice %198 {offsets = [0, 96], sizes = [8, 32], strides = [1, 1]} : vector<8x128xbf16> to vector<8x32xbf16>
    %cst_134 = arith.constant dense<0.000000e+00> : vector<8x32xf32>
    %287 = tpu.matmul %286, %200, %cst_134 {dimension_numbers = #tpu.dot_dimension_numbers<[1], [0], [0], [1], [0, 0, 1, 1], [], []>} : vector<8x32xbf16>, vector<32x32xbf16>, vector<8x32xf32> -> vector<8x32xf32>
    %cst_135 = arith.constant dense<0.000000e+00> : vector<8x32xf32>
    %288 = tpu.matmul %286, %202, %cst_135 {dimension_numbers = #tpu.dot_dimension_numbers<[1], [0], [0], [1], [0, 0, 1, 1], [], []>} : vector<8x32xbf16>, vector<32x32xbf16>, vector<8x32xf32> -> vector<8x32xf32>
    %cst_136 = arith.constant dense<0.000000e+00> : vector<8x32xf32>
    %289 = tpu.matmul %286, %204, %cst_136 {dimension_numbers = #tpu.dot_dimension_numbers<[1], [0], [0], [1], [0, 0, 1, 1], [], []>} : vector<8x32xbf16>, vector<32x32xbf16>, vector<8x32xf32> -> vector<8x32xf32>
    %290 = arith.truncf %287 : vector<8x32xf32> to vector<8x32xbf16>
    %291 = arith.truncf %288 : vector<8x32xf32> to vector<8x32xbf16>
    %cst_137 = arith.constant dense<0.000000e+00> : vector<8x8xf32>
    %292 = tpu.matmul %290, %291, %cst_137 {dimension_numbers = #tpu.dot_dimension_numbers<[1], [1], [0], [0], [0, 0, 1, 0], [], []>} : vector<8x32xbf16>, vector<8x32xbf16>, vector<8x8xf32> -> vector<8x8xf32>
    %cst_138 = arith.constant 0.176776692 : f32
    %293 = vector.broadcast %cst_138 : f32 to vector<8x8xf32>
    %294 = arith.mulf %292, %293 : vector<8x8xf32>
    %cst_139 = arith.constant dense<0xFF800000> : vector<8xf32>
    %295 = vector.multi_reduction <maximumf>, %294, %cst_139 [1] : vector<8x8xf32> to vector<8xf32>
    %296 = vector.shape_cast %295 : vector<8xf32> to vector<8x1xf32>
    %297 = vector.broadcast %296 : vector<8x1xf32> to vector<8x8xf32>
    %298 = arith.subf %294, %297 : vector<8x8xf32>
    %299 = math.exp %298 : vector<8x8xf32>
    %cst_140 = arith.constant dense<0.000000e+00> : vector<8xf32>
    %300 = vector.multi_reduction <add>, %299, %cst_140 [1] : vector<8x8xf32> to vector<8xf32>
    %301 = vector.shape_cast %300 : vector<8xf32> to vector<8x1xf32>
    %302 = tpu.reciprocal %301 {approx = true} : vector<8x1xf32> -> vector<8x1xf32>
    %303 = vector.broadcast %302 : vector<8x1xf32> to vector<8x8xf32>
    %304 = arith.mulf %299, %303 : vector<8x8xf32>
    %305 = arith.truncf %304 : vector<8x8xf32> to vector<8x8xbf16>
    %306 = arith.truncf %289 : vector<8x32xf32> to vector<8x32xbf16>
    %cst_141 = arith.constant dense<0.000000e+00> : vector<8x32xf32>
    %307 = tpu.matmul %305, %306, %cst_141 {dimension_numbers = #tpu.dot_dimension_numbers<[1], [0], [0], [1], [0, 0, 1, 1], [], []>} : vector<8x8xbf16>, vector<8x32xbf16>, vector<8x32xf32> -> vector<8x32xf32>
    %308 = arith.truncf %307 : vector<8x32xf32> to vector<8x32xbf16>
    %309 = vector.extract_strided_slice %206 {offsets = [96, 0], sizes = [32, 128], strides = [1, 1]} : vector<128x128xbf16> to vector<32x128xbf16>
    %cst_142 = arith.constant dense<0.000000e+00> : vector<8x128xf32>
    %310 = tpu.matmul %308, %309, %cst_142 {dimension_numbers = #tpu.dot_dimension_numbers<[1], [0], [0], [1], [0, 0, 1, 1], [], []>} : vector<8x32xbf16>, vector<32x128xbf16>, vector<8x128xf32> -> vector<8x128xf32>
    %311 = arith.addf %285, %310 : vector<8x128xf32>
    %c1_143 = arith.constant 1 : index
    %c0_144 = arith.constant 0 : index
    %c0_145 = arith.constant 0 : index
    %312 = vector.load %arg8[%c1_143, %c0_144, %c0_145] : memref<2x1x128xf32, #tpu.memory_space<vmem>>, vector<1x1x128xf32>
    %313 = vector.shape_cast %312 : vector<1x1x128xf32> to vector<1x128xf32>
    %314 = vector.broadcast %313 : vector<1x128xf32> to vector<8x128xf32>
    %315 = arith.addf %311, %314 : vector<8x128xf32>
    %316 = arith.addf %315, %197 : vector<8x128xf32>
    %c1_146 = arith.constant 1 : index
    %c0_147 = arith.constant 0 : index
    %c0_148 = arith.constant 0 : index
    %317 = vector.load %arg9[%c1_146, %c0_147, %c0_148] : memref<2x1x128xf32, #tpu.memory_space<vmem>>, vector<1x1x128xf32>
    %318 = vector.shape_cast %317 : vector<1x1x128xf32> to vector<1x128xf32>
    %c1_149 = arith.constant 1 : index
    %c0_150 = arith.constant 0 : index
    %c0_151 = arith.constant 0 : index
    %319 = vector.load %arg10[%c1_149, %c0_150, %c0_151] : memref<2x1x128xf32, #tpu.memory_space<vmem>>, vector<1x1x128xf32>
    %320 = vector.shape_cast %319 : vector<1x1x128xf32> to vector<1x128xf32>
    %cst_152 = arith.constant dense<0.000000e+00> : vector<8xf32>
    %321 = vector.multi_reduction <add>, %316, %cst_152 [1] : vector<8x128xf32> to vector<8xf32>
    %322 = vector.shape_cast %321 : vector<8xf32> to vector<8x1xf32>
    %cst_153 = arith.constant 1.280000e+02 : f32
    %323 = vector.broadcast %cst_153 : f32 to vector<8x1xf32>
    %324 = arith.divf %322, %323 : vector<8x1xf32>
    %325 = vector.broadcast %324 : vector<8x1xf32> to vector<8x128xf32>
    %326 = arith.subf %316, %325 : vector<8x128xf32>
    %327 = arith.mulf %326, %326 : vector<8x128xf32>
    %cst_154 = arith.constant dense<0.000000e+00> : vector<8xf32>
    %328 = vector.multi_reduction <add>, %327, %cst_154 [1] : vector<8x128xf32> to vector<8xf32>
    %329 = vector.shape_cast %328 : vector<8xf32> to vector<8x1xf32>
    %cst_155 = arith.constant 1.280000e+02 : f32
    %330 = vector.broadcast %cst_155 : f32 to vector<8x1xf32>
    %331 = arith.divf %329, %330 : vector<8x1xf32>
    %332 = vector.broadcast %324 : vector<8x1xf32> to vector<8x128xf32>
    %333 = arith.subf %316, %332 : vector<8x128xf32>
    %cst_156 = arith.constant 9.99999974E-6 : f32
    %334 = vector.broadcast %cst_156 : f32 to vector<8x1xf32>
    %335 = arith.addf %331, %334 : vector<8x1xf32>
    %336 = math.rsqrt %335 : vector<8x1xf32>
    %337 = vector.broadcast %336 : vector<8x1xf32> to vector<8x128xf32>
    %338 = arith.mulf %333, %337 : vector<8x128xf32>
    %339 = vector.broadcast %318 : vector<1x128xf32> to vector<8x128xf32>
    %340 = arith.mulf %338, %339 : vector<8x128xf32>
    %341 = vector.broadcast %320 : vector<1x128xf32> to vector<8x128xf32>
    %342 = arith.addf %340, %341 : vector<8x128xf32>
    %343 = arith.truncf %342 : vector<8x128xf32> to vector<8x128xbf16>
    %c1_157 = arith.constant 1 : index
    %c0_158 = arith.constant 0 : index
    %c0_159 = arith.constant 0 : index
    %344 = vector.load %arg13[%c1_157, %c0_158, %c0_159] : memref<2x128x256xbf16, #tpu.memory_space<vmem>>, vector<1x128x256xbf16>
    %345 = vector.shape_cast %344 : vector<1x128x256xbf16> to vector<128x256xbf16>
    %cst_160 = arith.constant dense<0.000000e+00> : vector<8x256xf32>
    %346 = tpu.matmul %343, %345, %cst_160 {dimension_numbers = #tpu.dot_dimension_numbers<[1], [0], [0], [1], [0, 0, 1, 1], [], []>} : vector<8x128xbf16>, vector<128x256xbf16>, vector<8x256xf32> -> vector<8x256xf32>
    %c1_161 = arith.constant 1 : index
    %c0_162 = arith.constant 0 : index
    %c0_163 = arith.constant 0 : index
    %347 = vector.load %arg14[%c1_161, %c0_162, %c0_163] : memref<2x1x256xf32, #tpu.memory_space<vmem>>, vector<1x1x256xf32>
    %348 = vector.shape_cast %347 : vector<1x1x256xf32> to vector<1x256xf32>
    %349 = vector.broadcast %348 : vector<1x256xf32> to vector<8x256xf32>
    %350 = arith.addf %346, %349 : vector<8x256xf32>
    %cst_164 = arith.constant 0.000000e+00 : f32
    %351 = vector.broadcast %cst_164 : f32 to vector<8x256xf32>
    %352 = arith.maximumf %350, %351 : vector<8x256xf32>
    %353 = arith.truncf %352 : vector<8x256xf32> to vector<8x256xbf16>
    %c1_165 = arith.constant 1 : index
    %c0_166 = arith.constant 0 : index
    %c0_167 = arith.constant 0 : index
    %354 = vector.load %arg15[%c1_165, %c0_166, %c0_167] : memref<2x256x128xbf16, #tpu.memory_space<vmem>>, vector<1x256x128xbf16>
    %355 = vector.shape_cast %354 : vector<1x256x128xbf16> to vector<256x128xbf16>
    %cst_168 = arith.constant dense<0.000000e+00> : vector<8x128xf32>
    %356 = tpu.matmul %353, %355, %cst_168 {dimension_numbers = #tpu.dot_dimension_numbers<[1], [0], [0], [1], [0, 0, 1, 1], [], []>} : vector<8x256xbf16>, vector<256x128xbf16>, vector<8x128xf32> -> vector<8x128xf32>
    %c1_169 = arith.constant 1 : index
    %c0_170 = arith.constant 0 : index
    %c0_171 = arith.constant 0 : index
    %357 = vector.load %arg16[%c1_169, %c0_170, %c0_171] : memref<2x1x128xf32, #tpu.memory_space<vmem>>, vector<1x1x128xf32>
    %358 = vector.shape_cast %357 : vector<1x1x128xf32> to vector<1x128xf32>
    %359 = vector.broadcast %358 : vector<1x128xf32> to vector<8x128xf32>
    %360 = arith.addf %356, %359 : vector<8x128xf32>
    %361 = arith.addf %360, %342 : vector<8x128xf32>
    %c1_172 = arith.constant 1 : index
    %c0_173 = arith.constant 0 : index
    %c0_174 = arith.constant 0 : index
    %362 = vector.load %arg11[%c1_172, %c0_173, %c0_174] : memref<2x1x128xf32, #tpu.memory_space<vmem>>, vector<1x1x128xf32>
    %363 = vector.shape_cast %362 : vector<1x1x128xf32> to vector<1x128xf32>
    %c1_175 = arith.constant 1 : index
    %c0_176 = arith.constant 0 : index
    %c0_177 = arith.constant 0 : index
    %364 = vector.load %arg12[%c1_175, %c0_176, %c0_177] : memref<2x1x128xf32, #tpu.memory_space<vmem>>, vector<1x1x128xf32>
    %365 = vector.shape_cast %364 : vector<1x1x128xf32> to vector<1x128xf32>
    %cst_178 = arith.constant dense<0.000000e+00> : vector<8xf32>
    %366 = vector.multi_reduction <add>, %361, %cst_178 [1] : vector<8x128xf32> to vector<8xf32>
    %367 = vector.shape_cast %366 : vector<8xf32> to vector<8x1xf32>
    %cst_179 = arith.constant 1.280000e+02 : f32
    %368 = vector.broadcast %cst_179 : f32 to vector<8x1xf32>
    %369 = arith.divf %367, %368 : vector<8x1xf32>
    %370 = vector.broadcast %369 : vector<8x1xf32> to vector<8x128xf32>
    %371 = arith.subf %361, %370 : vector<8x128xf32>
    %372 = arith.mulf %371, %371 : vector<8x128xf32>
    %cst_180 = arith.constant dense<0.000000e+00> : vector<8xf32>
    %373 = vector.multi_reduction <add>, %372, %cst_180 [1] : vector<8x128xf32> to vector<8xf32>
    %374 = vector.shape_cast %373 : vector<8xf32> to vector<8x1xf32>
    %cst_181 = arith.constant 1.280000e+02 : f32
    %375 = vector.broadcast %cst_181 : f32 to vector<8x1xf32>
    %376 = arith.divf %374, %375 : vector<8x1xf32>
    %377 = vector.broadcast %369 : vector<8x1xf32> to vector<8x128xf32>
    %378 = arith.subf %361, %377 : vector<8x128xf32>
    %cst_182 = arith.constant 9.99999974E-6 : f32
    %379 = vector.broadcast %cst_182 : f32 to vector<8x1xf32>
    %380 = arith.addf %376, %379 : vector<8x1xf32>
    %381 = math.rsqrt %380 : vector<8x1xf32>
    %382 = vector.broadcast %381 : vector<8x1xf32> to vector<8x128xf32>
    %383 = arith.mulf %378, %382 : vector<8x128xf32>
    %384 = vector.broadcast %363 : vector<1x128xf32> to vector<8x128xf32>
    %385 = arith.mulf %383, %384 : vector<8x128xf32>
    %386 = vector.broadcast %365 : vector<1x128xf32> to vector<8x128xf32>
    %387 = arith.addf %385, %386 : vector<8x128xf32>
    %c0_183 = arith.constant 0 : index
    %c0_184 = arith.constant 0 : index
    %c0_185 = arith.constant 0 : index
    %388 = vector.load %arg17[%c0_183, %c0_184, %c0_185] : memref<1x8x128xf32, #tpu.memory_space<vmem>>, vector<1x8x128xf32>
    %389 = vector.shape_cast %388 : vector<1x8x128xf32> to vector<8x128xf32>
    %390 = vector.shape_cast %387 : vector<8x128xf32> to vector<1x8x128xf32>
    tpu.vector_store %arg17[%c0_183, %c0_184, %c0_185], %390 {strides = array<i32>} : memref<1x8x128xf32, #tpu.memory_space<vmem>>, vector<1x8x128xf32>,
    return
  }
  func.func @transform_0(%arg0: i32) -> (i32, i32, i32) {
    %c0_i32 = arith.constant 0 : i32
    %c0_i32_0 = arith.constant 0 : i32
    %c0_i32_1 = arith.constant 0 : i32
    return %arg0, %c0_i32, %c0_i32_0 : i32, i32, i32
  }
  func.func @transform_1(%arg0: i32) -> (i32, i32) {
    %c0_i32 = arith.constant 0 : i32
    %c0_i32_0 = arith.constant 0 : i32
    %c0_i32_1 = arith.constant 0 : i32
    return %c0_i32, %c0_i32_0 : i32, i32
  }
  func.func @transform_2(%arg0: i32) -> (i32, i32) {
    %c0_i32 = arith.constant 0 : i32
    %c0_i32_0 = arith.constant 0 : i32
    %c0_i32_1 = arith.constant 0 : i32
    return %c0_i32, %c0_i32_0 : i32, i32
  }
  func.func @transform_3(%arg0: i32) -> (i32, i32, i32) {
    %c0_i32 = arith.constant 0 : i32
    %c0_i32_0 = arith.constant 0 : i32
    %c0_i32_1 = arith.constant 0 : i32
    %c0_i32_2 = arith.constant 0 : i32
    return %c0_i32, %c0_i32_0, %c0_i32_1 : i32, i32, i32
  }
  func.func @transform_4(%arg0: i32) -> (i32, i32, i32) {
    %c0_i32 = arith.constant 0 : i32
    %c0_i32_0 = arith.constant 0 : i32
    %c0_i32_1 = arith.constant 0 : i32
    %c0_i32_2 = arith.constant 0 : i32
    return %c0_i32, %c0_i32_0, %c0_i32_1 : i32, i32, i32
  }
  func.func @transform_5(%arg0: i32) -> (i32, i32, i32) {
    %c0_i32 = arith.constant 0 : i32
    %c0_i32_0 = arith.constant 0 : i32
    %c0_i32_1 = arith.constant 0 : i32
    %c0_i32_2 = arith.constant 0 : i32
    return %c0_i32, %c0_i32_0, %c0_i32_1 : i32, i32, i32
  }
  func.func @transform_6(%arg0: i32) -> (i32, i32, i32) {
    %c0_i32 = arith.constant 0 : i32
    %c0_i32_0 = arith.constant 0 : i32
    %c0_i32_1 = arith.constant 0 : i32
    %c0_i32_2 = arith.constant 0 : i32
    return %c0_i32, %c0_i32_0, %c0_i32_1 : i32, i32, i32
  }
  func.func @transform_7(%arg0: i32) -> (i32, i32, i32) {
    %c0_i32 = arith.constant 0 : i32
    %c0_i32_0 = arith.constant 0 : i32
    %c0_i32_1 = arith.constant 0 : i32
    %c0_i32_2 = arith.constant 0 : i32
    return %c0_i32, %c0_i32_0, %c0_i32_1 : i32, i32, i32
  }
  func.func @transform_8(%arg0: i32) -> (i32, i32, i32) {
    %c0_i32 = arith.constant 0 : i32
    %c0_i32_0 = arith.constant 0 : i32
    %c0_i32_1 = arith.constant 0 : i32
    %c0_i32_2 = arith.constant 0 : i32
    return %c0_i32, %c0_i32_0, %c0_i32_1 : i32, i32, i32
  }
  func.func @transform_9(%arg0: i32) -> (i32, i32, i32) {
    %c0_i32 = arith.constant 0 : i32
    %c0_i32_0 = arith.constant 0 : i32
    %c0_i32_1 = arith.constant 0 : i32
    %c0_i32_2 = arith.constant 0 : i32
    return %c0_i32, %c0_i32_0, %c0_i32_1 : i32, i32, i32
  }
  func.func @transform_10(%arg0: i32) -> (i32, i32, i32) {
    %c0_i32 = arith.constant 0 : i32
    %c0_i32_0 = arith.constant 0 : i32
    %c0_i32_1 = arith.constant 0 : i32
    %c0_i32_2 = arith.constant 0 : i32
    return %c0_i32, %c0_i32_0, %c0_i32_1 : i32, i32, i32
  }
  func.func @transform_11(%arg0: i32) -> (i32, i32, i32) {
    %c0_i32 = arith.constant 0 : i32
    %c0_i32_0 = arith.constant 0 : i32
    %c0_i32_1 = arith.constant 0 : i32
    %c0_i32_2 = arith.constant 0 : i32
    return %c0_i32, %c0_i32_0, %c0_i32_1 : i32, i32, i32
  }
  func.func @transform_12(%arg0: i32) -> (i32, i32, i32) {
    %c0_i32 = arith.constant 0 : i32
    %c0_i32_0 = arith.constant 0 : i32
    %c0_i32_1 = arith.constant 0 : i32
    %c0_i32_2 = arith.constant 0 : i32
    return %c0_i32, %c0_i32_0, %c0_i32_1 : i32, i32, i32
  }
  func.func @transform_13(%arg0: i32) -> (i32, i32, i32) {
    %c0_i32 = arith.constant 0 : i32
    %c0_i32_0 = arith.constant 0 : i32
    %c0_i32_1 = arith.constant 0 : i32
    %c0_i32_2 = arith.constant 0 : i32
    return %c0_i32, %c0_i32_0, %c0_i32_1 : i32, i32, i32
  }
  func.func @transform_14(%arg0: i32) -> (i32, i32, i32) {
    %c0_i32 = arith.constant 0 : i32
    %c0_i32_0 = arith.constant 0 : i32
    %c0_i32_1 = arith.constant 0 : i32
    %c0_i32_2 = arith.constant 0 : i32
    return %c0_i32, %c0_i32_0, %c0_i32_1 : i32, i32, i32
  }
  func.func @transform_15(%arg0: i32) -> (i32, i32, i32) {
    %c0_i32 = arith.constant 0 : i32
    %c0_i32_0 = arith.constant 0 : i32
    %c0_i32_1 = arith.constant 0 : i32
    %c0_i32_2 = arith.constant 0 : i32
    return %c0_i32, %c0_i32_0, %c0_i32_1 : i32, i32, i32
  }
  func.func @transform_16(%arg0: i32) -> (i32, i32, i32) {
    %c0_i32 = arith.constant 0 : i32
    %c0_i32_0 = arith.constant 0 : i32
    %c0_i32_1 = arith.constant 0 : i32
    return %arg0, %c0_i32, %c0_i32_0 : i32, i32, i32
  }
}

</mosaic_0001>

<llo_original>
// kernel: tpu_custom_call.1
$region0: #{tpu_custom_call.1}
  #allocation0 [shape = 'u32[]', space=smem, size = 0x4, offset = 0x4, fixed_abs, tag = 'smem constant byte address 0x4 - core index']
  #allocation1 [shape = 'u32[144,128]{1,0:T(1,128)}', space=vmem, size = 0x12000, scoped, tag = 'internal scratch']
  %s0 = inlined_call_operand.hbm [shape: f32[2,8,64], index: 0, kind: input, shape index: {}]
  %s1 = inlined_call_operand.hbm [shape: bf16[64,128], index: 1, kind: input, shape index: {}]
  %s2 = inlined_call_operand.hbm [shape: f32[1,128], index: 2, kind: input, shape index: {}]
  %s3 = inlined_call_operand.hbm [shape: bf16[2,32,32], index: 3, kind: input, shape index: {}]
  %s4 = inlined_call_operand.hbm [shape: bf16[2,32,32], index: 4, kind: input, shape index: {}]
  %s5 = inlined_call_operand.hbm [shape: bf16[2,32,32], index: 5, kind: input, shape index: {}]
  %s6 = inlined_call_operand.hbm [shape: bf16[2,128,128], index: 6, kind: input, shape index: {}]
  %s7 = inlined_call_operand.vmem [shape: f32[2,1,128], index: 7, kind: input, shape index: {}]
  %s8 = inlined_call_operand.vmem [shape: f32[2,1,128], index: 8, kind: input, shape index: {}]
  %s9 = inlined_call_operand.vmem [shape: f32[2,1,128], index: 9, kind: input, shape index: {}]
  %s10 = inlined_call_operand.vmem [shape: f32[2,1,128], index: 10, kind: input, shape index: {}]
  %s11 = inlined_call_operand.vmem [shape: f32[2,1,128], index: 11, kind: input, shape index: {}]
  %s12 = inlined_call_operand.hbm [shape: bf16[2,128,256], index: 12, kind: input, shape index: {}]
  %s13 = inlined_call_operand.vmem [shape: f32[2,1,256], index: 13, kind: input, shape index: {}]
  %s14 = inlined_call_operand.hbm [shape: bf16[2,256,128], index: 14, kind: input, shape index: {}]
  %s15 = inlined_call_operand.vmem [shape: f32[2,1,128], index: 15, kind: input, shape index: {}]
  %s16 = inlined_call_operand.hbm [shape: f32[2,8,128], index: 16, kind: output, shape index: {}]
  %s17 = sld [smem:[#allocation0]]
  $region133: #{tpu_custom_call.1} parent=0
    _
  %s19 = ssub.s32 1, %s17
  %s20 = scalar_select 0, %s19, %s17
  $region1: #{tpu_custom_call.1} parent=0
    #allocation2 [shape = 'u8[8192]{0}', space=vmem, size = 0x2000, scoped, tag = 'input window, operand 0']
    #allocation3 [shape = 's32[2]{0}', space=sflag, size = 0x8, scoped, tag = 'scoped memory for tpu_custom_call.1']
    #allocation4 [shape = 's32[2]{0}', space=sflag, size = 0x8, scoped, tag = 'scoped memory for tpu_custom_call.1']
    #allocation5 [shape = 'u8[16384]{0}', space=vmem, size = 0x4000, scoped, tag = 'input window, operand 1, single buffered']
    #allocation6 [shape = 's32[1]{0}', space=sflag, size = 0x4, scoped, tag = 'scoped memory for tpu_custom_call.1']
    #allocation7 [shape = 'u8[512]{0}', space=vmem, size = 0x400, scoped, tag = 'input window, operand 2, single buffered']
    #allocation8 [shape = 'u8[16384]{0}', space=vmem, size = 0x4000, scoped, tag = 'input window, operand 3, single buffered']
    #allocation9 [shape = 's32[1]{0}', space=sflag, size = 0x4, scoped, tag = 'scoped memory for tpu_custom_call.1']
    #allocation10 [shape = 'u8[16384]{0}', space=vmem, size = 0x4000, scoped, tag = 'input window, operand 4, single buffered']
    #allocation11 [shape = 'u8[16384]{0}', space=vmem, size = 0x4000, scoped, tag = 'input window, operand 5, single buffered']
    #allocation12 [shape = 's32[1]{0}', space=sflag, size = 0x4, scoped, tag = 'scoped memory for tpu_custom_call.1']
    #allocation13 [shape = 'u8[65536]{0}', space=vmem, size = 0x10000, scoped, tag = 'input window, operand 6, single buffered']
    #allocation14 [shape = 'u8[131072]{0}', space=vmem, size = 0x20000, scoped, tag = 'input window, operand 12, single buffered']
    #allocation15 [shape = 's32[1]{0}', space=sflag, size = 0x4, scoped, tag = 'scoped memory for tpu_custom_call.1']
    #allocation16 [shape = 'u8[131072]{0}', space=vmem, size = 0x20000, scoped, tag = 'input window, operand 14, single buffered']
    #allocation17 [shape = 'u8[8192]{0}', space=vmem, size = 0x2000, scoped, tag = 'output window, operand 0']
    %21 = vsyncpa [#allocation3], 0
    %s22 = scalar_lea.sflag [#allocation3], 1
    %23 = vsyncpa %s22, 0
    %24 = vsyncpa [#allocation6], 0
    %25 = vsyncpa [#allocation9], 0
    %26 = vsyncpa [#allocation12], 0
    %27 = vsyncpa [#allocation15], 0
    %28 = vsyncpa [#allocation4], 0
    %s29 = scalar_lea.sflag [#allocation4], 1
    %30 = vsyncpa %s29, 0
    loop: start=0, step=1, limit=4
    $region2: #{tpu_custom_call.1} parent=1 // loop_pre_header
      _
    $region3: #{tpu_custom_call.1} parent=1 // loop_header
      %s32 = sphi 0, %s36
      %p33 = scmp.ge.s32.totalorder %s32, 4
      %s42 = sphi 0, %s44
      %s45 = sphi 0, %s42
      %s46 = sphi 0, %s45
      %s62 = sphi 0, %s46
      %s66 = sphi 0, %s66
      %s68 = sphi 0, %s66
      %s69 = sphi 0, %s68
      %s83 = sphi 0, %s69
      %s87 = sphi 0, %s87
      %s89 = sphi 0, %s87
      %s90 = sphi 0, %s89
      %s104 = sphi 0, %s90
      %s108 = sphi 0, %s108
      %s110 = sphi 0, %s108
      %s111 = sphi 0, %s110
      %s125 = sphi 0, %s111
      %s129 = sphi 0, %s129
      %s131 = sphi 0, %s129
      %s132 = sphi 0, %s131
      %s146 = sphi 0, %s132
      %s150 = sphi 0, %s150
      %s152 = sphi 0, %s150
      %s153 = sphi 0, %s152
      %s167 = sphi 0, %s153
      %s171 = sphi 0, %s171
      %s173 = sphi 0, %s171
      %s174 = sphi 0, %s173
      %s188 = sphi 0, %s174
      %s192 = sphi 0, %s192
      %s194 = sphi 0, %s192
      %s195 = sphi 0, %s194
      %s209 = sphi 0, %s195
      %s213 = sphi 0, %s213
      %s215 = sphi 0, %s213
      %s216 = sphi 0, %s215
      %s230 = sphi 0, %s216
      %s234 = sphi 0, %s234
      %s236 = sphi 0, %s234
      %s237 = sphi 0, %s236
      %s251 = sphi 0, %s237
      %s255 = sphi 0, %s255
      %s257 = sphi 0, %s255
      %s258 = sphi 0, %s257
      %s272 = sphi 0, %s258
      %s276 = sphi 0, %s276
      %s278 = sphi 0, %s276
      %s279 = sphi 0, %s278
      %s293 = sphi 0, %s279
      %s297 = sphi 0, %s297
      %s299 = sphi 0, %s297
      %s300 = sphi 0, %s299
      %s314 = sphi 0, %s300
      %s318 = sphi 0, %s318
      %s320 = sphi 0, %s318
      %s321 = sphi 0, %s320
      %s335 = sphi 0, %s321
      %s339 = sphi 0, %s339
      %s341 = sphi 0, %s339
      %s342 = sphi 0, %s341
      %s356 = sphi 0, %s342
      %s360 = sphi 0, %s360
      %s362 = sphi 0, %s360
      %s363 = sphi 0, %s362
      %s377 = sphi 0, %s363
      %s383 = sphi 0, %s385
      %s386 = sphi 0, %s383
      %s387 = sphi 0, %s386
      %s403 = sphi 0, %s387
    $region4: #{tpu_custom_call.1} parent=1 // loop_header_branch
      %35 = sbr.rel (%p33) target = $region8
    $region5: #{tpu_custom_call.1} parent=1 // loop_body
      %s37 = ssub.s32 %s32, 1
      %s38 = ssub.s32 %s32, 2
      %s39 = sadd.s32 %s32, 1
      %s40 = ssub.s32 %s32, %s39
      %p41 = scmp.eq.s32.totalorder %s40, 0
      %s43 = sadd.s32 %s42, 1
      %s44 = scalar_select %p41, %s42, %s43
      %p47 = pneg %p41
      %p48 = scmp.eq.s32.totalorder %s32, 1
      %p49 = por %p47, %p48
      %p50 = scmp.ne.s32.totalorder %s42, %s45
      %p51 = scmp.eq.s32.totalorder %s32, 0
      %p52 = por %p50, %p51
      %p53 = scmp.ne.s32.totalorder %s42, %s45
      %p54 = scmp.eq.s32.totalorder %s37, 1
      %p55 = por %p53, %p54
      %p56 = scmp.ne.s32.totalorder %s45, %s46
      %p57 = scmp.eq.s32.totalorder %s37, 0
      %p58 = por %p56, %p57
      %p59 = scmp.ne.s32.totalorder %s45, %s46
      %p60 = scmp.eq.s32.totalorder %s38, 1
      %p61 = por %p59, %p60
      %p63 = scmp.ne.s32.totalorder %s46, %s62
      %p64 = scmp.eq.s32.totalorder %s38, 0
      %p65 = por %p63, %p64
      %s67 = sadd.s32 %s66, 1
      %p70 = scmp.eq.s32.totalorder %s32, 1
      %p71 = scmp.ne.s32.totalorder %s66, %s68
      %p72 = scmp.eq.s32.totalorder %s32, 0
      %p73 = por %p71, %p72
      %p74 = scmp.ne.s32.totalorder %s66, %s68
      %p75 = scmp.eq.s32.totalorder %s37, 1
      %p76 = por %p74, %p75
      %p77 = scmp.ne.s32.totalorder %s68, %s69
      %p78 = scmp.eq.s32.totalorder %s37, 0
      %p79 = por %p77, %p78
      %p80 = scmp.ne.s32.totalorder %s68, %s69
      %p81 = scmp.eq.s32.totalorder %s38, 1
      %p82 = por %p80, %p81
      %p84 = scmp.ne.s32.totalorder %s69, %s83
      %p85 = scmp.eq.s32.totalorder %s38, 0
      %p86 = por %p84, %p85
      %s88 = sadd.s32 %s87, 1
      %p91 = scmp.eq.s32.totalorder %s32, 1
      %p92 = scmp.ne.s32.totalorder %s87, %s89
      %p93 = scmp.eq.s32.totalorder %s32, 0
      %p94 = por %p92, %p93
      %p95 = scmp.ne.s32.totalorder %s87, %s89
      %p96 = scmp.eq.s32.totalorder %s37, 1
      %p97 = por %p95, %p96
      %p98 = scmp.ne.s32.totalorder %s89, %s90
      %p99 = scmp.eq.s32.totalorder %s37, 0
      %p100 = por %p98, %p99
      %p101 = scmp.ne.s32.totalorder %s89, %s90
      %p102 = scmp.eq.s32.totalorder %s38, 1
      %p103 = por %p101, %p102
      %p105 = scmp.ne.s32.totalorder %s90, %s104
      %p106 = scmp.eq.s32.totalorder %s38, 0
      %p107 = por %p105, %p106
      %s109 = sadd.s32 %s108, 1
      %p112 = scmp.eq.s32.totalorder %s32, 1
      %p113 = scmp.ne.s32.totalorder %s108, %s110
      %p114 = scmp.eq.s32.totalorder %s32, 0
      %p115 = por %p113, %p114
      %p116 = scmp.ne.s32.totalorder %s108, %s110
      %p117 = scmp.eq.s32.totalorder %s37, 1
      %p118 = por %p116, %p117
      %p119 = scmp.ne.s32.totalorder %s110, %s111
      %p120 = scmp.eq.s32.totalorder %s37, 0
      %p121 = por %p119, %p120
      %p122 = scmp.ne.s32.totalorder %s110, %s111
      %p123 = scmp.eq.s32.totalorder %s38, 1
      %p124 = por %p122, %p123
      %p126 = scmp.ne.s32.totalorder %s111, %s125
      %p127 = scmp.eq.s32.totalorder %s38, 0
      %p128 = por %p126, %p127
      %s130 = sadd.s32 %s129, 1
      %p133 = scmp.eq.s32.totalorder %s32, 1
      %p134 = scmp.ne.s32.totalorder %s129, %s131
      %p135 = scmp.eq.s32.totalorder %s32, 0
      %p136 = por %p134, %p135
      %p137 = scmp.ne.s32.totalorder %s129, %s131
      %p138 = scmp.eq.s32.totalorder %s37, 1
      %p139 = por %p137, %p138
      %p140 = scmp.ne.s32.totalorder %s131, %s132
      %p141 = scmp.eq.s32.totalorder %s37, 0
      %p142 = por %p140, %p141
      %p143 = scmp.ne.s32.totalorder %s131, %s132
      %p144 = scmp.eq.s32.totalorder %s38, 1
      %p145 = por %p143, %p144
      %p147 = scmp.ne.s32.totalorder %s132, %s146
      %p148 = scmp.eq.s32.totalorder %s38, 0
      %p149 = por %p147, %p148
      %s151 = sadd.s32 %s150, 1
      %p154 = scmp.eq.s32.totalorder %s32, 1
      %p155 = scmp.ne.s32.totalorder %s150, %s152
      %p156 = scmp.eq.s32.totalorder %s32, 0
      %p157 = por %p155, %p156
      %p158 = scmp.ne.s32.totalorder %s150, %s152
      %p159 = scmp.eq.s32.totalorder %s37, 1
      %p160 = por %p158, %p159
      %p161 = scmp.ne.s32.totalorder %s152, %s153
      %p162 = scmp.eq.s32.totalorder %s37, 0
      %p163 = por %p161, %p162
      %p164 = scmp.ne.s32.totalorder %s152, %s153
      %p165 = scmp.eq.s32.totalorder %s38, 1
      %p166 = por %p164, %p165
      %p168 = scmp.ne.s32.totalorder %s153, %s167
      %p169 = scmp.eq.s32.totalorder %s38, 0
      %p170 = por %p168, %p169
      %s172 = sadd.s32 %s171, 1
      %p175 = scmp.eq.s32.totalorder %s32, 1
      %p176 = scmp.ne.s32.totalorder %s171, %s173
      %p177 = scmp.eq.s32.totalorder %s32, 0
      %p178 = por %p176, %p177
      %p179 = scmp.ne.s32.totalorder %s171, %s173
      %p180 = scmp.eq.s32.totalorder %s37, 1
      %p181 = por %p179, %p180
      %p182 = scmp.ne.s32.totalorder %s173, %s174
      %p183 = scmp.eq.s32.totalorder %s37, 0
      %p184 = por %p182, %p183
      %p185 = scmp.ne.s32.totalorder %s173, %s174
      %p186 = scmp.eq.s32.totalorder %s38, 1
      %p187 = por %p185, %p186
      %p189 = scmp.ne.s32.totalorder %s174, %s188
      %p190 = scmp.eq.s32.totalorder %s38, 0
      %p191 = por %p189, %p190
      %s193 = sadd.s32 %s192, 1
      %p196 = scmp.eq.s32.totalorder %s32, 1
      %p197 = scmp.ne.s32.totalorder %s192, %s194
      %p198 = scmp.eq.s32.totalorder %s32, 0
      %p199 = por %p197, %p198
      %p200 = scmp.ne.s32.totalorder %s192, %s194
      %p201 = scmp.eq.s32.totalorder %s37, 1
      %p202 = por %p200, %p201
      %p203 = scmp.ne.s32.totalorder %s194, %s195
      %p204 = scmp.eq.s32.totalorder %s37, 0
      %p205 = por %p203, %p204
      %p206 = scmp.ne.s32.totalorder %s194, %s195
      %p207 = scmp.eq.s32.totalorder %s38, 1
      %p208 = por %p206, %p207
      %p210 = scmp.ne.s32.totalorder %s195, %s209
      %p211 = scmp.eq.s32.totalorder %s38, 0
      %p212 = por %p210, %p211
      %s214 = sadd.s32 %s213, 1
      %p217 = scmp.eq.s32.totalorder %s32, 1
      %p218 = scmp.ne.s32.totalorder %s213, %s215
      %p219 = scmp.eq.s32.totalorder %s32, 0
      %p220 = por %p218, %p219
      %p221 = scmp.ne.s32.totalorder %s213, %s215
      %p222 = scmp.eq.s32.totalorder %s37, 1
      %p223 = por %p221, %p222
      %p224 = scmp.ne.s32.totalorder %s215, %s216
      %p225 = scmp.eq.s32.totalorder %s37, 0
      %p226 = por %p224, %p225
      %p227 = scmp.ne.s32.totalorder %s215, %s216
      %p228 = scmp.eq.s32.totalorder %s38, 1
      %p229 = por %p227, %p228
      %p231 = scmp.ne.s32.totalorder %s216, %s230
      %p232 = scmp.eq.s32.totalorder %s38, 0
      %p233 = por %p231, %p232
      %s235 = sadd.s32 %s234, 1
      %p238 = scmp.eq.s32.totalorder %s32, 1
      %p239 = scmp.ne.s32.totalorder %s234, %s236
      %p240 = scmp.eq.s32.totalorder %s32, 0
      %p241 = por %p239, %p240
      %p242 = scmp.ne.s32.totalorder %s234, %s236
      %p243 = scmp.eq.s32.totalorder %s37, 1
      %p244 = por %p242, %p243
      %p245 = scmp.ne.s32.totalorder %s236, %s237
      %p246 = scmp.eq.s32.totalorder %s37, 0
      %p247 = por %p245, %p246
      %p248 = scmp.ne.s32.totalorder %s236, %s237
      %p249 = scmp.eq.s32.totalorder %s38, 1
      %p250 = por %p248, %p249
      %p252 = scmp.ne.s32.totalorder %s237, %s251
      %p253 = scmp.eq.s32.totalorder %s38, 0
      %p254 = por %p252, %p253
      %s256 = sadd.s32 %s255, 1
      %p259 = scmp.eq.s32.totalorder %s32, 1
      %p260 = scmp.ne.s32.totalorder %s255, %s257
      %p261 = scmp.eq.s32.totalorder %s32, 0
      %p262 = por %p260, %p261
      %p263 = scmp.ne.s32.totalorder %s255, %s257
      %p264 = scmp.eq.s32.totalorder %s37, 1
      %p265 = por %p263, %p264
      %p266 = scmp.ne.s32.totalorder %s257, %s258
      %p267 = scmp.eq.s32.totalorder %s37, 0
      %p268 = por %p266, %p267
      %p269 = scmp.ne.s32.totalorder %s257, %s258
      %p270 = scmp.eq.s32.totalorder %s38, 1
      %p271 = por %p269, %p270
      %p273 = scmp.ne.s32.totalorder %s258, %s272
      %p274 = scmp.eq.s32.totalorder %s38, 0
      %p275 = por %p273, %p274
      %s277 = sadd.s32 %s276, 1
      %p280 = scmp.eq.s32.totalorder %s32, 1
      %p281 = scmp.ne.s32.totalorder %s276, %s278
      %p282 = scmp.eq.s32.totalorder %s32, 0
      %p283 = por %p281, %p282
      %p284 = scmp.ne.s32.totalorder %s276, %s278
      %p285 = scmp.eq.s32.totalorder %s37, 1
      %p286 = por %p284, %p285
      %p287 = scmp.ne.s32.totalorder %s278, %s279
      %p288 = scmp.eq.s32.totalorder %s37, 0
      %p289 = por %p287, %p288
      %p290 = scmp.ne.s32.totalorder %s278, %s279
      %p291 = scmp.eq.s32.totalorder %s38, 1
      %p292 = por %p290, %p291
      %p294 = scmp.ne.s32.totalorder %s279, %s293
      %p295 = scmp.eq.s32.totalorder %s38, 0
      %p296 = por %p294, %p295
      %s298 = sadd.s32 %s297, 1
      %p301 = scmp.eq.s32.totalorder %s32, 1
      %p302 = scmp.ne.s32.totalorder %s297, %s299
      %p303 = scmp.eq.s32.totalorder %s32, 0
      %p304 = por %p302, %p303
      %p305 = scmp.ne.s32.totalorder %s297, %s299
      %p306 = scmp.eq.s32.totalorder %s37, 1
      %p307 = por %p305, %p306
      %p308 = scmp.ne.s32.totalorder %s299, %s300
      %p309 = scmp.eq.s32.totalorder %s37, 0
      %p310 = por %p308, %p309
      %p311 = scmp.ne.s32.totalorder %s299, %s300
      %p312 = scmp.eq.s32.totalorder %s38, 1
      %p313 = por %p311, %p312
      %p315 = scmp.ne.s32.totalorder %s300, %s314
      %p316 = scmp.eq.s32.totalorder %s38, 0
      %p317 = por %p315, %p316
      %s319 = sadd.s32 %s318, 1
      %p322 = scmp.eq.s32.totalorder %s32, 1
      %p323 = scmp.ne.s32.totalorder %s318, %s320
      %p324 = scmp.eq.s32.totalorder %s32, 0
      %p325 = por %p323, %p324
      %p326 = scmp.ne.s32.totalorder %s318, %s320
      %p327 = scmp.eq.s32.totalorder %s37, 1
      %p328 = por %p326, %p327
      %p329 = scmp.ne.s32.totalorder %s320, %s321
      %p330 = scmp.eq.s32.totalorder %s37, 0
      %p331 = por %p329, %p330
      %p332 = scmp.ne.s32.totalorder %s320, %s321
      %p333 = scmp.eq.s32.totalorder %s38, 1
      %p334 = por %p332, %p333
      %p336 = scmp.ne.s32.totalorder %s321, %s335
      %p337 = scmp.eq.s32.totalorder %s38, 0
      %p338 = por %p336, %p337
      %s340 = sadd.s32 %s339, 1
      %p343 = scmp.eq.s32.totalorder %s32, 1
      %p344 = scmp.ne.s32.totalorder %s339, %s341
      %p345 = scmp.eq.s32.totalorder %s32, 0
      %p346 = por %p344, %p345
      %p347 = scmp.ne.s32.totalorder %s339, %s341
      %p348 = scmp.eq.s32.totalorder %s37, 1
      %p349 = por %p347, %p348
      %p350 = scmp.ne.s32.totalorder %s341, %s342
      %p351 = scmp.eq.s32.totalorder %s37, 0
      %p352 = por %p350, %p351
      %p353 = scmp.ne.s32.totalorder %s341, %s342
      %p354 = scmp.eq.s32.totalorder %s38, 1
      %p355 = por %p353, %p354
      %p357 = scmp.ne.s32.totalorder %s342, %s356
      %p358 = scmp.eq.s32.totalorder %s38, 0
      %p359 = por %p357, %p358
      %s361 = sadd.s32 %s360, 1
      %p364 = scmp.eq.s32.totalorder %s32, 1
      %p365 = scmp.ne.s32.totalorder %s360, %s362
      %p366 = scmp.eq.s32.totalorder %s32, 0
      %p367 = por %p365, %p366
      %p368 = scmp.ne.s32.totalorder %s360, %s362
      %p369 = scmp.eq.s32.totalorder %s37, 1
      %p370 = por %p368, %p369
      %p371 = scmp.ne.s32.totalorder %s362, %s363
      %p372 = scmp.eq.s32.totalorder %s37, 0
      %p373 = por %p371, %p372
      %p374 = scmp.ne.s32.totalorder %s362, %s363
      %p375 = scmp.eq.s32.totalorder %s38, 1
      %p376 = por %p374, %p375
      %p378 = scmp.ne.s32.totalorder %s363, %s377
      %p379 = scmp.eq.s32.totalorder %s38, 0
      %p380 = por %p378, %p379
      %s381 = ssub.s32 %s32, %s39
      %p382 = scmp.eq.s32.totalorder %s381, 0
      %s384 = sadd.s32 %s383, 1
      %s385 = scalar_select %p382, %s383, %s384
      %p388 = pneg %p382
      %p389 = scmp.eq.s32.totalorder %s32, 1
      %p390 = por %p388, %p389
      %p391 = scmp.ne.s32.totalorder %s383, %s386
      %p392 = scmp.eq.s32.totalorder %s32, 0
      %p393 = por %p391, %p392
      %p394 = scmp.ne.s32.totalorder %s383, %s386
      %p395 = scmp.eq.s32.totalorder %s37, 1
      %p396 = por %p394, %p395
      %p397 = scmp.ne.s32.totalorder %s386, %s387
      %p398 = scmp.eq.s32.totalorder %s37, 0
      %p399 = por %p397, %p398
      %p400 = scmp.ne.s32.totalorder %s386, %s387
      %p401 = scmp.eq.s32.totalorder %s38, 1
      %p402 = por %p400, %p401
      %p404 = scmp.ne.s32.totalorder %s387, %s403
      %p405 = scmp.eq.s32.totalorder %s38, 0
      %p406 = por %p404, %p405
      %p407 = scmp.le.s32.totalorder 1, %s32
      %p408 = scmp.lt.s32.totalorder %s32, 3
      %p409 = pnand %p407, %p408
      %p410 = pneg %p409
      // Predicated region
      $region9: #{tpu_custom_call.1} parent=5 // pred_check
        _
      $region10: #{tpu_custom_call.1} parent=5 // pred_check_branch
        %412 = sbr.rel (%p409) target = $region12
      $region11: #{tpu_custom_call.1} parent=5 // pred_region
        %s413 = ssub.s32 %s32, 1
        // Predicated region
        $region13: #{tpu_custom_call.1} parent=11 // pred_check
          %p414 = pneg %p79
        $region14: #{tpu_custom_call.1} parent=11 // pred_check_branch
          %416 = sbr.rel (%p414) target = $region16
        $region15: #{tpu_custom_call.1} parent=11 // pred_region
          %s418 = ssub.s32 512, 512
          %419 = vsyncadd [#allocation6], %s418
          %s420 = sshll.u32 [#allocation5], 4
          %s421 = int_to_ptr.vmem [resolvable:$true] %s420
          %426 = dma.hbm_to_vmem [thread:$0]  %s1, 512, %s421, [#allocation6], 64, 64, 4
        $region16: #{tpu_custom_call.1} parent=11 // pred_fallthru
          _
        // Predicated region
        $region17: #{tpu_custom_call.1} parent=11 // pred_check
          %p427 = pneg %p100
        $region18: #{tpu_custom_call.1} parent=11 // pred_check_branch
          %429 = sbr.rel (%p427) target = $region20
        $region19: #{tpu_custom_call.1} parent=11 // pred_region
          %s431 = ssub.s32 16, 16
          %432 = vsyncadd [#allocation6], %s431
          %s434 = sshll.u32 [#allocation7], 4
          %s435 = int_to_ptr.vmem [resolvable:$true] %s434
          %437 = dma.hbm_to_vmem [thread:$0]  %s2, 16, %s435, [#allocation6]
        $region20: #{tpu_custom_call.1} parent=11 // pred_fallthru
          _
        // Predicated region
        $region21: #{tpu_custom_call.1} parent=11 // pred_check
          %p438 = pneg %p121
        $region22: #{tpu_custom_call.1} parent=11 // pred_check_branch
          %440 = sbr.rel (%p438) target = $region24
        $region23: #{tpu_custom_call.1} parent=11 // pred_region
          %s442 = ssub.s32 512, 512
          %443 = vsyncadd [#allocation9], %s442
          %s444 = sshll.u32 [#allocation8], 4
          %s445 = int_to_ptr.vmem [resolvable:$true] %s444
          %450 = dma.hbm_to_vmem [thread:$0]  %s3, 512, %s445, [#allocation9], 64, 64, 4
        $region24: #{tpu_custom_call.1} parent=11 // pred_fallthru
          _
        // Predicated region
        $region25: #{tpu_custom_call.1} parent=11 // pred_check
          %p451 = pneg %p142
        $region26: #{tpu_custom_call.1} parent=11 // pred_check_branch
          %453 = sbr.rel (%p451) target = $region28
        $region27: #{tpu_custom_call.1} parent=11 // pred_region
          %s455 = ssub.s32 512, 512
          %456 = vsyncadd [#allocation9], %s455
          %s457 = sshll.u32 [#allocation10], 4
          %s458 = int_to_ptr.vmem [resolvable:$true] %s457
          %463 = dma.hbm_to_vmem [thread:$0]  %s4, 512, %s458, [#allocation9], 64, 64, 4
        $region28: #{tpu_custom_call.1} parent=11 // pred_fallthru
          _
        // Predicated region
        $region29: #{tpu_custom_call.1} parent=11 // pred_check
          %p464 = pneg %p163
        $region30: #{tpu_custom_call.1} parent=11 // pred_check_branch
          %466 = sbr.rel (%p464) target = $region32
        $region31: #{tpu_custom_call.1} parent=11 // pred_region
          %s468 = ssub.s32 512, 512
          %469 = vsyncadd [#allocation12], %s468
          %s470 = sshll.u32 [#allocation11], 4
          %s471 = int_to_ptr.vmem [resolvable:$true] %s470
          %476 = dma.hbm_to_vmem [thread:$0]  %s5, 512, %s471, [#allocation12], 64, 64, 4
        $region32: #{tpu_custom_call.1} parent=11 // pred_fallthru
          _
        // Predicated region
        $region33: #{tpu_custom_call.1} parent=11 // pred_check
          %p477 = pneg %p184
        $region34: #{tpu_custom_call.1} parent=11 // pred_check_branch
          %479 = sbr.rel (%p477) target = $region36
        $region35: #{tpu_custom_call.1} parent=11 // pred_region
          %s481 = ssub.s32 2048, 2048
          %482 = vsyncadd [#allocation12], %s481
          %s483 = sshll.u32 [#allocation13], 4
          %s484 = int_to_ptr.vmem [resolvable:$true] %s483
          %489 = dma.hbm_to_vmem [thread:$0]  %s6, 2048, %s484, [#allocation12], 64, 64, 4
        $region36: #{tpu_custom_call.1} parent=11 // pred_fallthru
          _
        // Predicated region
        $region37: #{tpu_custom_call.1} parent=11 // pred_check
          %p490 = pneg %p205
        $region38: #{tpu_custom_call.1} parent=11 // pred_check_branch
          %492 = sbr.rel (%p490) target = $region40
        $region39: #{tpu_custom_call.1} parent=11 // pred_region
          _
        $region40: #{tpu_custom_call.1} parent=11 // pred_fallthru
          _
        // Predicated region
        $region41: #{tpu_custom_call.1} parent=11 // pred_check
          %p493 = pneg %p226
        $region42: #{tpu_custom_call.1} parent=11 // pred_check_branch
          %495 = sbr.rel (%p493) target = $region44
        $region43: #{tpu_custom_call.1} parent=11 // pred_region
          _
        $region44: #{tpu_custom_call.1} parent=11 // pred_fallthru
          _
        // Predicated region
        $region45: #{tpu_custom_call.1} parent=11 // pred_check
          %p496 = pneg %p247
        $region46: #{tpu_custom_call.1} parent=11 // pred_check_branch
          %498 = sbr.rel (%p496) target = $region48
        $region47: #{tpu_custom_call.1} parent=11 // pred_region
          _
        $region48: #{tpu_custom_call.1} parent=11 // pred_fallthru
          _
        // Predicated region
        $region49: #{tpu_custom_call.1} parent=11 // pred_check
          %p499 = pneg %p268
        $region50: #{tpu_custom_call.1} parent=11 // pred_check_branch
          %501 = sbr.rel (%p499) target = $region52
        $region51: #{tpu_custom_call.1} parent=11 // pred_region
          _
        $region52: #{tpu_custom_call.1} parent=11 // pred_fallthru
          _
        // Predicated region
        $region53: #{tpu_custom_call.1} parent=11 // pred_check
          %p502 = pneg %p289
        $region54: #{tpu_custom_call.1} parent=11 // pred_check_branch
          %504 = sbr.rel (%p502) target = $region56
        $region55: #{tpu_custom_call.1} parent=11 // pred_region
          _
        $region56: #{tpu_custom_call.1} parent=11 // pred_fallthru
          _
        // Predicated region
        $region57: #{tpu_custom_call.1} parent=11 // pred_check
          %p505 = pneg %p310
        $region58: #{tpu_custom_call.1} parent=11 // pred_check_branch
          %507 = sbr.rel (%p505) target = $region60
        $region59: #{tpu_custom_call.1} parent=11 // pred_region
          %s509 = ssub.s32 4096, 4096
          %510 = vsyncadd [#allocation15], %s509
          %s511 = sshll.u32 [#allocation14], 4
          %s512 = int_to_ptr.vmem [resolvable:$true] %s511
          %517 = dma.hbm_to_vmem [thread:$0]  %s12, 4096, %s512, [#allocation15], 128, 128, 8
        $region60: #{tpu_custom_call.1} parent=11 // pred_fallthru
          _
        // Predicated region
        $region61: #{tpu_custom_call.1} parent=11 // pred_check
          %p518 = pneg %p331
        $region62: #{tpu_custom_call.1} parent=11 // pred_check_branch
          %520 = sbr.rel (%p518) target = $region64
        $region63: #{tpu_custom_call.1} parent=11 // pred_region
          _
        $region64: #{tpu_custom_call.1} parent=11 // pred_fallthru
          _
        // Predicated region
        $region65: #{tpu_custom_call.1} parent=11 // pred_check
          %p521 = pneg %p352
        $region66: #{tpu_custom_call.1} parent=11 // pred_check_branch
          %523 = sbr.rel (%p521) target = $region68
        $region67: #{tpu_custom_call.1} parent=11 // pred_region
          %s525 = ssub.s32 4096, 4096
          %526 = vsyncadd [#allocation15], %s525
          %s527 = sshll.u32 [#allocation16], 4
          %s528 = int_to_ptr.vmem [resolvable:$true] %s527
          %533 = dma.hbm_to_vmem [thread:$0]  %s14, 4096, %s528, [#allocation15], 64, 64, 4
        $region68: #{tpu_custom_call.1} parent=11 // pred_fallthru
          _
        // Predicated region
        $region69: #{tpu_custom_call.1} parent=11 // pred_check
          %p534 = pneg %p373
        $region70: #{tpu_custom_call.1} parent=11 // pred_check_branch
          %536 = sbr.rel (%p534) target = $region72
        $region71: #{tpu_custom_call.1} parent=11 // pred_region
          _
        $region72: #{tpu_custom_call.1} parent=11 // pred_fallthru
          _
      $region12: #{tpu_custom_call.1} parent=5 // pred_fallthru
        _
      %p537 = scmp.lt.s32.totalorder %s32, 2
      // Predicated region
      $region73: #{tpu_custom_call.1} parent=5 // pred_check
        %p538 = pneg %p537
      $region74: #{tpu_custom_call.1} parent=5 // pred_check_branch
        %540 = sbr.rel (%p538) target = $region76
      $region75: #{tpu_custom_call.1} parent=5 // pred_region
        // Predicated region
        $region77: #{tpu_custom_call.1} parent=75 // pred_check
          %p541 = pneg %p52
        $region78: #{tpu_custom_call.1} parent=75 // pred_check_branch
          %543 = sbr.rel (%p541) target = $region80
        $region79: #{tpu_custom_call.1} parent=75 // pred_region
          %s544 = sand.u32 %s42, 1
          %s545 = scalar_lea.sflag [#allocation3], %s544
          %s546 = sand.u32 %s42, 1
          %s547 = smul.addr %s546, 8
          %s548 = scalar_lea.vmem [#allocation2], %s547
          %s550 = ssub.s32 128, 128
          %551 = vsyncadd %s545, %s550
          %s552 = smul.addr %s32, 128
          %s553 = scalar_lea.hbm %s0, %s552
          %s555 = sshll.u32 %s548, 4
          %s556 = int_to_ptr.vmem [resolvable:$true] %s555
          %558 = dma.hbm_to_vmem [thread:$0]  %s553, 128, %s556, %s545
        $region80: #{tpu_custom_call.1} parent=75 // pred_fallthru
          _
      $region76: #{tpu_custom_call.1} parent=5 // pred_fallthru
        _
      %p559 = scmp.le.s32.totalorder 1, %s32
      %p560 = scmp.lt.s32.totalorder %s32, 3
      %p561 = pnand %p559, %p560
      %p562 = pneg %p561
      // Predicated region
      $region81: #{tpu_custom_call.1} parent=5 // pred_check
        _
      $region82: #{tpu_custom_call.1} parent=5 // pred_check_branch
        %564 = sbr.rel (%p561) target = $region84
      $region83: #{tpu_custom_call.1} parent=5 // pred_region
        %s565 = ssub.s32 %s32, 1
        %s566 = sand.u32 %s45, 1
        %s567 = scalar_lea.sflag [#allocation3], %s566
        %s568 = sand.u32 %s45, 1
        %s569 = smul.addr %s568, 8
        %s570 = scalar_lea.vmem [#allocation2], %s569
        // Predicated region
        $region85: #{tpu_custom_call.1} parent=83 // pred_check
          %p571 = pneg %p58
        $region86: #{tpu_custom_call.1} parent=83 // pred_check_branch
          %573 = sbr.rel (%p571) target = $region88
        $region87: #{tpu_custom_call.1} parent=83 // pred_region
          %574 = dma.done %s567, 128
        $region88: #{tpu_custom_call.1} parent=83 // pred_fallthru
          _
        // Predicated region
        $region89: #{tpu_custom_call.1} parent=83 // pred_check
          %p575 = pneg %p79
        $region90: #{tpu_custom_call.1} parent=83 // pred_check_branch
          %577 = sbr.rel (%p575) target = $region92
        $region91: #{tpu_custom_call.1} parent=83 // pred_region
          %578 = dma.done [#allocation6], 512
        $region92: #{tpu_custom_call.1} parent=83 // pred_fallthru
          _
        // Predicated region
        $region93: #{tpu_custom_call.1} parent=83 // pred_check
          %p579 = pneg %p100
        $region94: #{tpu_custom_call.1} parent=83 // pred_check_branch
          %581 = sbr.rel (%p579) target = $region96
        $region95: #{tpu_custom_call.1} parent=83 // pred_region
          %582 = dma.done [#allocation6], 16
        $region96: #{tpu_custom_call.1} parent=83 // pred_fallthru
          _
        // Predicated region
        $region97: #{tpu_custom_call.1} parent=83 // pred_check
          %p583 = pneg %p121
        $region98: #{tpu_custom_call.1} parent=83 // pred_check_branch
          %585 = sbr.rel (%p583) target = $region100
        $region99: #{tpu_custom_call.1} parent=83 // pred_region
          %586 = dma.done [#allocation9], 512
        $region100: #{tpu_custom_call.1} parent=83 // pred_fallthru
          _
        // Predicated region
        $region101: #{tpu_custom_call.1} parent=83 // pred_check
          %p587 = pneg %p142
        $region102: #{tpu_custom_call.1} parent=83 // pred_check_branch
          %589 = sbr.rel (%p587) target = $region104
        $region103: #{tpu_custom_call.1} parent=83 // pred_region
          %590 = dma.done [#allocation9], 512
        $region104: #{tpu_custom_call.1} parent=83 // pred_fallthru
          _
        // Predicated region
        $region105: #{tpu_custom_call.1} parent=83 // pred_check
          %p591 = pneg %p163
        $region106: #{tpu_custom_call.1} parent=83 // pred_check_branch
          %593 = sbr.rel (%p591) target = $region108
        $region107: #{tpu_custom_call.1} parent=83 // pred_region
          %594 = dma.done [#allocation12], 512
        $region108: #{tpu_custom_call.1} parent=83 // pred_fallthru
          _
        // Predicated region
        $region109: #{tpu_custom_call.1} parent=83 // pred_check
          %p595 = pneg %p184
        $region110: #{tpu_custom_call.1} parent=83 // pred_check_branch
          %597 = sbr.rel (%p595) target = $region112
        $region111: #{tpu_custom_call.1} parent=83 // pred_region
          %598 = dma.done [#allocation12], 2048
        $region112: #{tpu_custom_call.1} parent=83 // pred_fallthru
          _
        // Predicated region
        $region113: #{tpu_custom_call.1} parent=83 // pred_check
          %p599 = pneg %p310
        $region114: #{tpu_custom_call.1} parent=83 // pred_check_branch
          %601 = sbr.rel (%p599) target = $region116
        $region115: #{tpu_custom_call.1} parent=83 // pred_region
          %602 = dma.done [#allocation15], 4096
        $region116: #{tpu_custom_call.1} parent=83 // pred_fallthru
          _
        // Predicated region
        $region117: #{tpu_custom_call.1} parent=83 // pred_check
          %p603 = pneg %p352
        $region118: #{tpu_custom_call.1} parent=83 // pred_check_branch
          %605 = sbr.rel (%p603) target = $region120
        $region119: #{tpu_custom_call.1} parent=83 // pred_region
          %606 = dma.done [#allocation15], 4096
        $region120: #{tpu_custom_call.1} parent=83 // pred_fallthru
          _
        %s607 = sand.u32 %s45, 1
        %s608 = scalar_lea.sflag [#allocation3], %s607
        %s609 = sand.u32 %s45, 1
        %s610 = smul.addr %s609, 8
        %s611 = scalar_lea.vmem [#allocation2], %s610
        %p612 = pneg %p58
        %p613 = pneg %p55
        %p614 = pneg %p79
        %p615 = pneg %p76
        %p616 = pneg %p100
        %p617 = pneg %p97
        %p618 = pneg %p121
        %p619 = pneg %p118
        %p620 = pneg %p142
        %p621 = pneg %p139
        %p622 = pneg %p163
        %p623 = pneg %p160
        %p624 = pneg %p184
        %p625 = pneg %p181
        %p626 = pneg %p205
        %p627 = pneg %p202
        %p628 = pneg %p226
        %p629 = pneg %p223
        %p630 = pneg %p247
        %p631 = pneg %p244
        %p632 = pneg %p268
        %p633 = pneg %p265
        %p634 = pneg %p289
        %p635 = pneg %p286
        %p636 = pneg %p310
        %p637 = pneg %p307
        %p638 = pneg %p331
        %p639 = pneg %p328
        %p640 = pneg %p352
        %p641 = pneg %p349
        %p642 = pneg %p373
        %p643 = pneg %p370
        %p644 = pneg %p399
        %p645 = pneg %p396
        %s646 = sand.u32 %s386, 1
        %s647 = scalar_lea.sflag [#allocation4], %s646
        %s648 = sand.u32 %s386, 1
        %s649 = smul.addr %s648, 8
        %s650 = scalar_lea.vmem [#allocation17], %s649
        %v652 = vld [vmem:[%s570] sm:$0xff]
        %v653 = vpack.c.bf16 %v652, %v652
        %v654 = vld [vmem:[#allocation5] sm:$0xf]
        %v655 = vld [vmem:[#allocation5 + $0x4] sm:$0xf]
        %v656 = vld [vmem:[#allocation5 + $0x8] sm:$0xf]
        %v657 = vld [vmem:[#allocation5 + $0xc] sm:$0xf]
        %v658 = vld [vmem:[#allocation5 + $0x10] sm:$0xf]
        %v659 = vld [vmem:[#allocation5 + $0x14] sm:$0xf]
        %v660 = vld [vmem:[#allocation5 + $0x18] sm:$0xf]
        %v661 = vld [vmem:[#allocation5 + $0x1c] sm:$0xf]
        %v662 = vld [vmem:[#allocation7] sm:$0x1]
        %v664 = vlaneseq
        %v665 = vshrl.u32 %v664, 7
        %v666 = vsub.s32 0, %v665
        %v667 = vrot.slane %v662, %v666
        %v677 = vunpack.c.l.b16 %v654
        %v678 = vunpack.c.l.b16 %v655
        %v679 = vunpack.c.l.b16 %v656
        %v680 = vunpack.c.l.b16 %v657
        %v681 = vunpack.c.l.b16 %v658
        %v682 = vunpack.c.l.b16 %v659
        %v683 = vunpack.c.l.b16 %v660
        %v684 = vunpack.c.l.b16 %v661
        %v685 = vpack.c.b16 %v678, %v677
        %v686 = vpack.c.b16 %v680, %v679
        %v687 = vpack.c.b16 %v682, %v681
        %v688 = vpack.c.b16 %v684, %v683
        %vm693 = vcmask 523264
        %v695 = vsel %vm693, %v653, 0
        %697 = vmatprep.subr.bf16.mxu0 0
        %698 = vmatpush1.bf16.msra.mxu0 0
        %699 = vmatprep.subr.bf16.mxu0 0
        %700 = vmatpush1.bf16.msra.mxu0 0
        %701 = vmatprep.subr.bf16.mxu0 0
        %702 = vmatpush1.bf16.msra.mxu0 0
        %703 = vmatprep.subr.bf16.mxu0 0
        %704 = vmatpush1.bf16.msra.mxu0 0
        %705 = vmatprep.subr.bf16.mxu0 0
        %706 = vmatpush1.bf16.msra.mxu0 %v688
        %707 = vmatprep.subr.bf16.mxu0 0
        %708 = vmatpush1.bf16.msra.mxu0 %v687
        %709 = vmatprep.subr.bf16.mxu0 0
        %710 = vmatpush1.bf16.msra.mxu0 %v686
        %711 = vmatprep.subr.bf16.mxu0 0
        %712 = vmatpush1.bf16.msra.mxu0 %v685
        %713 = vmatprep.subr.bf16.mxu0 0
        %714 = vmatpush2.bf16.msra.mxu0 0
        %715 = vmatprep.subr.bf16.mxu0 0
        %716 = vmatpush2.bf16.msra.mxu0 0
        %717 = vmatprep.subr.bf16.mxu0 0
        %718 = vmatpush2.bf16.msra.mxu0 0
        %719 = vmatprep.subr.bf16.mxu0 0
        %720 = vmatpush2.bf16.msra.mxu0 0
        %721 = vmatprep.subr.bf16.mxu0 0
        %722 = vmatpush2.bf16.msra.mxu0 0
        %723 = vmatprep.subr.bf16.mxu0 0
        %724 = vmatpush2.bf16.msra.mxu0 0
        %725 = vmatprep.subr.bf16.mxu0 0
        %726 = vmatpush2.bf16.msra.mxu0 0
        %727 = vmatprep.subr.bf16.mxu0 0
        %728 = vmatpush2.bf16.msra.mxu0 0
        %729 = vmatprep.mubr.bf16.mxu0 0
        %730 = vmatmul.mubr.bf16.gmra.mxu0 %v695
        %v731 = vpop.f32.mrf.mxu0
        %v732 = vadd.f32 %v667, %v731
        %v733 = vpop.f32.mrf.mxu0
        %v734 = vpop.f32.mrf.mxu0
        %v735 = vpop.f32.mrf.mxu0
        %736 = vdwg.mxu0
        %v737 = vpack.c.bf16 %v732, %v732
        %v738 = vld [vmem:[#allocation8] sm:$0xf]
        %v739 = vld [vmem:[#allocation8 + $0x4] sm:$0xf]
        %v740 = vld [vmem:[#allocation8 + $0x8] sm:$0xf]
        %v741 = vld [vmem:[#allocation8 + $0xc] sm:$0xf]
        %v742 = vld [vmem:[#allocation10] sm:$0xf]
        %v743 = vld [vmem:[#allocation10 + $0x4] sm:$0xf]
        %v744 = vld [vmem:[#allocation10 + $0x8] sm:$0xf]
        %v745 = vld [vmem:[#allocation10 + $0xc] sm:$0xf]
        %v746 = vld [vmem:[#allocation11] sm:$0xf]
        %v747 = vld [vmem:[#allocation11 + $0x4] sm:$0xf]
        %v748 = vld [vmem:[#allocation11 + $0x8] sm:$0xf]
        %v749 = vld [vmem:[#allocation11 + $0xc] sm:$0xf]
        %v750 = vld [vmem:[#allocation13] sm:$0xf]
        %v751 = vld [vmem:[#allocation13 + $0x4] sm:$0xf]
        %v752 = vld [vmem:[#allocation13 + $0x8] sm:$0xf]
        %v753 = vld [vmem:[#allocation13 + $0xc] sm:$0xf]
        %v754 = vld [vmem:[#allocation13 + $0x10] sm:$0xf]
        %v755 = vld [vmem:[#allocation13 + $0x14] sm:$0xf]
        %v756 = vld [vmem:[#allocation13 + $0x18] sm:$0xf]
        %v757 = vld [vmem:[#allocation13 + $0x1c] sm:$0xf]
        %v758 = vld [vmem:[#allocation13 + $0x20] sm:$0xf]
        %v759 = vld [vmem:[#allocation13 + $0x24] sm:$0xf]
        %v760 = vld [vmem:[#allocation13 + $0x28] sm:$0xf]
        %v761 = vld [vmem:[#allocation13 + $0x2c] sm:$0xf]
        %v762 = vld [vmem:[#allocation13 + $0x30] sm:$0xf]
        %v763 = vld [vmem:[#allocation13 + $0x34] sm:$0xf]
        %v764 = vld [vmem:[#allocation13 + $0x38] sm:$0xf]
        %v765 = vld [vmem:[#allocation13 + $0x3c] sm:$0xf]
        %v770 = vunpack.c.l.b16 %v738
        %v771 = vunpack.c.l.b16 %v739
        %v772 = vunpack.c.l.b16 %v740
        %v773 = vunpack.c.l.b16 %v741
        %v774 = vpack.c.b16 %v771, %v770
        %v775 = vpack.c.b16 %v773, %v772
        %vm778 = vcmask 261120
        %v780 = vsel %vm778, %v737, 0
        %782 = vmatprep.subr.bf16.mxu0 0
        %783 = vmatpush1.bf16.msra.mxu0 0
        %784 = vmatprep.subr.bf16.mxu0 0
        %785 = vmatpush1.bf16.msra.mxu0 0
        %786 = vmatprep.subr.bf16.mxu0 0
        %787 = vmatpush1.bf16.msra.mxu0 0
        %788 = vmatprep.subr.bf16.mxu0 0
        %789 = vmatpush1.bf16.msra.mxu0 0
        %790 = vmatprep.subr.bf16.mxu0 0
        %791 = vmatpush1.bf16.msra.mxu0 0
        %792 = vmatprep.subr.bf16.mxu0 0
        %793 = vmatpush1.bf16.msra.mxu0 0
        %794 = vmatprep.subr.bf16.mxu0 0
        %795 = vmatpush1.bf16.msra.mxu0 %v775
        %796 = vmatprep.subr.bf16.mxu0 0
        %797 = vmatpush1.bf16.msra.mxu0 %v774
        %798 = vmatprep.subr.bf16.mxu0 0
        %799 = vmatpush2.bf16.msra.mxu0 0
        %800 = vmatprep.subr.bf16.mxu0 0
        %801 = vmatpush2.bf16.msra.mxu0 0
        %802 = vmatprep.subr.bf16.mxu0 0
        %803 = vmatpush2.bf16.msra.mxu0 0
        %804 = vmatprep.subr.bf16.mxu0 0
        %805 = vmatpush2.bf16.msra.mxu0 0
        %806 = vmatprep.subr.bf16.mxu0 0
        %807 = vmatpush2.bf16.msra.mxu0 0
        %808 = vmatprep.subr.bf16.mxu0 0
        %809 = vmatpush2.bf16.msra.mxu0 0
        %810 = vmatprep.subr.bf16.mxu0 0
        %811 = vmatpush2.bf16.msra.mxu0 0
        %812 = vmatprep.subr.bf16.mxu0 0
        %813 = vmatpush2.bf16.msra.mxu0 0
        %814 = vmatprep.mubr.bf16.mxu0 0
        %815 = vmatmul.mubr.bf16.gmra.mxu0 %v780
        %v816 = vpop.f32.mrf.mxu0
        %v817 = vadd.f32 0.0, %v816
        %v818 = vpop.f32.mrf.mxu0
        %v819 = vpop.f32.mrf.mxu0
        %v820 = vpop.f32.mrf.mxu0
        %821 = vdwg.mxu0
        %v826 = vunpack.c.l.b16 %v742
        %v827 = vunpack.c.l.b16 %v743
        %v828 = vunpack.c.l.b16 %v744
        %v829 = vunpack.c.l.b16 %v745
        %v830 = vpack.c.b16 %v827, %v826
        %v831 = vpack.c.b16 %v829, %v828
        %834 = vmatprep.subr.bf16.mxu0 0
        %835 = vmatpush1.bf16.msra.mxu0 0
        %836 = vmatprep.subr.bf16.mxu0 0
        %837 = vmatpush1.bf16.msra.mxu0 0
        %838 = vmatprep.subr.bf16.mxu0 0
        %839 = vmatpush1.bf16.msra.mxu0 0
        %840 = vmatprep.subr.bf16.mxu0 0
        %841 = vmatpush1.bf16.msra.mxu0 0
        %842 = vmatprep.subr.bf16.mxu0 0
        %843 = vmatpush1.bf16.msra.mxu0 0
        %844 = vmatprep.subr.bf16.mxu0 0
        %845 = vmatpush1.bf16.msra.mxu0 0
        %846 = vmatprep.subr.bf16.mxu0 0
        %847 = vmatpush1.bf16.msra.mxu0 %v831
        %848 = vmatprep.subr.bf16.mxu0 0
        %849 = vmatpush1.bf16.msra.mxu0 %v830
        %850 = vmatprep.subr.bf16.mxu0 0
        %851 = vmatpush2.bf16.msra.mxu0 0
        %852 = vmatprep.subr.bf16.mxu0 0
        %853 = vmatpush2.bf16.msra.mxu0 0
        %854 = vmatprep.subr.bf16.mxu0 0
        %855 = vmatpush2.bf16.msra.mxu0 0
        %856 = vmatprep.subr.bf16.mxu0 0
        %857 = vmatpush2.bf16.msra.mxu0 0
        %858 = vmatprep.subr.bf16.mxu0 0
        %859 = vmatpush2.bf16.msra.mxu0 0
        %860 = vmatprep.subr.bf16.mxu0 0
        %861 = vmatpush2.bf16.msra.mxu0 0
        %862 = vmatprep.subr.bf16.mxu0 0
        %863 = vmatpush2.bf16.msra.mxu0 0
        %864 = vmatprep.subr.bf16.mxu0 0
        %865 = vmatpush2.bf16.msra.mxu0 0
        %866 = vmatprep.mubr.bf16.mxu0 0
        %867 = vmatmul.mubr.bf16.gmra.mxu0 %v780
        %v868 = vpop.f32.mrf.mxu0
        %v869 = vadd.f32 0.0, %v868
        %v870 = vpop.f32.mrf.mxu0
        %v871 = vpop.f32.mrf.mxu0
        %v872 = vpop.f32.mrf.mxu0
        %873 = vdwg.mxu0
        %v878 = vunpack.c.l.b16 %v746
        %v879 = vunpack.c.l.b16 %v747
        %v880 = vunpack.c.l.b16 %v748
        %v881 = vunpack.c.l.b16 %v749
        %v882 = vpack.c.b16 %v879, %v878
        %v883 = vpack.c.b16 %v881, %v880
        %886 = vmatprep.subr.bf16.mxu0 0
        %887 = vmatpush1.bf16.msra.mxu0 0
        %888 = vmatprep.subr.bf16.mxu0 0
        %889 = vmatpush1.bf16.msra.mxu0 0
        %890 = vmatprep.subr.bf16.mxu0 0
        %891 = vmatpush1.bf16.msra.mxu0 0
        %892 = vmatprep.subr.bf16.mxu0 0
        %893 = vmatpush1.bf16.msra.mxu0 0
        %894 = vmatprep.subr.bf16.mxu0 0
        %895 = vmatpush1.bf16.msra.mxu0 0
        %896 = vmatprep.subr.bf16.mxu0 0
        %897 = vmatpush1.bf16.msra.mxu0 0
        %898 = vmatprep.subr.bf16.mxu0 0
        %899 = vmatpush1.bf16.msra.mxu0 %v883
        %900 = vmatprep.subr.bf16.mxu0 0
        %901 = vmatpush1.bf16.msra.mxu0 %v882
        %902 = vmatprep.subr.bf16.mxu0 0
        %903 = vmatpush2.bf16.msra.mxu0 0
        %904 = vmatprep.subr.bf16.mxu0 0
        %905 = vmatpush2.bf16.msra.mxu0 0
        %906 = vmatprep.subr.bf16.mxu0 0
        %907 = vmatpush2.bf16.msra.mxu0 0
        %908 = vmatprep.subr.bf16.mxu0 0
        %909 = vmatpush2.bf16.msra.mxu0 0
        %910 = vmatprep.subr.bf16.mxu0 0
        %911 = vmatpush2.bf16.msra.mxu0 0
        %912 = vmatprep.subr.bf16.mxu0 0
        %913 = vmatpush2.bf16.msra.mxu0 0
        %914 = vmatprep.subr.bf16.mxu0 0
        %915 = vmatpush2.bf16.msra.mxu0 0
        %916 = vmatprep.subr.bf16.mxu0 0
        %917 = vmatpush2.bf16.msra.mxu0 0
        %918 = vmatprep.mubr.bf16.mxu0 0
        %919 = vmatmul.mubr.bf16.gmra.mxu0 %v780
        %v920 = vpop.f32.mrf.mxu0
        %v921 = vadd.f32 0.0, %v920
        %v922 = vpop.f32.mrf.mxu0
        %v923 = vpop.f32.mrf.mxu0
        %v924 = vpop.f32.mrf.mxu0
        %925 = vdwg.mxu0
        %v926 = vpack.c.bf16 %v817, %v817
        %v927 = vpack.c.bf16 %v869, %v869
        %v929 = vsel %vm778, %v926, 0
        %v932 = vsel %vm778, %v927, 0
        %934 = vmatprep.subr.bf16.mxu0 0
        %935 = vmatpush1.bf16.xpose.msra.mxu0 0
        %936 = vmatprep.subr.bf16.mxu0 0
        %937 = vmatpush1.bf16.xpose.msra.mxu0 0
        %938 = vmatprep.subr.bf16.mxu0 0
        %939 = vmatpush1.bf16.xpose.msra.mxu0 0
        %940 = vmatprep.subr.bf16.mxu0 0
        %941 = vmatpush1.bf16.xpose.msra.mxu0 0
        %942 = vmatprep.subr.bf16.mxu0 0
        %943 = vmatpush1.bf16.xpose.msra.mxu0 0
        %944 = vmatprep.subr.bf16.mxu0 0
        %945 = vmatpush1.bf16.xpose.msra.mxu0 0
        %946 = vmatprep.subr.bf16.mxu0 0
        %947 = vmatpush1.bf16.xpose.msra.mxu0 0
        %948 = vmatprep.subr.bf16.mxu0 0
        %949 = vmatpush1.bf16.xpose.msra.mxu0 %v932
        %950 = vmatprep.subr.bf16.mxu0 0
        %951 = vmatpush2.bf16.xpose.msra.mxu0 0
        %952 = vmatprep.subr.bf16.mxu0 0
        %953 = vmatpush2.bf16.xpose.msra.mxu0 0
        %954 = vmatprep.subr.bf16.mxu0 0
        %955 = vmatpush2.bf16.xpose.msra.mxu0 0
        %956 = vmatprep.subr.bf16.mxu0 0
        %957 = vmatpush2.bf16.xpose.msra.mxu0 0
        %958 = vmatprep.subr.bf16.mxu0 0
        %959 = vmatpush2.bf16.xpose.msra.mxu0 0
        %960 = vmatprep.subr.bf16.mxu0 0
        %961 = vmatpush2.bf16.xpose.msra.mxu0 0
        %962 = vmatprep.subr.bf16.mxu0 0
        %963 = vmatpush2.bf16.xpose.msra.mxu0 0
        %964 = vmatprep.subr.bf16.mxu0 0
        %965 = vmatpush2.bf16.xpose.msra.mxu0 0
        %966 = vmatprep.mubr.bf16.mxu0 0
        %967 = vmatmul.mubr.bf16.gmra.mxu0 %v929
        %v968 = vpop.f32.mrf.mxu0
        %v969 = vadd.f32 0.0, %v968
        %v970 = vpop.f32.mrf.mxu0
        %v971 = vpop.f32.mrf.mxu0
        %v972 = vpop.f32.mrf.mxu0
        %973 = vdwg.mxu0
        %v974 = vmul.f32 %v969, 0.17677669
        %vm975 = vcmask 64512
        %v976 = vsel %vm975, %v974, -inf
        %977 = vmax.xlane.f32.xlu0 %v976
        %v978 = vpop.xlane.xlu0 %977
        %v979 = vsub.f32 %v974, %v978
        %v980 = vmul.f32 %v979, 1.442695
        %v981 = vpow.pop %v980
        %v982 = vsel %vm975, %v981, 0.0
        %983 = vadd.xlane.f32.xlu0 %v982
        %v984 = vpop.xlane.xlu0 %983
        %v985 = vrcp.pop %v984
        %v986 = vmul.f32 %v981, %v985
        %v987 = vpack.c.bf16 %v986, %v986
        %v988 = vpack.c.bf16 %v921, %v921
        %v990 = vsel %vm975, %v987, 0
        %vm992 = vcmask 1043456
        %v994 = vsel %vm992, %v988, 0
        %996 = vmatprep.subr.bf16.mxu0 0
        %997 = vmatpush1.bf16.msra.mxu0 0
        %998 = vmatprep.subr.bf16.mxu0 0
        %999 = vmatpush1.bf16.msra.mxu0 0
        %1000 = vmatprep.subr.bf16.mxu0 0
        %1001 = vmatpush1.bf16.msra.mxu0 0
        %1002 = vmatprep.subr.bf16.mxu0 0
        %1003 = vmatpush1.bf16.msra.mxu0 0
        %1004 = vmatprep.subr.bf16.mxu0 0
        %1005 = vmatpush1.bf16.msra.mxu0 0
        %1006 = vmatprep.subr.bf16.mxu0 0
        %1007 = vmatpush1.bf16.msra.mxu0 0
        %1008 = vmatprep.subr.bf16.mxu0 0
        %1009 = vmatpush1.bf16.msra.mxu0 0
        %1010 = vmatprep.subr.bf16.mxu0 0
        %1011 = vmatpush1.bf16.msra.mxu0 %v994
        %1012 = vmatprep.subr.bf16.mxu0 0
        %1013 = vmatpush2.bf16.msra.mxu0 0
        %1014 = vmatprep.subr.bf16.mxu0 0
        %1015 = vmatpush2.bf16.msra.mxu0 0
        %1016 = vmatprep.subr.bf16.mxu0 0
        %1017 = vmatpush2.bf16.msra.mxu0 0
        %1018 = vmatprep.subr.bf16.mxu0 0
        %1019 = vmatpush2.bf16.msra.mxu0 0
        %1020 = vmatprep.subr.bf16.mxu0 0
        %1021 = vmatpush2.bf16.msra.mxu0 0
        %1022 = vmatprep.subr.bf16.mxu0 0
        %1023 = vmatpush2.bf16.msra.mxu0 0
        %1024 = vmatprep.subr.bf16.mxu0 0
        %1025 = vmatpush2.bf16.msra.mxu0 0
        %1026 = vmatprep.subr.bf16.mxu0 0
        %1027 = vmatpush2.bf16.msra.mxu0 0
        %1028 = vmatprep.mubr.bf16.mxu0 0
        %1029 = vmatmul.mubr.bf16.gmra.mxu0 %v990
        %v1030 = vpop.f32.mrf.mxu0
        %v1031 = vadd.f32 0.0, %v1030
        %v1032 = vpop.f32.mrf.mxu0
        %v1033 = vpop.f32.mrf.mxu0
        %v1034 = vpop.f32.mrf.mxu0
        %1035 = vdwg.mxu0
        %v1036 = vpack.c.bf16 %v1031, %v1031
        %1038 = vrot.lane.b32.xlu0 %v737, 96
        %v1039 = vpop.permute.xlu0 %1038
        %v1041 = vsel %vm778, %v1039, 0
        %1043 = vmatprep.subr.bf16.mxu0 0
        %1044 = vmatpush1.bf16.msra.mxu0 0
        %1045 = vmatprep.subr.bf16.mxu0 0
        %1046 = vmatpush1.bf16.msra.mxu0 0
        %1047 = vmatprep.subr.bf16.mxu0 0
        %1048 = vmatpush1.bf16.msra.mxu0 0
        %1049 = vmatprep.subr.bf16.mxu0 0
        %1050 = vmatpush1.bf16.msra.mxu0 0
        %1051 = vmatprep.subr.bf16.mxu0 0
        %1052 = vmatpush1.bf16.msra.mxu0 0
        %1053 = vmatprep.subr.bf16.mxu0 0
        %1054 = vmatpush1.bf16.msra.mxu0 0
        %1055 = vmatprep.subr.bf16.mxu0 0
        %1056 = vmatpush1.bf16.msra.mxu0 %v775
        %1057 = vmatprep.subr.bf16.mxu0 0
        %1058 = vmatpush1.bf16.msra.mxu0 %v774
        %1059 = vmatprep.subr.bf16.mxu0 0
        %1060 = vmatpush2.bf16.msra.mxu0 0
        %1061 = vmatprep.subr.bf16.mxu0 0
        %1062 = vmatpush2.bf16.msra.mxu0 0
        %1063 = vmatprep.subr.bf16.mxu0 0
        %1064 = vmatpush2.bf16.msra.mxu0 0
        %1065 = vmatprep.subr.bf16.mxu0 0
        %1066 = vmatpush2.bf16.msra.mxu0 0
        %1067 = vmatprep.subr.bf16.mxu0 0
        %1068 = vmatpush2.bf16.msra.mxu0 0
        %1069 = vmatprep.subr.bf16.mxu0 0
        %1070 = vmatpush2.bf16.msra.mxu0 0
        %1071 = vmatprep.subr.bf16.mxu0 0
        %1072 = vmatpush2.bf16.msra.mxu0 0
        %1073 = vmatprep.subr.bf16.mxu0 0
        %1074 = vmatpush2.bf16.msra.mxu0 0
        %1075 = vmatprep.mubr.bf16.mxu0 0
        %1076 = vmatmul.mubr.bf16.gmra.mxu0 %v1041
        %v1077 = vpop.f32.mrf.mxu0
        %v1078 = vadd.f32 0.0, %v1077
        %v1079 = vpop.f32.mrf.mxu0
        %v1080 = vpop.f32.mrf.mxu0
        %v1081 = vpop.f32.mrf.mxu0
        %1082 = vdwg.mxu0
        %1083 = vmatprep.subr.bf16.mxu0 0
        %1084 = vmatpush1.bf16.msra.mxu0 0
        %1085 = vmatprep.subr.bf16.mxu0 0
        %1086 = vmatpush1.bf16.msra.mxu0 0
        %1087 = vmatprep.subr.bf16.mxu0 0
        %1088 = vmatpush1.bf16.msra.mxu0 0
        %1089 = vmatprep.subr.bf16.mxu0 0
        %1090 = vmatpush1.bf16.msra.mxu0 0
        %1091 = vmatprep.subr.bf16.mxu0 0
        %1092 = vmatpush1.bf16.msra.mxu0 0
        %1093 = vmatprep.subr.bf16.mxu0 0
        %1094 = vmatpush1.bf16.msra.mxu0 0
        %1095 = vmatprep.subr.bf16.mxu0 0
        %1096 = vmatpush1.bf16.msra.mxu0 %v831
        %1097 = vmatprep.subr.bf16.mxu0 0
        %1098 = vmatpush1.bf16.msra.mxu0 %v830
        %1099 = vmatprep.subr.bf16.mxu0 0
        %1100 = vmatpush2.bf16.msra.mxu0 0
        %1101 = vmatprep.subr.bf16.mxu0 0
        %1102 = vmatpush2.bf16.msra.mxu0 0
        %1103 = vmatprep.subr.bf16.mxu0 0
        %1104 = vmatpush2.bf16.msra.mxu0 0
        %1105 = vmatprep.subr.bf16.mxu0 0
        %1106 = vmatpush2.bf16.msra.mxu0 0
        %1107 = vmatprep.subr.bf16.mxu0 0
        %1108 = vmatpush2.bf16.msra.mxu0 0
        %1109 = vmatprep.subr.bf16.mxu0 0
        %1110 = vmatpush2.bf16.msra.mxu0 0
        %1111 = vmatprep.subr.bf16.mxu0 0
        %1112 = vmatpush2.bf16.msra.mxu0 0
        %1113 = vmatprep.subr.bf16.mxu0 0
        %1114 = vmatpush2.bf16.msra.mxu0 0
        %1115 = vmatprep.mubr.bf16.mxu0 0
        %1116 = vmatmul.mubr.bf16.gmra.mxu0 %v1041
        %v1117 = vpop.f32.mrf.mxu0
        %v1118 = vadd.f32 0.0, %v1117
        %v1119 = vpop.f32.mrf.mxu0
        %v1120 = vpop.f32.mrf.mxu0
        %v1121 = vpop.f32.mrf.mxu0
        %1122 = vdwg.mxu0
        %1123 = vmatprep.subr.bf16.mxu0 0
        %1124 = vmatpush1.bf16.msra.mxu0 0
        %1125 = vmatprep.subr.bf16.mxu0 0
        %1126 = vmatpush1.bf16.msra.mxu0 0
        %1127 = vmatprep.subr.bf16.mxu0 0
        %1128 = vmatpush1.bf16.msra.mxu0 0
        %1129 = vmatprep.subr.bf16.mxu0 0
        %1130 = vmatpush1.bf16.msra.mxu0 0
        %1131 = vmatprep.subr.bf16.mxu0 0
        %1132 = vmatpush1.bf16.msra.mxu0 0
        %1133 = vmatprep.subr.bf16.mxu0 0
        %1134 = vmatpush1.bf16.msra.mxu0 0
        %1135 = vmatprep.subr.bf16.mxu0 0
        %1136 = vmatpush1.bf16.msra.mxu0 %v883
        %1137 = vmatprep.subr.bf16.mxu0 0
        %1138 = vmatpush1.bf16.msra.mxu0 %v882
        %1139 = vmatprep.subr.bf16.mxu0 0
        %1140 = vmatpush2.bf16.msra.mxu0 0
        %1141 = vmatprep.subr.bf16.mxu0 0
        %1142 = vmatpush2.bf16.msra.mxu0 0
        %1143 = vmatprep.subr.bf16.mxu0 0
        %1144 = vmatpush2.bf16.msra.mxu0 0
        %1145 = vmatprep.subr.bf16.mxu0 0
        %1146 = vmatpush2.bf16.msra.mxu0 0
        %1147 = vmatprep.subr.bf16.mxu0 0
        %1148 = vmatpush2.bf16.msra.mxu0 0
        %1149 = vmatprep.subr.bf16.mxu0 0
        %1150 = vmatpush2.bf16.msra.mxu0 0
        %1151 = vmatprep.subr.bf16.mxu0 0
        %1152 = vmatpush2.bf16.msra.mxu0 0
        %1153 = vmatprep.subr.bf16.mxu0 0
        %1154 = vmatpush2.bf16.msra.mxu0 0
        %1155 = vmatprep.mubr.bf16.mxu0 0
        %1156 = vmatmul.mubr.bf16.gmra.mxu0 %v1041
        %v1157 = vpop.f32.mrf.mxu0
        %v1158 = vadd.f32 0.0, %v1157
        %v1159 = vpop.f32.mrf.mxu0
        %v1160 = vpop.f32.mrf.mxu0
        %v1161 = vpop.f32.mrf.mxu0
        %1162 = vdwg.mxu0
        %v1163 = vpack.c.bf16 %v1078, %v1078
        %v1164 = vpack.c.bf16 %v1118, %v1118
        %v1166 = vsel %vm778, %v1163, 0
        %v1169 = vsel %vm778, %v1164, 0
        %1171 = vmatprep.subr.bf16.mxu0 0
        %1172 = vmatpush1.bf16.xpose.msra.mxu0 0
        %1173 = vmatprep.subr.bf16.mxu0 0
        %1174 = vmatpush1.bf16.xpose.msra.mxu0 0
        %1175 = vmatprep.subr.bf16.mxu0 0
        %1176 = vmatpush1.bf16.xpose.msra.mxu0 0
        %1177 = vmatprep.subr.bf16.mxu0 0
        %1178 = vmatpush1.bf16.xpose.msra.mxu0 0
        %1179 = vmatprep.subr.bf16.mxu0 0
        %1180 = vmatpush1.bf16.xpose.msra.mxu0 0
        %1181 = vmatprep.subr.bf16.mxu0 0
        %1182 = vmatpush1.bf16.xpose.msra.mxu0 0
        %1183 = vmatprep.subr.bf16.mxu0 0
        %1184 = vmatpush1.bf16.xpose.msra.mxu0 0
        %1185 = vmatprep.subr.bf16.mxu0 0
        %1186 = vmatpush1.bf16.xpose.msra.mxu0 %v1169
        %1187 = vmatprep.subr.bf16.mxu0 0
        %1188 = vmatpush2.bf16.xpose.msra.mxu0 0
        %1189 = vmatprep.subr.bf16.mxu0 0
        %1190 = vmatpush2.bf16.xpose.msra.mxu0 0
        %1191 = vmatprep.subr.bf16.mxu0 0
        %1192 = vmatpush2.bf16.xpose.msra.mxu0 0
        %1193 = vmatprep.subr.bf16.mxu0 0
        %1194 = vmatpush2.bf16.xpose.msra.mxu0 0
        %1195 = vmatprep.subr.bf16.mxu0 0
        %1196 = vmatpush2.bf16.xpose.msra.mxu0 0
        %1197 = vmatprep.subr.bf16.mxu0 0
        %1198 = vmatpush2.bf16.xpose.msra.mxu0 0
        %1199 = vmatprep.subr.bf16.mxu0 0
        %1200 = vmatpush2.bf16.xpose.msra.mxu0 0
        %1201 = vmatprep.subr.bf16.mxu0 0
        %1202 = vmatpush2.bf16.xpose.msra.mxu0 0
        %1203 = vmatprep.mubr.bf16.mxu0 0
        %1204 = vmatmul.mubr.bf16.gmra.mxu0 %v1166
        %v1205 = vpop.f32.mrf.mxu0
        %v1206 = vadd.f32 0.0, %v1205
        %v1207 = vpop.f32.mrf.mxu0
        %v1208 = vpop.f32.mrf.mxu0
        %v1209 = vpop.f32.mrf.mxu0
        %1210 = vdwg.mxu0
        %v1211 = vmul.f32 %v1206, 0.17677669
        %v1212 = vsel %vm975, %v1211, -inf
        %1213 = vmax.xlane.f32.xlu0 %v1212
        %v1214 = vpop.xlane.xlu0 %1213
        %v1215 = vsub.f32 %v1211, %v1214
        %v1216 = vmul.f32 %v1215, 1.442695
        %v1217 = vpow.pop %v1216
        %v1218 = vsel %vm975, %v1217, 0.0
        %1219 = vadd.xlane.f32.xlu0 %v1218
        %v1220 = vpop.xlane.xlu0 %1219
        %v1221 = vrcp.pop %v1220
        %v1222 = vmul.f32 %v1217, %v1221
        %v1223 = vpack.c.bf16 %v1222, %v1222
        %v1224 = vpack.c.bf16 %v1158, %v1158
        %v1226 = vsel %vm975, %v1223, 0
        %v1229 = vsel %vm992, %v1224, 0
        %1231 = vmatprep.subr.bf16.mxu0 0
        %1232 = vmatpush1.bf16.msra.mxu0 0
        %1233 = vmatprep.subr.bf16.mxu0 0
        %1234 = vmatpush1.bf16.msra.mxu0 0
        %1235 = vmatprep.subr.bf16.mxu0 0
        %1236 = vmatpush1.bf16.msra.mxu0 0
        %1237 = vmatprep.subr.bf16.mxu0 0
        %1238 = vmatpush1.bf16.msra.mxu0 0
        %1239 = vmatprep.subr.bf16.mxu0 0
        %1240 = vmatpush1.bf16.msra.mxu0 0
        %1241 = vmatprep.subr.bf16.mxu0 0
        %1242 = vmatpush1.bf16.msra.mxu0 0
        %1243 = vmatprep.subr.bf16.mxu0 0
        %1244 = vmatpush1.bf16.msra.mxu0 0
        %1245 = vmatprep.subr.bf16.mxu0 0
        %1246 = vmatpush1.bf16.msra.mxu0 %v1229
        %1247 = vmatprep.subr.bf16.mxu0 0
        %1248 = vmatpush2.bf16.msra.mxu0 0
        %1249 = vmatprep.subr.bf16.mxu0 0
        %1250 = vmatpush2.bf16.msra.mxu0 0
        %1251 = vmatprep.subr.bf16.mxu0 0
        %1252 = vmatpush2.bf16.msra.mxu0 0
        %1253 = vmatprep.subr.bf16.mxu0 0
        %1254 = vmatpush2.bf16.msra.mxu0 0
        %1255 = vmatprep.subr.bf16.mxu0 0
        %1256 = vmatpush2.bf16.msra.mxu0 0
        %1257 = vmatprep.subr.bf16.mxu0 0
        %1258 = vmatpush2.bf16.msra.mxu0 0
        %1259 = vmatprep.subr.bf16.mxu0 0
        %1260 = vmatpush2.bf16.msra.mxu0 0
        %1261 = vmatprep.subr.bf16.mxu0 0
        %1262 = vmatpush2.bf16.msra.mxu0 0
        %1263 = vmatprep.mubr.bf16.mxu0 0
        %1264 = vmatmul.mubr.bf16.gmra.mxu0 %v1226
        %v1265 = vpop.f32.mrf.mxu0
        %v1266 = vadd.f32 0.0, %v1265
        %v1267 = vpop.f32.mrf.mxu0
        %v1268 = vpop.f32.mrf.mxu0
        %v1269 = vpop.f32.mrf.mxu0
        %1270 = vdwg.mxu0
        %v1271 = vpack.c.bf16 %v1266, %v1266
        %v1276 = vunpack.c.l.b16 %v754
        %v1277 = vunpack.c.l.b16 %v755
        %v1278 = vunpack.c.l.b16 %v756
        %v1279 = vunpack.c.l.b16 %v757
        %v1280 = vpack.c.b16 %v1277, %v1276
        %v1281 = vpack.c.b16 %v1279, %v1278
        %v1285 = vsel %vm778, %v1271, 0
        %1287 = vmatprep.subr.bf16.mxu0 0
        %1288 = vmatpush1.bf16.msra.mxu0 0
        %1289 = vmatprep.subr.bf16.mxu0 0
        %1290 = vmatpush1.bf16.msra.mxu0 0
        %1291 = vmatprep.subr.bf16.mxu0 0
        %1292 = vmatpush1.bf16.msra.mxu0 0
        %1293 = vmatprep.subr.bf16.mxu0 0
        %1294 = vmatpush1.bf16.msra.mxu0 0
        %1295 = vmatprep.subr.bf16.mxu0 0
        %1296 = vmatpush1.bf16.msra.mxu0 0
        %1297 = vmatprep.subr.bf16.mxu0 0
        %1298 = vmatpush1.bf16.msra.mxu0 0
        %1299 = vmatprep.subr.bf16.mxu0 0
        %1300 = vmatpush1.bf16.msra.mxu0 %v1281
        %1301 = vmatprep.subr.bf16.mxu0 0
        %1302 = vmatpush1.bf16.msra.mxu0 %v1280
        %1303 = vmatprep.subr.bf16.mxu0 0
        %1304 = vmatpush2.bf16.msra.mxu0 0
        %1305 = vmatprep.subr.bf16.mxu0 0
        %1306 = vmatpush2.bf16.msra.mxu0 0
        %1307 = vmatprep.subr.bf16.mxu0 0
        %1308 = vmatpush2.bf16.msra.mxu0 0
        %1309 = vmatprep.subr.bf16.mxu0 0
        %1310 = vmatpush2.bf16.msra.mxu0 0
        %1311 = vmatprep.subr.bf16.mxu0 0
        %1312 = vmatpush2.bf16.msra.mxu0 0
        %1313 = vmatprep.subr.bf16.mxu0 0
        %1314 = vmatpush2.bf16.msra.mxu0 0
        %1315 = vmatprep.subr.bf16.mxu0 0
        %1316 = vmatpush2.bf16.msra.mxu0 0
        %1317 = vmatprep.subr.bf16.mxu0 0
        %1318 = vmatpush2.bf16.msra.mxu0 0
        %1319 = vmatprep.mubr.bf16.mxu0 0
        %1320 = vmatmul.mubr.bf16.gmra.mxu0 %v1285
        %v1321 = vpop.f32.mrf.mxu0
        %v1322 = vadd.f32 0.0, %v1321
        %v1323 = vpop.f32.mrf.mxu0
        %v1324 = vpop.f32.mrf.mxu0
        %v1325 = vpop.f32.mrf.mxu0
        %1326 = vdwg.mxu0
        %v1331 = vunpack.c.l.b16 %v750
        %v1332 = vunpack.c.l.b16 %v751
        %v1333 = vunpack.c.l.b16 %v752
        %v1334 = vunpack.c.l.b16 %v753
        %v1335 = vpack.c.b16 %v1332, %v1331
        %v1336 = vpack.c.b16 %v1334, %v1333
        %v1340 = vsel %vm778, %v1036, 0
        %1342 = vmatprep.subr.bf16.mxu0 0
        %1343 = vmatpush1.bf16.msra.mxu0 0
        %1344 = vmatprep.subr.bf16.mxu0 0
        %1345 = vmatpush1.bf16.msra.mxu0 0
        %1346 = vmatprep.subr.bf16.mxu0 0
        %1347 = vmatpush1.bf16.msra.mxu0 0
        %1348 = vmatprep.subr.bf16.mxu0 0
        %1349 = vmatpush1.bf16.msra.mxu0 0
        %1350 = vmatprep.subr.bf16.mxu0 0
        %1351 = vmatpush1.bf16.msra.mxu0 0
        %1352 = vmatprep.subr.bf16.mxu0 0
        %1353 = vmatpush1.bf16.msra.mxu0 0
        %1354 = vmatprep.subr.bf16.mxu0 0
        %1355 = vmatpush1.bf16.msra.mxu0 %v1336
        %1356 = vmatprep.subr.bf16.mxu0 0
        %1357 = vmatpush1.bf16.msra.mxu0 %v1335
        %1358 = vmatprep.subr.bf16.mxu0 0
        %1359 = vmatpush2.bf16.msra.mxu0 0
        %1360 = vmatprep.subr.bf16.mxu0 0
        %1361 = vmatpush2.bf16.msra.mxu0 0
        %1362 = vmatprep.subr.bf16.mxu0 0
        %1363 = vmatpush2.bf16.msra.mxu0 0
        %1364 = vmatprep.subr.bf16.mxu0 0
        %1365 = vmatpush2.bf16.msra.mxu0 0
        %1366 = vmatprep.subr.bf16.mxu0 0
        %1367 = vmatpush2.bf16.msra.mxu0 0
        %1368 = vmatprep.subr.bf16.mxu0 0
        %1369 = vmatpush2.bf16.msra.mxu0 0
        %1370 = vmatprep.subr.bf16.mxu0 0
        %1371 = vmatpush2.bf16.msra.mxu0 0
        %1372 = vmatprep.subr.bf16.mxu0 0
        %1373 = vmatpush2.bf16.msra.mxu0 0
        %1374 = vmatprep.mubr.bf16.mxu0 0
        %1375 = vmatmul.mubr.bf16.gmra.mxu0 %v1340
        %v1376 = vpop.f32.mrf.mxu0
        %v1377 = vadd.f32 %v1322, %v1376
        %v1378 = vpop.f32.mrf.mxu0
        %v1379 = vpop.f32.mrf.mxu0
        %v1380 = vpop.f32.mrf.mxu0
        %1381 = vdwg.mxu0
        %1382 = vrot.lane.b32.xlu0 %v737, 64
        %v1383 = vpop.permute.xlu0 %1382
        %v1385 = vsel %vm778, %v1383, 0
        %1387 = vmatprep.subr.bf16.mxu0 0
        %1388 = vmatpush1.bf16.msra.mxu0 0
        %1389 = vmatprep.subr.bf16.mxu0 0
        %1390 = vmatpush1.bf16.msra.mxu0 0
        %1391 = vmatprep.subr.bf16.mxu0 0
        %1392 = vmatpush1.bf16.msra.mxu0 0
        %1393 = vmatprep.subr.bf16.mxu0 0
        %1394 = vmatpush1.bf16.msra.mxu0 0
        %1395 = vmatprep.subr.bf16.mxu0 0
        %1396 = vmatpush1.bf16.msra.mxu0 0
        %1397 = vmatprep.subr.bf16.mxu0 0
        %1398 = vmatpush1.bf16.msra.mxu0 0
        %1399 = vmatprep.subr.bf16.mxu0 0
        %1400 = vmatpush1.bf16.msra.mxu0 %v775
        %1401 = vmatprep.subr.bf16.mxu0 0
        %1402 = vmatpush1.bf16.msra.mxu0 %v774
        %1403 = vmatprep.subr.bf16.mxu0 0
        %1404 = vmatpush2.bf16.msra.mxu0 0
        %1405 = vmatprep.subr.bf16.mxu0 0
        %1406 = vmatpush2.bf16.msra.mxu0 0
        %1407 = vmatprep.subr.bf16.mxu0 0
        %1408 = vmatpush2.bf16.msra.mxu0 0
        %1409 = vmatprep.subr.bf16.mxu0 0
        %1410 = vmatpush2.bf16.msra.mxu0 0
        %1411 = vmatprep.subr.bf16.mxu0 0
        %1412 = vmatpush2.bf16.msra.mxu0 0
        %1413 = vmatprep.subr.bf16.mxu0 0
        %1414 = vmatpush2.bf16.msra.mxu0 0
        %1415 = vmatprep.subr.bf16.mxu0 0
        %1416 = vmatpush2.bf16.msra.mxu0 0
        %1417 = vmatprep.subr.bf16.mxu0 0
        %1418 = vmatpush2.bf16.msra.mxu0 0
        %1419 = vmatprep.mubr.bf16.mxu0 0
        %1420 = vmatmul.mubr.bf16.gmra.mxu0 %v1385
        %v1421 = vpop.f32.mrf.mxu0
        %v1422 = vadd.f32 0.0, %v1421
        %v1423 = vpop.f32.mrf.mxu0
        %v1424 = vpop.f32.mrf.mxu0
        %v1425 = vpop.f32.mrf.mxu0
        %1426 = vdwg.mxu0
        %1427 = vmatprep.subr.bf16.mxu0 0
        %1428 = vmatpush1.bf16.msra.mxu0 0
        %1429 = vmatprep.subr.bf16.mxu0 0
        %1430 = vmatpush1.bf16.msra.mxu0 0
        %1431 = vmatprep.subr.bf16.mxu0 0
        %1432 = vmatpush1.bf16.msra.mxu0 0
        %1433 = vmatprep.subr.bf16.mxu0 0
        %1434 = vmatpush1.bf16.msra.mxu0 0
        %1435 = vmatprep.subr.bf16.mxu0 0
        %1436 = vmatpush1.bf16.msra.mxu0 0
        %1437 = vmatprep.subr.bf16.mxu0 0
        %1438 = vmatpush1.bf16.msra.mxu0 0
        %1439 = vmatprep.subr.bf16.mxu0 0
        %1440 = vmatpush1.bf16.msra.mxu0 %v831
        %1441 = vmatprep.subr.bf16.mxu0 0
        %1442 = vmatpush1.bf16.msra.mxu0 %v830
        %1443 = vmatprep.subr.bf16.mxu0 0
        %1444 = vmatpush2.bf16.msra.mxu0 0
        %1445 = vmatprep.subr.bf16.mxu0 0
        %1446 = vmatpush2.bf16.msra.mxu0 0
        %1447 = vmatprep.subr.bf16.mxu0 0
        %1448 = vmatpush2.bf16.msra.mxu0 0
        %1449 = vmatprep.subr.bf16.mxu0 0
        %1450 = vmatpush2.bf16.msra.mxu0 0
        %1451 = vmatprep.subr.bf16.mxu0 0
        %1452 = vmatpush2.bf16.msra.mxu0 0
        %1453 = vmatprep.subr.bf16.mxu0 0
        %1454 = vmatpush2.bf16.msra.mxu0 0
        %1455 = vmatprep.subr.bf16.mxu0 0
        %1456 = vmatpush2.bf16.msra.mxu0 0
        %1457 = vmatprep.subr.bf16.mxu0 0
        %1458 = vmatpush2.bf16.msra.mxu0 0
        %1459 = vmatprep.mubr.bf16.mxu0 0
        %1460 = vmatmul.mubr.bf16.gmra.mxu0 %v1385
        %v1461 = vpop.f32.mrf.mxu0
        %v1462 = vadd.f32 0.0, %v1461
        %v1463 = vpop.f32.mrf.mxu0
        %v1464 = vpop.f32.mrf.mxu0
        %v1465 = vpop.f32.mrf.mxu0
        %1466 = vdwg.mxu0
        %1467 = vmatprep.subr.bf16.mxu0 0
        %1468 = vmatpush1.bf16.msra.mxu0 0
        %1469 = vmatprep.subr.bf16.mxu0 0
        %1470 = vmatpush1.bf16.msra.mxu0 0
        %1471 = vmatprep.subr.bf16.mxu0 0
        %1472 = vmatpush1.bf16.msra.mxu0 0
        %1473 = vmatprep.subr.bf16.mxu0 0
        %1474 = vmatpush1.bf16.msra.mxu0 0
        %1475 = vmatprep.subr.bf16.mxu0 0
        %1476 = vmatpush1.bf16.msra.mxu0 0
        %1477 = vmatprep.subr.bf16.mxu0 0
        %1478 = vmatpush1.bf16.msra.mxu0 0
        %1479 = vmatprep.subr.bf16.mxu0 0
        %1480 = vmatpush1.bf16.msra.mxu0 %v883
        %1481 = vmatprep.subr.bf16.mxu0 0
        %1482 = vmatpush1.bf16.msra.mxu0 %v882
        %1483 = vmatprep.subr.bf16.mxu0 0
        %1484 = vmatpush2.bf16.msra.mxu0 0
        %1485 = vmatprep.subr.bf16.mxu0 0
        %1486 = vmatpush2.bf16.msra.mxu0 0
        %1487 = vmatprep.subr.bf16.mxu0 0
        %1488 = vmatpush2.bf16.msra.mxu0 0
        %1489 = vmatprep.subr.bf16.mxu0 0
        %1490 = vmatpush2.bf16.msra.mxu0 0
        %1491 = vmatprep.subr.bf16.mxu0 0
        %1492 = vmatpush2.bf16.msra.mxu0 0
        %1493 = vmatprep.subr.bf16.mxu0 0
        %1494 = vmatpush2.bf16.msra.mxu0 0
        %1495 = vmatprep.subr.bf16.mxu0 0
        %1496 = vmatpush2.bf16.msra.mxu0 0
        %1497 = vmatprep.subr.bf16.mxu0 0
        %1498 = vmatpush2.bf16.msra.mxu0 0
        %1499 = vmatprep.mubr.bf16.mxu0 0
        %1500 = vmatmul.mubr.bf16.gmra.mxu0 %v1385
        %v1501 = vpop.f32.mrf.mxu0
        %v1502 = vadd.f32 0.0, %v1501
        %v1503 = vpop.f32.mrf.mxu0
        %v1504 = vpop.f32.mrf.mxu0
        %v1505 = vpop.f32.mrf.mxu0
        %1506 = vdwg.mxu0
        %v1507 = vpack.c.bf16 %v1422, %v1422
        %v1508 = vpack.c.bf16 %v1462, %v1462
        %v1510 = vsel %vm778, %v1507, 0
        %v1513 = vsel %vm778, %v1508, 0
        %1515 = vmatprep.subr.bf16.mxu0 0
        %1516 = vmatpush1.bf16.xpose.msra.mxu0 0
        %1517 = vmatprep.subr.bf16.mxu0 0
        %1518 = vmatpush1.bf16.xpose.msra.mxu0 0
        %1519 = vmatprep.subr.bf16.mxu0 0
        %1520 = vmatpush1.bf16.xpose.msra.mxu0 0
        %1521 = vmatprep.subr.bf16.mxu0 0
        %1522 = vmatpush1.bf16.xpose.msra.mxu0 0
        %1523 = vmatprep.subr.bf16.mxu0 0
        %1524 = vmatpush1.bf16.xpose.msra.mxu0 0
        %1525 = vmatprep.subr.bf16.mxu0 0
        %1526 = vmatpush1.bf16.xpose.msra.mxu0 0
        %1527 = vmatprep.subr.bf16.mxu0 0
        %1528 = vmatpush1.bf16.xpose.msra.mxu0 0
        %1529 = vmatprep.subr.bf16.mxu0 0
        %1530 = vmatpush1.bf16.xpose.msra.mxu0 %v1513
        %1531 = vmatprep.subr.bf16.mxu0 0
        %1532 = vmatpush2.bf16.xpose.msra.mxu0 0
        %1533 = vmatprep.subr.bf16.mxu0 0
        %1534 = vmatpush2.bf16.xpose.msra.mxu0 0
        %1535 = vmatprep.subr.bf16.mxu0 0
        %1536 = vmatpush2.bf16.xpose.msra.mxu0 0
        %1537 = vmatprep.subr.bf16.mxu0 0
        %1538 = vmatpush2.bf16.xpose.msra.mxu0 0
        %1539 = vmatprep.subr.bf16.mxu0 0
        %1540 = vmatpush2.bf16.xpose.msra.mxu0 0
        %1541 = vmatprep.subr.bf16.mxu0 0
        %1542 = vmatpush2.bf16.xpose.msra.mxu0 0
        %1543 = vmatprep.subr.bf16.mxu0 0
        %1544 = vmatpush2.bf16.xpose.msra.mxu0 0
        %1545 = vmatprep.subr.bf16.mxu0 0
        %1546 = vmatpush2.bf16.xpose.msra.mxu0 0
        %1547 = vmatprep.mubr.bf16.mxu0 0
        %1548 = vmatmul.mubr.bf16.gmra.mxu0 %v1510
        %v1549 = vpop.f32.mrf.mxu0
        %v1550 = vadd.f32 0.0, %v1549
        %v1551 = vpop.f32.mrf.mxu0
        %v1552 = vpop.f32.mrf.mxu0
        %v1553 = vpop.f32.mrf.mxu0
        %1554 = vdwg.mxu0
        %v1555 = vmul.f32 %v1550, 0.17677669
        %v1556 = vsel %vm975, %v1555, -inf
        %1557 = vmax.xlane.f32.xlu0 %v1556
        %v1558 = vpop.xlane.xlu0 %1557
        %v1559 = vsub.f32 %v1555, %v1558
        %v1560 = vmul.f32 %v1559, 1.442695
        %v1561 = vpow.pop %v1560
        %v1562 = vsel %vm975, %v1561, 0.0
        %1563 = vadd.xlane.f32.xlu0 %v1562
        %v1564 = vpop.xlane.xlu0 %1563
        %v1565 = vrcp.pop %v1564
        %v1566 = vmul.f32 %v1561, %v1565
        %v1567 = vpack.c.bf16 %v1566, %v1566
        %v1568 = vpack.c.bf16 %v1502, %v1502
        %v1570 = vsel %vm975, %v1567, 0
        %v1573 = vsel %vm992, %v1568, 0
        %1575 = vmatprep.subr.bf16.mxu0 0
        %1576 = vmatpush1.bf16.msra.mxu0 0
        %1577 = vmatprep.subr.bf16.mxu0 0
        %1578 = vmatpush1.bf16.msra.mxu0 0
        %1579 = vmatprep.subr.bf16.mxu0 0
        %1580 = vmatpush1.bf16.msra.mxu0 0
        %1581 = vmatprep.subr.bf16.mxu0 0
        %1582 = vmatpush1.bf16.msra.mxu0 0
        %1583 = vmatprep.subr.bf16.mxu0 0
        %1584 = vmatpush1.bf16.msra.mxu0 0
        %1585 = vmatprep.subr.bf16.mxu0 0
        %1586 = vmatpush1.bf16.msra.mxu0 0
        %1587 = vmatprep.subr.bf16.mxu0 0
        %1588 = vmatpush1.bf16.msra.mxu0 0
        %1589 = vmatprep.subr.bf16.mxu0 0
        %1590 = vmatpush1.bf16.msra.mxu0 %v1573
        %1591 = vmatprep.subr.bf16.mxu0 0
        %1592 = vmatpush2.bf16.msra.mxu0 0
        %1593 = vmatprep.subr.bf16.mxu0 0
        %1594 = vmatpush2.bf16.msra.mxu0 0
        %1595 = vmatprep.subr.bf16.mxu0 0
        %1596 = vmatpush2.bf16.msra.mxu0 0
        %1597 = vmatprep.subr.bf16.mxu0 0
        %1598 = vmatpush2.bf16.msra.mxu0 0
        %1599 = vmatprep.subr.bf16.mxu0 0
        %1600 = vmatpush2.bf16.msra.mxu0 0
        %1601 = vmatprep.subr.bf16.mxu0 0
        %1602 = vmatpush2.bf16.msra.mxu0 0
        %1603 = vmatprep.subr.bf16.mxu0 0
        %1604 = vmatpush2.bf16.msra.mxu0 0
        %1605 = vmatprep.subr.bf16.mxu0 0
        %1606 = vmatpush2.bf16.msra.mxu0 0
        %1607 = vmatprep.mubr.bf16.mxu0 0
        %1608 = vmatmul.mubr.bf16.gmra.mxu0 %v1570
        %v1609 = vpop.f32.mrf.mxu0
        %v1610 = vadd.f32 0.0, %v1609
        %v1611 = vpop.f32.mrf.mxu0
        %v1612 = vpop.f32.mrf.mxu0
        %v1613 = vpop.f32.mrf.mxu0
        %1614 = vdwg.mxu0
        %v1615 = vpack.c.bf16 %v1610, %v1610
        %v1620 = vunpack.c.l.b16 %v758
        %v1621 = vunpack.c.l.b16 %v759
        %v1622 = vunpack.c.l.b16 %v760
        %v1623 = vunpack.c.l.b16 %v761
        %v1624 = vpack.c.b16 %v1621, %v1620
        %v1625 = vpack.c.b16 %v1623, %v1622
        %v1629 = vsel %vm778, %v1615, 0
        %1631 = vmatprep.subr.bf16.mxu0 0
        %1632 = vmatpush1.bf16.msra.mxu0 0
        %1633 = vmatprep.subr.bf16.mxu0 0
        %1634 = vmatpush1.bf16.msra.mxu0 0
        %1635 = vmatprep.subr.bf16.mxu0 0
        %1636 = vmatpush1.bf16.msra.mxu0 0
        %1637 = vmatprep.subr.bf16.mxu0 0
        %1638 = vmatpush1.bf16.msra.mxu0 0
        %1639 = vmatprep.subr.bf16.mxu0 0
        %1640 = vmatpush1.bf16.msra.mxu0 0
        %1641 = vmatprep.subr.bf16.mxu0 0
        %1642 = vmatpush1.bf16.msra.mxu0 0
        %1643 = vmatprep.subr.bf16.mxu0 0
        %1644 = vmatpush1.bf16.msra.mxu0 %v1625
        %1645 = vmatprep.subr.bf16.mxu0 0
        %1646 = vmatpush1.bf16.msra.mxu0 %v1624
        %1647 = vmatprep.subr.bf16.mxu0 0
        %1648 = vmatpush2.bf16.msra.mxu0 0
        %1649 = vmatprep.subr.bf16.mxu0 0
        %1650 = vmatpush2.bf16.msra.mxu0 0
        %1651 = vmatprep.subr.bf16.mxu0 0
        %1652 = vmatpush2.bf16.msra.mxu0 0
        %1653 = vmatprep.subr.bf16.mxu0 0
        %1654 = vmatpush2.bf16.msra.mxu0 0
        %1655 = vmatprep.subr.bf16.mxu0 0
        %1656 = vmatpush2.bf16.msra.mxu0 0
        %1657 = vmatprep.subr.bf16.mxu0 0
        %1658 = vmatpush2.bf16.msra.mxu0 0
        %1659 = vmatprep.subr.bf16.mxu0 0
        %1660 = vmatpush2.bf16.msra.mxu0 0
        %1661 = vmatprep.subr.bf16.mxu0 0
        %1662 = vmatpush2.bf16.msra.mxu0 0
        %1663 = vmatprep.mubr.bf16.mxu0 0
        %1664 = vmatmul.mubr.bf16.gmra.mxu0 %v1629
        %v1665 = vpop.f32.mrf.mxu0
        %v1666 = vadd.f32 0.0, %v1665
        %v1667 = vpop.f32.mrf.mxu0
        %v1668 = vpop.f32.mrf.mxu0
        %v1669 = vpop.f32.mrf.mxu0
        %1670 = vdwg.mxu0
        %v1671 = vadd.f32 %v1377, %v1666
        %1672 = vrot.lane.b32.xlu0 %v737, 32
        %v1673 = vpop.permute.xlu0 %1672
        %v1675 = vsel %vm778, %v1673, 0
        %1677 = vmatprep.subr.bf16.mxu0 0
        %1678 = vmatpush1.bf16.msra.mxu0 0
        %1679 = vmatprep.subr.bf16.mxu0 0
        %1680 = vmatpush1.bf16.msra.mxu0 0
        %1681 = vmatprep.subr.bf16.mxu0 0
        %1682 = vmatpush1.bf16.msra.mxu0 0
        %1683 = vmatprep.subr.bf16.mxu0 0
        %1684 = vmatpush1.bf16.msra.mxu0 0
        %1685 = vmatprep.subr.bf16.mxu0 0
        %1686 = vmatpush1.bf16.msra.mxu0 0
        %1687 = vmatprep.subr.bf16.mxu0 0
        %1688 = vmatpush1.bf16.msra.mxu0 0
        %1689 = vmatprep.subr.bf16.mxu0 0
        %1690 = vmatpush1.bf16.msra.mxu0 %v775
        %1691 = vmatprep.subr.bf16.mxu0 0
        %1692 = vmatpush1.bf16.msra.mxu0 %v774
        %1693 = vmatprep.subr.bf16.mxu0 0
        %1694 = vmatpush2.bf16.msra.mxu0 0
        %1695 = vmatprep.subr.bf16.mxu0 0
        %1696 = vmatpush2.bf16.msra.mxu0 0
        %1697 = vmatprep.subr.bf16.mxu0 0
        %1698 = vmatpush2.bf16.msra.mxu0 0
        %1699 = vmatprep.subr.bf16.mxu0 0
        %1700 = vmatpush2.bf16.msra.mxu0 0
        %1701 = vmatprep.subr.bf16.mxu0 0
        %1702 = vmatpush2.bf16.msra.mxu0 0
        %1703 = vmatprep.subr.bf16.mxu0 0
        %1704 = vmatpush2.bf16.msra.mxu0 0
        %1705 = vmatprep.subr.bf16.mxu0 0
        %1706 = vmatpush2.bf16.msra.mxu0 0
        %1707 = vmatprep.subr.bf16.mxu0 0
        %1708 = vmatpush2.bf16.msra.mxu0 0
        %1709 = vmatprep.mubr.bf16.mxu0 0
        %1710 = vmatmul.mubr.bf16.gmra.mxu0 %v1675
        %v1711 = vpop.f32.mrf.mxu0
        %v1712 = vadd.f32 0.0, %v1711
        %v1713 = vpop.f32.mrf.mxu0
        %v1714 = vpop.f32.mrf.mxu0
        %v1715 = vpop.f32.mrf.mxu0
        %1716 = vdwg.mxu0
        %1717 = vmatprep.subr.bf16.mxu0 0
        %1718 = vmatpush1.bf16.msra.mxu0 0
        %1719 = vmatprep.subr.bf16.mxu0 0
        %1720 = vmatpush1.bf16.msra.mxu0 0
        %1721 = vmatprep.subr.bf16.mxu0 0
        %1722 = vmatpush1.bf16.msra.mxu0 0
        %1723 = vmatprep.subr.bf16.mxu0 0
        %1724 = vmatpush1.bf16.msra.mxu0 0
        %1725 = vmatprep.subr.bf16.mxu0 0
        %1726 = vmatpush1.bf16.msra.mxu0 0
        %1727 = vmatprep.subr.bf16.mxu0 0
        %1728 = vmatpush1.bf16.msra.mxu0 0
        %1729 = vmatprep.subr.bf16.mxu0 0
        %1730 = vmatpush1.bf16.msra.mxu0 %v831
        %1731 = vmatprep.subr.bf16.mxu0 0
        %1732 = vmatpush1.bf16.msra.mxu0 %v830
        %1733 = vmatprep.subr.bf16.mxu0 0
        %1734 = vmatpush2.bf16.msra.mxu0 0
        %1735 = vmatprep.subr.bf16.mxu0 0
        %1736 = vmatpush2.bf16.msra.mxu0 0
        %1737 = vmatprep.subr.bf16.mxu0 0
        %1738 = vmatpush2.bf16.msra.mxu0 0
        %1739 = vmatprep.subr.bf16.mxu0 0
        %1740 = vmatpush2.bf16.msra.mxu0 0
        %1741 = vmatprep.subr.bf16.mxu0 0
        %1742 = vmatpush2.bf16.msra.mxu0 0
        %1743 = vmatprep.subr.bf16.mxu0 0
        %1744 = vmatpush2.bf16.msra.mxu0 0
        %1745 = vmatprep.subr.bf16.mxu0 0
        %1746 = vmatpush2.bf16.msra.mxu0 0
        %1747 = vmatprep.subr.bf16.mxu0 0
        %1748 = vmatpush2.bf16.msra.mxu0 0
        %1749 = vmatprep.mubr.bf16.mxu0 0
        %1750 = vmatmul.mubr.bf16.gmra.mxu0 %v1675
        %v1751 = vpop.f32.mrf.mxu0
        %v1752 = vadd.f32 0.0, %v1751
        %v1753 = vpop.f32.mrf.mxu0
        %v1754 = vpop.f32.mrf.mxu0
        %v1755 = vpop.f32.mrf.mxu0
        %1756 = vdwg.mxu0
        %1757 = vmatprep.subr.bf16.mxu0 0
        %1758 = vmatpush1.bf16.msra.mxu0 0
        %1759 = vmatprep.subr.bf16.mxu0 0
        %1760 = vmatpush1.bf16.msra.mxu0 0
        %1761 = vmatprep.subr.bf16.mxu0 0
        %1762 = vmatpush1.bf16.msra.mxu0 0
        %1763 = vmatprep.subr.bf16.mxu0 0
        %1764 = vmatpush1.bf16.msra.mxu0 0
        %1765 = vmatprep.subr.bf16.mxu0 0
        %1766 = vmatpush1.bf16.msra.mxu0 0
        %1767 = vmatprep.subr.bf16.mxu0 0
        %1768 = vmatpush1.bf16.msra.mxu0 0
        %1769 = vmatprep.subr.bf16.mxu0 0
        %1770 = vmatpush1.bf16.msra.mxu0 %v883
        %1771 = vmatprep.subr.bf16.mxu0 0
        %1772 = vmatpush1.bf16.msra.mxu0 %v882
        %1773 = vmatprep.subr.bf16.mxu0 0
        %1774 = vmatpush2.bf16.msra.mxu0 0
        %1775 = vmatprep.subr.bf16.mxu0 0
        %1776 = vmatpush2.bf16.msra.mxu0 0
        %1777 = vmatprep.subr.bf16.mxu0 0
        %1778 = vmatpush2.bf16.msra.mxu0 0
        %1779 = vmatprep.subr.bf16.mxu0 0
        %1780 = vmatpush2.bf16.msra.mxu0 0
        %1781 = vmatprep.subr.bf16.mxu0 0
        %1782 = vmatpush2.bf16.msra.mxu0 0
        %1783 = vmatprep.subr.bf16.mxu0 0
        %1784 = vmatpush2.bf16.msra.mxu0 0
        %1785 = vmatprep.subr.bf16.mxu0 0
        %1786 = vmatpush2.bf16.msra.mxu0 0
        %1787 = vmatprep.subr.bf16.mxu0 0
        %1788 = vmatpush2.bf16.msra.mxu0 0
        %1789 = vmatprep.mubr.bf16.mxu0 0
        %1790 = vmatmul.mubr.bf16.gmra.mxu0 %v1675
        %v1791 = vpop.f32.mrf.mxu0
        %v1792 = vadd.f32 0.0, %v1791
        %v1793 = vpop.f32.mrf.mxu0
        %v1794 = vpop.f32.mrf.mxu0
        %v1795 = vpop.f32.mrf.mxu0
        %1796 = vdwg.mxu0
        %v1797 = vpack.c.bf16 %v1712, %v1712
        %v1798 = vpack.c.bf16 %v1752, %v1752
        %v1800 = vsel %vm778, %v1797, 0
        %v1803 = vsel %vm778, %v1798, 0
        %1805 = vmatprep.subr.bf16.mxu0 0
        %1806 = vmatpush1.bf16.xpose.msra.mxu0 0
        %1807 = vmatprep.subr.bf16.mxu0 0
        %1808 = vmatpush1.bf16.xpose.msra.mxu0 0
        %1809 = vmatprep.subr.bf16.mxu0 0
        %1810 = vmatpush1.bf16.xpose.msra.mxu0 0
        %1811 = vmatprep.subr.bf16.mxu0 0
        %1812 = vmatpush1.bf16.xpose.msra.mxu0 0
        %1813 = vmatprep.subr.bf16.mxu0 0
        %1814 = vmatpush1.bf16.xpose.msra.mxu0 0
        %1815 = vmatprep.subr.bf16.mxu0 0
        %1816 = vmatpush1.bf16.xpose.msra.mxu0 0
        %1817 = vmatprep.subr.bf16.mxu0 0
        %1818 = vmatpush1.bf16.xpose.msra.mxu0 0
        %1819 = vmatprep.subr.bf16.mxu0 0
        %1820 = vmatpush1.bf16.xpose.msra.mxu0 %v1803
        %1821 = vmatprep.subr.bf16.mxu0 0
        %1822 = vmatpush2.bf16.xpose.msra.mxu0 0
        %1823 = vmatprep.subr.bf16.mxu0 0
        %1824 = vmatpush2.bf16.xpose.msra.mxu0 0
        %1825 = vmatprep.subr.bf16.mxu0 0
        %1826 = vmatpush2.bf16.xpose.msra.mxu0 0
        %1827 = vmatprep.subr.bf16.mxu0 0
        %1828 = vmatpush2.bf16.xpose.msra.mxu0 0
        %1829 = vmatprep.subr.bf16.mxu0 0
        %1830 = vmatpush2.bf16.xpose.msra.mxu0 0
        %1831 = vmatprep.subr.bf16.mxu0 0
        %1832 = vmatpush2.bf16.xpose.msra.mxu0 0
        %1833 = vmatprep.subr.bf16.mxu0 0
        %1834 = vmatpush2.bf16.xpose.msra.mxu0 0
        %1835 = vmatprep.subr.bf16.mxu0 0
        %1836 = vmatpush2.bf16.xpose.msra.mxu0 0
        %1837 = vmatprep.mubr.bf16.mxu0 0
        %1838 = vmatmul.mubr.bf16.gmra.mxu0 %v1800
        %v1839 = vpop.f32.mrf.mxu0
        %v1840 = vadd.f32 0.0, %v1839
        %v1841 = vpop.f32.mrf.mxu0
        %v1842 = vpop.f32.mrf.mxu0
        %v1843 = vpop.f32.mrf.mxu0
        %1844 = vdwg.mxu0
        %v1845 = vmul.f32 %v1840, 0.17677669
        %v1846 = vsel %vm975, %v1845, -inf
        %1847 = vmax.xlane.f32.xlu0 %v1846
        %v1848 = vpop.xlane.xlu0 %1847
        %v1849 = vsub.f32 %v1845, %v1848
        %v1850 = vmul.f32 %v1849, 1.442695
        %v1851 = vpow.pop %v1850
        %v1852 = vsel %vm975, %v1851, 0.0
        %1853 = vadd.xlane.f32.xlu0 %v1852
        %v1854 = vpop.xlane.xlu0 %1853
        %v1855 = vrcp.pop %v1854
        %v1856 = vmul.f32 %v1851, %v1855
        %v1857 = vpack.c.bf16 %v1856, %v1856
        %v1858 = vpack.c.bf16 %v1792, %v1792
        %v1860 = vsel %vm975, %v1857, 0
        %v1863 = vsel %vm992, %v1858, 0
        %1865 = vmatprep.subr.bf16.mxu0 0
        %1866 = vmatpush1.bf16.msra.mxu0 0
        %1867 = vmatprep.subr.bf16.mxu0 0
        %1868 = vmatpush1.bf16.msra.mxu0 0
        %1869 = vmatprep.subr.bf16.mxu0 0
        %1870 = vmatpush1.bf16.msra.mxu0 0
        %1871 = vmatprep.subr.bf16.mxu0 0
        %1872 = vmatpush1.bf16.msra.mxu0 0
        %1873 = vmatprep.subr.bf16.mxu0 0
        %1874 = vmatpush1.bf16.msra.mxu0 0
        %1875 = vmatprep.subr.bf16.mxu0 0
        %1876 = vmatpush1.bf16.msra.mxu0 0
        %1877 = vmatprep.subr.bf16.mxu0 0
        %1878 = vmatpush1.bf16.msra.mxu0 0
        %1879 = vmatprep.subr.bf16.mxu0 0
        %1880 = vmatpush1.bf16.msra.mxu0 %v1863
        %1881 = vmatprep.subr.bf16.mxu0 0
        %1882 = vmatpush2.bf16.msra.mxu0 0
        %1883 = vmatprep.subr.bf16.mxu0 0
        %1884 = vmatpush2.bf16.msra.mxu0 0
        %1885 = vmatprep.subr.bf16.mxu0 0
        %1886 = vmatpush2.bf16.msra.mxu0 0
        %1887 = vmatprep.subr.bf16.mxu0 0
        %1888 = vmatpush2.bf16.msra.mxu0 0
        %1889 = vmatprep.subr.bf16.mxu0 0
        %1890 = vmatpush2.bf16.msra.mxu0 0
        %1891 = vmatprep.subr.bf16.mxu0 0
        %1892 = vmatpush2.bf16.msra.mxu0 0
        %1893 = vmatprep.subr.bf16.mxu0 0
        %1894 = vmatpush2.bf16.msra.mxu0 0
        %1895 = vmatprep.subr.bf16.mxu0 0
        %1896 = vmatpush2.bf16.msra.mxu0 0
        %1897 = vmatprep.mubr.bf16.mxu0 0
        %1898 = vmatmul.mubr.bf16.gmra.mxu0 %v1860
        %v1899 = vpop.f32.mrf.mxu0
        %v1900 = vadd.f32 0.0, %v1899
        %v1901 = vpop.f32.mrf.mxu0
        %v1902 = vpop.f32.mrf.mxu0
        %v1903 = vpop.f32.mrf.mxu0
        %1904 = vdwg.mxu0
        %v1905 = vpack.c.bf16 %v1900, %v1900
        %v1910 = vunpack.c.l.b16 %v762
        %v1911 = vunpack.c.l.b16 %v763
        %v1912 = vunpack.c.l.b16 %v764
        %v1913 = vunpack.c.l.b16 %v765
        %v1914 = vpack.c.b16 %v1911, %v1910
        %v1915 = vpack.c.b16 %v1913, %v1912
        %v1919 = vsel %vm778, %v1905, 0
        %1921 = vmatprep.subr.bf16.mxu0 0
        %1922 = vmatpush1.bf16.msra.mxu0 0
        %1923 = vmatprep.subr.bf16.mxu0 0
        %1924 = vmatpush1.bf16.msra.mxu0 0
        %1925 = vmatprep.subr.bf16.mxu0 0
        %1926 = vmatpush1.bf16.msra.mxu0 0
        %1927 = vmatprep.subr.bf16.mxu0 0
        %1928 = vmatpush1.bf16.msra.mxu0 0
        %1929 = vmatprep.subr.bf16.mxu0 0
        %1930 = vmatpush1.bf16.msra.mxu0 0
        %1931 = vmatprep.subr.bf16.mxu0 0
        %1932 = vmatpush1.bf16.msra.mxu0 0
        %1933 = vmatprep.subr.bf16.mxu0 0
        %1934 = vmatpush1.bf16.msra.mxu0 %v1915
        %1935 = vmatprep.subr.bf16.mxu0 0
        %1936 = vmatpush1.bf16.msra.mxu0 %v1914
        %1937 = vmatprep.subr.bf16.mxu0 0
        %1938 = vmatpush2.bf16.msra.mxu0 0
        %1939 = vmatprep.subr.bf16.mxu0 0
        %1940 = vmatpush2.bf16.msra.mxu0 0
        %1941 = vmatprep.subr.bf16.mxu0 0
        %1942 = vmatpush2.bf16.msra.mxu0 0
        %1943 = vmatprep.subr.bf16.mxu0 0
        %1944 = vmatpush2.bf16.msra.mxu0 0
        %1945 = vmatprep.subr.bf16.mxu0 0
        %1946 = vmatpush2.bf16.msra.mxu0 0
        %1947 = vmatprep.subr.bf16.mxu0 0
        %1948 = vmatpush2.bf16.msra.mxu0 0
        %1949 = vmatprep.subr.bf16.mxu0 0
        %1950 = vmatpush2.bf16.msra.mxu0 0
        %1951 = vmatprep.subr.bf16.mxu0 0
        %1952 = vmatpush2.bf16.msra.mxu0 0
        %1953 = vmatprep.mubr.bf16.mxu0 0
        %1954 = vmatmul.mubr.bf16.gmra.mxu0 %v1919
        %v1955 = vpop.f32.mrf.mxu0
        %v1956 = vadd.f32 0.0, %v1955
        %v1957 = vpop.f32.mrf.mxu0
        %v1958 = vpop.f32.mrf.mxu0
        %v1959 = vpop.f32.mrf.mxu0
        %1960 = vdwg.mxu0
        %v1961 = vadd.f32 %v1671, %v1956
        %v1962 = vld [vmem:[%s7] sm:$0x1]
        %v1964 = vlaneseq
        %v1965 = vshrl.u32 %v1964, 7
        %v1966 = vsub.s32 0, %v1965
        %v1967 = vrot.slane %v1962, %v1966
        %v1969 = vadd.f32 %v1961, %v1967
        %v1970 = vadd.f32 %v1969, %v732
        %v1971 = vld [vmem:[%s8] sm:$0x1]
        %v1972 = vld [vmem:[%s9] sm:$0x1]
        %1973 = vadd.xlane.f32.xlu0 %v1970
        %v1974 = vpop.xlane.xlu0 %1973
        %v1975 = vrcp.pop 128.0
        %v1976 = vmul.f32 %v1974, %v1975
        %v1977 = vsub.f32 %v1970, %v1976
        %v1978 = vmul.f32 %v1977, %v1977
        %1979 = vadd.xlane.f32.xlu0 %v1978
        %v1980 = vpop.xlane.xlu0 %1979
        %v1981 = vmul.f32 %v1980, %v1975
        %v1982 = vadd.f32 %v1981, 1e-05
        %v1983 = vrsqrt.pop %v1982
        %v1984 = vmul.f32 %v1977, %v1983
        %v1986 = vlaneseq
        %v1987 = vshrl.u32 %v1986, 7
        %v1988 = vsub.s32 0, %v1987
        %v1989 = vrot.slane %v1971, %v1988
        %v1991 = vmul.f32 %v1984, %v1989
        %v1993 = vlaneseq
        %v1994 = vshrl.u32 %v1993, 7
        %v1995 = vsub.s32 0, %v1994
        %v1996 = vrot.slane %v1972, %v1995
        %v1998 = vadd.f32 %v1991, %v1996
        %v1999 = vpack.c.bf16 %v1998, %v1998
        %v2000 = vld [vmem:[#allocation14] sm:$0xff]
        %v2001 = vld [vmem:[#allocation14 + $0x8] sm:$0xff]
        %v2002 = vld [vmem:[#allocation14 + $0x10] sm:$0xff]
        %v2003 = vld [vmem:[#allocation14 + $0x18] sm:$0xff]
        %v2004 = vld [vmem:[#allocation14 + $0x20] sm:$0xff]
        %v2005 = vld [vmem:[#allocation14 + $0x28] sm:$0xff]
        %v2006 = vld [vmem:[#allocation14 + $0x30] sm:$0xff]
        %v2007 = vld [vmem:[#allocation14 + $0x38] sm:$0xff]
        %v2008 = vld [vmem:[#allocation14 + $0x40] sm:$0xff]
        %v2009 = vld [vmem:[#allocation14 + $0x48] sm:$0xff]
        %v2010 = vld [vmem:[#allocation14 + $0x50] sm:$0xff]
        %v2011 = vld [vmem:[#allocation14 + $0x58] sm:$0xff]
        %v2012 = vld [vmem:[#allocation14 + $0x60] sm:$0xff]
        %v2013 = vld [vmem:[#allocation14 + $0x68] sm:$0xff]
        %v2014 = vld [vmem:[#allocation14 + $0x70] sm:$0xff]
        %v2015 = vld [vmem:[#allocation14 + $0x78] sm:$0xff]
        %v2016 = vld [vmem:[%s13] sm:$0x3]
        %v2018 = vlaneseq
        %v2019 = vshrl.u32 %v2018, 7
        %v2020 = vsub.s32 0, %v2019
        %v2021 = vrot.slane %v2016, %v2020
        %v2022 = vlaneseq
        %v2023 = vshrl.u32 %v2022, 7
        %v2024 = vsub.s32 1, %v2023
        %v2025 = vrot.slane %v2016, %v2024
        %v2044 = vunpack.c.l.b16 %v2000
        %v2045 = vunpack.c.h.b16 %v2000
        %v2046 = vunpack.c.l.b16 %v2001
        %v2047 = vunpack.c.h.b16 %v2001
        %v2048 = vunpack.c.l.b16 %v2002
        %v2049 = vunpack.c.h.b16 %v2002
        %v2050 = vunpack.c.l.b16 %v2003
        %v2051 = vunpack.c.h.b16 %v2003
        %v2052 = vunpack.c.l.b16 %v2004
        %v2053 = vunpack.c.h.b16 %v2004
        %v2054 = vunpack.c.l.b16 %v2005
        %v2055 = vunpack.c.h.b16 %v2005
        %v2056 = vunpack.c.l.b16 %v2006
        %v2057 = vunpack.c.h.b16 %v2006
        %v2058 = vunpack.c.l.b16 %v2007
        %v2059 = vunpack.c.h.b16 %v2007
        %v2060 = vunpack.c.l.b16 %v2008
        %v2061 = vunpack.c.h.b16 %v2008
        %v2062 = vunpack.c.l.b16 %v2009
        %v2063 = vunpack.c.h.b16 %v2009
        %v2064 = vunpack.c.l.b16 %v2010
        %v2065 = vunpack.c.h.b16 %v2010
        %v2066 = vunpack.c.l.b16 %v2011
        %v2067 = vunpack.c.h.b16 %v2011
        %v2068 = vunpack.c.l.b16 %v2012
        %v2069 = vunpack.c.h.b16 %v2012
        %v2070 = vunpack.c.l.b16 %v2013
        %v2071 = vunpack.c.h.b16 %v2013
        %v2072 = vunpack.c.l.b16 %v2014
        %v2073 = vunpack.c.h.b16 %v2014
        %v2074 = vunpack.c.l.b16 %v2015
        %v2075 = vunpack.c.h.b16 %v2015
        %v2076 = vpack.c.b16 %v2046, %v2044
        %v2077 = vpack.c.b16 %v2047, %v2045
        %v2078 = vpack.c.b16 %v2050, %v2048
        %v2079 = vpack.c.b16 %v2051, %v2049
        %v2080 = vpack.c.b16 %v2054, %v2052
        %v2081 = vpack.c.b16 %v2055, %v2053
        %v2082 = vpack.c.b16 %v2058, %v2056
        %v2083 = vpack.c.b16 %v2059, %v2057
        %v2084 = vpack.c.b16 %v2062, %v2060
        %v2085 = vpack.c.b16 %v2063, %v2061
        %v2086 = vpack.c.b16 %v2066, %v2064
        %v2087 = vpack.c.b16 %v2067, %v2065
        %v2088 = vpack.c.b16 %v2070, %v2068
        %v2089 = vpack.c.b16 %v2071, %v2069
        %v2090 = vpack.c.b16 %v2074, %v2072
        %v2091 = vpack.c.b16 %v2075, %v2073
        %2108 = vmatprep.subr.bf16.mxu0 %v2091
        %2109 = vmatpush1.bf16.msra.mxu0 %v2090
        %2110 = vmatprep.subr.bf16.mxu0 %v2089
        %2111 = vmatpush1.bf16.msra.mxu0 %v2088
        %2112 = vmatprep.subr.bf16.mxu0 %v2087
        %2113 = vmatpush1.bf16.msra.mxu0 %v2086
        %2114 = vmatprep.subr.bf16.mxu0 %v2085
        %2115 = vmatpush1.bf16.msra.mxu0 %v2084
        %2116 = vmatprep.subr.bf16.mxu0 %v2083
        %2117 = vmatpush1.bf16.msra.mxu0 %v2082
        %2118 = vmatprep.subr.bf16.mxu0 %v2081
        %2119 = vmatpush1.bf16.msra.mxu0 %v2080
        %2120 = vmatprep.subr.bf16.mxu0 %v2079
        %2121 = vmatpush1.bf16.msra.mxu0 %v2078
        %2122 = vmatprep.subr.bf16.mxu0 %v2077
        %2123 = vmatpush1.bf16.msra.mxu0 %v2076
        %2124 = vmatprep.subr.bf16.mxu0 0
        %2125 = vmatpush2.bf16.msra.mxu0 0
        %2126 = vmatprep.subr.bf16.mxu0 0
        %2127 = vmatpush2.bf16.msra.mxu0 0
        %2128 = vmatprep.subr.bf16.mxu0 0
        %2129 = vmatpush2.bf16.msra.mxu0 0
        %2130 = vmatprep.subr.bf16.mxu0 0
        %2131 = vmatpush2.bf16.msra.mxu0 0
        %2132 = vmatprep.subr.bf16.mxu0 0
        %2133 = vmatpush2.bf16.msra.mxu0 0
        %2134 = vmatprep.subr.bf16.mxu0 0
        %2135 = vmatpush2.bf16.msra.mxu0 0
        %2136 = vmatprep.subr.bf16.mxu0 0
        %2137 = vmatpush2.bf16.msra.mxu0 0
        %2138 = vmatprep.subr.bf16.mxu0 0
        %2139 = vmatpush2.bf16.msra.mxu0 0
        %2140 = vmatprep.mubr.bf16.mxu0 0
        %2141 = vmatmul.mubr.bf16.gmra.mxu0 %v1999
        %v2142 = vpop.f32.mrf.mxu0
        %v2143 = vadd.f32 %v2021, %v2142
        %v2144 = vpop.f32.mrf.mxu0
        %v2145 = vadd.f32 %v2025, %v2144
        %v2146 = vpop.f32.mrf.mxu0
        %v2147 = vpop.f32.mrf.mxu0
        %2148 = vdwg.mxu0
        %v2149 = vmax.f32 %v2143, 0.0
        %v2150 = vmax.f32 %v2145, 0.0
        %v2151 = vpack.c.bf16 %v2149, %v2149
        %v2152 = vpack.c.bf16 %v2150, %v2150
        %v2153 = vld [vmem:[#allocation16] sm:$0xf]
        %v2154 = vld [vmem:[#allocation16 + $0x4] sm:$0xf]
        %v2155 = vld [vmem:[#allocation16 + $0x8] sm:$0xf]
        %v2156 = vld [vmem:[#allocation16 + $0xc] sm:$0xf]
        %v2157 = vld [vmem:[#allocation16 + $0x10] sm:$0xf]
        %v2158 = vld [vmem:[#allocation16 + $0x14] sm:$0xf]
        %v2159 = vld [vmem:[#allocation16 + $0x18] sm:$0xf]
        %v2160 = vld [vmem:[#allocation16 + $0x1c] sm:$0xf]
        %v2161 = vld [vmem:[#allocation16 + $0x20] sm:$0xf]
        %v2162 = vld [vmem:[#allocation16 + $0x24] sm:$0xf]
        %v2163 = vld [vmem:[#allocation16 + $0x28] sm:$0xf]
        %v2164 = vld [vmem:[#allocation16 + $0x2c] sm:$0xf]
        %v2165 = vld [vmem:[#allocation16 + $0x30] sm:$0xf]
        %v2166 = vld [vmem:[#allocation16 + $0x34] sm:$0xf]
        %v2167 = vld [vmem:[#allocation16 + $0x38] sm:$0xf]
        %v2168 = vld [vmem:[#allocation16 + $0x3c] sm:$0xf]
        %v2169 = vld [vmem:[#allocation16 + $0x40] sm:$0xf]
        %v2170 = vld [vmem:[#allocation16 + $0x44] sm:$0xf]
        %v2171 = vld [vmem:[#allocation16 + $0x48] sm:$0xf]
        %v2172 = vld [vmem:[#allocation16 + $0x4c] sm:$0xf]
        %v2173 = vld [vmem:[#allocation16 + $0x50] sm:$0xf]
        %v2174 = vld [vmem:[#allocation16 + $0x54] sm:$0xf]
        %v2175 = vld [vmem:[#allocation16 + $0x58] sm:$0xf]
        %v2176 = vld [vmem:[#allocation16 + $0x5c] sm:$0xf]
        %v2177 = vld [vmem:[#allocation16 + $0x60] sm:$0xf]
        %v2178 = vld [vmem:[#allocation16 + $0x64] sm:$0xf]
        %v2179 = vld [vmem:[#allocation16 + $0x68] sm:$0xf]
        %v2180 = vld [vmem:[#allocation16 + $0x6c] sm:$0xf]
        %v2181 = vld [vmem:[#allocation16 + $0x70] sm:$0xf]
        %v2182 = vld [vmem:[#allocation16 + $0x74] sm:$0xf]
        %v2183 = vld [vmem:[#allocation16 + $0x78] sm:$0xf]
        %v2184 = vld [vmem:[#allocation16 + $0x7c] sm:$0xf]
        %v2185 = vld [vmem:[%s15] sm:$0x1]
        %v2187 = vlaneseq
        %v2188 = vshrl.u32 %v2187, 7
        %v2189 = vsub.s32 0, %v2188
        %v2190 = vrot.slane %v2185, %v2189
        %v2224 = vunpack.c.l.b16 %v2153
        %v2225 = vunpack.c.l.b16 %v2154
        %v2226 = vunpack.c.l.b16 %v2155
        %v2227 = vunpack.c.l.b16 %v2156
        %v2228 = vunpack.c.l.b16 %v2157
        %v2229 = vunpack.c.l.b16 %v2158
        %v2230 = vunpack.c.l.b16 %v2159
        %v2231 = vunpack.c.l.b16 %v2160
        %v2232 = vunpack.c.l.b16 %v2161
        %v2233 = vunpack.c.l.b16 %v2162
        %v2234 = vunpack.c.l.b16 %v2163
        %v2235 = vunpack.c.l.b16 %v2164
        %v2236 = vunpack.c.l.b16 %v2165
        %v2237 = vunpack.c.l.b16 %v2166
        %v2238 = vunpack.c.l.b16 %v2167
        %v2239 = vunpack.c.l.b16 %v2168
        %v2240 = vunpack.c.l.b16 %v2169
        %v2241 = vunpack.c.l.b16 %v2170
        %v2242 = vunpack.c.l.b16 %v2171
        %v2243 = vunpack.c.l.b16 %v2172
        %v2244 = vunpack.c.l.b16 %v2173
        %v2245 = vunpack.c.l.b16 %v2174
        %v2246 = vunpack.c.l.b16 %v2175
        %v2247 = vunpack.c.l.b16 %v2176
        %v2248 = vunpack.c.l.b16 %v2177
        %v2249 = vunpack.c.l.b16 %v2178
        %v2250 = vunpack.c.l.b16 %v2179
        %v2251 = vunpack.c.l.b16 %v2180
        %v2252 = vunpack.c.l.b16 %v2181
        %v2253 = vunpack.c.l.b16 %v2182
        %v2254 = vunpack.c.l.b16 %v2183
        %v2255 = vunpack.c.l.b16 %v2184
        %v2256 = vpack.c.b16 %v2225, %v2224
        %v2257 = vpack.c.b16 %v2227, %v2226
        %v2258 = vpack.c.b16 %v2229, %v2228
        %v2259 = vpack.c.b16 %v2231, %v2230
        %v2260 = vpack.c.b16 %v2233, %v2232
        %v2261 = vpack.c.b16 %v2235, %v2234
        %v2262 = vpack.c.b16 %v2237, %v2236
        %v2263 = vpack.c.b16 %v2239, %v2238
        %v2264 = vpack.c.b16 %v2241, %v2240
        %v2265 = vpack.c.b16 %v2243, %v2242
        %v2266 = vpack.c.b16 %v2245, %v2244
        %v2267 = vpack.c.b16 %v2247, %v2246
        %v2268 = vpack.c.b16 %v2249, %v2248
        %v2269 = vpack.c.b16 %v2251, %v2250
        %v2270 = vpack.c.b16 %v2253, %v2252
        %v2271 = vpack.c.b16 %v2255, %v2254
        %2288 = vmatprep.subr.bf16.mxu0 0
        %2289 = vmatpush1.bf16.msra.mxu0 %v2263
        %2290 = vmatprep.subr.bf16.mxu0 0
        %2291 = vmatpush1.bf16.msra.mxu0 %v2262
        %2292 = vmatprep.subr.bf16.mxu0 0
        %2293 = vmatpush1.bf16.msra.mxu0 %v2261
        %2294 = vmatprep.subr.bf16.mxu0 0
        %2295 = vmatpush1.bf16.msra.mxu0 %v2260
        %2296 = vmatprep.subr.bf16.mxu0 0
        %2297 = vmatpush1.bf16.msra.mxu0 %v2259
        %2298 = vmatprep.subr.bf16.mxu0 0
        %2299 = vmatpush1.bf16.msra.mxu0 %v2258
        %2300 = vmatprep.subr.bf16.mxu0 0
        %2301 = vmatpush1.bf16.msra.mxu0 %v2257
        %2302 = vmatprep.subr.bf16.mxu0 0
        %2303 = vmatpush1.bf16.msra.mxu0 %v2256
        %2304 = vmatprep.subr.bf16.mxu0 0
        %2305 = vmatpush2.bf16.msra.mxu0 %v2271
        %2306 = vmatprep.subr.bf16.mxu0 0
        %2307 = vmatpush2.bf16.msra.mxu0 %v2270
        %2308 = vmatprep.subr.bf16.mxu0 0
        %2309 = vmatpush2.bf16.msra.mxu0 %v2269
        %2310 = vmatprep.subr.bf16.mxu0 0
        %2311 = vmatpush2.bf16.msra.mxu0 %v2268
        %2312 = vmatprep.subr.bf16.mxu0 0
        %2313 = vmatpush2.bf16.msra.mxu0 %v2267
        %2314 = vmatprep.subr.bf16.mxu0 0
        %2315 = vmatpush2.bf16.msra.mxu0 %v2266
        %2316 = vmatprep.subr.bf16.mxu0 0
        %2317 = vmatpush2.bf16.msra.mxu0 %v2265
        %2318 = vmatprep.subr.bf16.mxu0 0
        %2319 = vmatpush2.bf16.msra.mxu0 %v2264
        %2320 = vmatprep.mubr.bf16.mxu0 %v2152
        %2321 = vmatmul.mubr.bf16.gmra.mxu0 %v2151
        %v2322 = vpop.f32.mrf.mxu0
        %v2323 = vadd.f32 %v2190, %v2322
        %v2324 = vpop.f32.mrf.mxu0
        %v2325 = vpop.f32.mrf.mxu0
        %v2326 = vpop.f32.mrf.mxu0
        %2327 = vdwg.mxu0
        %v2328 = vadd.f32 %v2323, %v1998
        %v2329 = vld [vmem:[%s10] sm:$0x1]
        %v2330 = vld [vmem:[%s11] sm:$0x1]
        %2331 = vadd.xlane.f32.xlu0 %v2328
        %v2332 = vpop.xlane.xlu0 %2331
        %v2333 = vmul.f32 %v2332, %v1975
        %v2334 = vsub.f32 %v2328, %v2333
        %v2335 = vmul.f32 %v2334, %v2334
        %2336 = vadd.xlane.f32.xlu0 %v2335
        %v2337 = vpop.xlane.xlu0 %2336
        %v2338 = vmul.f32 %v2337, %v1975
        %v2339 = vadd.f32 %v2338, 1e-05
        %v2340 = vrsqrt.pop %v2339
        %v2341 = vmul.f32 %v2334, %v2340
        %v2343 = vlaneseq
        %v2344 = vshrl.u32 %v2343, 7
        %v2345 = vsub.s32 0, %v2344
        %v2346 = vrot.slane %v2329, %v2345
        %v2348 = vmul.f32 %v2341, %v2346
        %v2350 = vlaneseq
        %v2351 = vshrl.u32 %v2350, 7
        %v2352 = vsub.s32 0, %v2351
        %v2353 = vrot.slane %v2330, %v2352
        %v2355 = vadd.f32 %v2348, %v2353
        %v2356 = vpack.c.bf16 %v2355, %v2355
        %s2357 = scalar_lea.vmem [#allocation8], 16
        %v2358 = vld [vmem:[%s2357] sm:$0xf]
        %v2359 = vld [vmem:[%s2357 + $0x4] sm:$0xf]
        %v2360 = vld [vmem:[%s2357 + $0x8] sm:$0xf]
        %v2361 = vld [vmem:[%s2357 + $0xc] sm:$0xf]
        %s2362 = scalar_lea.vmem [#allocation10], 16
        %v2363 = vld [vmem:[%s2362] sm:$0xf]
        %v2364 = vld [vmem:[%s2362 + $0x4] sm:$0xf]
        %v2365 = vld [vmem:[%s2362 + $0x8] sm:$0xf]
        %v2366 = vld [vmem:[%s2362 + $0xc] sm:$0xf]
        %s2367 = scalar_lea.vmem [#allocation11], 16
        %v2368 = vld [vmem:[%s2367] sm:$0xf]
        %v2369 = vld [vmem:[%s2367 + $0x4] sm:$0xf]
        %v2370 = vld [vmem:[%s2367 + $0x8] sm:$0xf]
        %v2371 = vld [vmem:[%s2367 + $0xc] sm:$0xf]
        %s2372 = scalar_lea.vmem [#allocation13], 64
        %v2373 = vld [vmem:[%s2372] sm:$0xf]
        %v2374 = vld [vmem:[%s2372 + $0x4] sm:$0xf]
        %v2375 = vld [vmem:[%s2372 + $0x8] sm:$0xf]
        %v2376 = vld [vmem:[%s2372 + $0xc] sm:$0xf]
        %v2377 = vld [vmem:[%s2372 + $0x10] sm:$0xf]
        %v2378 = vld [vmem:[%s2372 + $0x14] sm:$0xf]
        %v2379 = vld [vmem:[%s2372 + $0x18] sm:$0xf]
        %v2380 = vld [vmem:[%s2372 + $0x1c] sm:$0xf]
        %v2381 = vld [vmem:[%s2372 + $0x20] sm:$0xf]
        %v2382 = vld [vmem:[%s2372 + $0x24] sm:$0xf]
        %v2383 = vld [vmem:[%s2372 + $0x28] sm:$0xf]
        %v2384 = vld [vmem:[%s2372 + $0x2c] sm:$0xf]
        %v2385 = vld [vmem:[%s2372 + $0x30] sm:$0xf]
        %v2386 = vld [vmem:[%s2372 + $0x34] sm:$0xf]
        %v2387 = vld [vmem:[%s2372 + $0x38] sm:$0xf]
        %v2388 = vld [vmem:[%s2372 + $0x3c] sm:$0xf]
        %v2393 = vunpack.c.l.b16 %v2358
        %v2394 = vunpack.c.l.b16 %v2359
        %v2395 = vunpack.c.l.b16 %v2360
        %v2396 = vunpack.c.l.b16 %v2361
        %v2397 = vpack.c.b16 %v2394, %v2393
        %v2398 = vpack.c.b16 %v2396, %v2395
        %v2402 = vsel %vm778, %v2356, 0
        %2404 = vmatprep.subr.bf16.mxu0 0
        %2405 = vmatpush1.bf16.msra.mxu0 0
        %2406 = vmatprep.subr.bf16.mxu0 0
        %2407 = vmatpush1.bf16.msra.mxu0 0
        %2408 = vmatprep.subr.bf16.mxu0 0
        %2409 = vmatpush1.bf16.msra.mxu0 0
        %2410 = vmatprep.subr.bf16.mxu0 0
        %2411 = vmatpush1.bf16.msra.mxu0 0
        %2412 = vmatprep.subr.bf16.mxu0 0
        %2413 = vmatpush1.bf16.msra.mxu0 0
        %2414 = vmatprep.subr.bf16.mxu0 0
        %2415 = vmatpush1.bf16.msra.mxu0 0
        %2416 = vmatprep.subr.bf16.mxu0 0
        %2417 = vmatpush1.bf16.msra.mxu0 %v2398
        %2418 = vmatprep.subr.bf16.mxu0 0
        %2419 = vmatpush1.bf16.msra.mxu0 %v2397
        %2420 = vmatprep.subr.bf16.mxu0 0
        %2421 = vmatpush2.bf16.msra.mxu0 0
        %2422 = vmatprep.subr.bf16.mxu0 0
        %2423 = vmatpush2.bf16.msra.mxu0 0
        %2424 = vmatprep.subr.bf16.mxu0 0
        %2425 = vmatpush2.bf16.msra.mxu0 0
        %2426 = vmatprep.subr.bf16.mxu0 0
        %2427 = vmatpush2.bf16.msra.mxu0 0
        %2428 = vmatprep.subr.bf16.mxu0 0
        %2429 = vmatpush2.bf16.msra.mxu0 0
        %2430 = vmatprep.subr.bf16.mxu0 0
        %2431 = vmatpush2.bf16.msra.mxu0 0
        %2432 = vmatprep.subr.bf16.mxu0 0
        %2433 = vmatpush2.bf16.msra.mxu0 0
        %2434 = vmatprep.subr.bf16.mxu0 0
        %2435 = vmatpush2.bf16.msra.mxu0 0
        %2436 = vmatprep.mubr.bf16.mxu0 0
        %2437 = vmatmul.mubr.bf16.gmra.mxu0 %v2402
        %v2438 = vpop.f32.mrf.mxu0
        %v2439 = vadd.f32 0.0, %v2438
        %v2440 = vpop.f32.mrf.mxu0
        %v2441 = vpop.f32.mrf.mxu0
        %v2442 = vpop.f32.mrf.mxu0
        %2443 = vdwg.mxu0
        %v2448 = vunpack.c.l.b16 %v2363
        %v2449 = vunpack.c.l.b16 %v2364
        %v2450 = vunpack.c.l.b16 %v2365
        %v2451 = vunpack.c.l.b16 %v2366
        %v2452 = vpack.c.b16 %v2449, %v2448
        %v2453 = vpack.c.b16 %v2451, %v2450
        %2456 = vmatprep.subr.bf16.mxu0 0
        %2457 = vmatpush1.bf16.msra.mxu0 0
        %2458 = vmatprep.subr.bf16.mxu0 0
        %2459 = vmatpush1.bf16.msra.mxu0 0
        %2460 = vmatprep.subr.bf16.mxu0 0
        %2461 = vmatpush1.bf16.msra.mxu0 0
        %2462 = vmatprep.subr.bf16.mxu0 0
        %2463 = vmatpush1.bf16.msra.mxu0 0
        %2464 = vmatprep.subr.bf16.mxu0 0
        %2465 = vmatpush1.bf16.msra.mxu0 0
        %2466 = vmatprep.subr.bf16.mxu0 0
        %2467 = vmatpush1.bf16.msra.mxu0 0
        %2468 = vmatprep.subr.bf16.mxu0 0
        %2469 = vmatpush1.bf16.msra.mxu0 %v2453
        %2470 = vmatprep.subr.bf16.mxu0 0
        %2471 = vmatpush1.bf16.msra.mxu0 %v2452
        %2472 = vmatprep.subr.bf16.mxu0 0
        %2473 = vmatpush2.bf16.msra.mxu0 0
        %2474 = vmatprep.subr.bf16.mxu0 0
        %2475 = vmatpush2.bf16.msra.mxu0 0
        %2476 = vmatprep.subr.bf16.mxu0 0
        %2477 = vmatpush2.bf16.msra.mxu0 0
        %2478 = vmatprep.subr.bf16.mxu0 0
        %2479 = vmatpush2.bf16.msra.mxu0 0
        %2480 = vmatprep.subr.bf16.mxu0 0
        %2481 = vmatpush2.bf16.msra.mxu0 0
        %2482 = vmatprep.subr.bf16.mxu0 0
        %2483 = vmatpush2.bf16.msra.mxu0 0
        %2484 = vmatprep.subr.bf16.mxu0 0
        %2485 = vmatpush2.bf16.msra.mxu0 0
        %2486 = vmatprep.subr.bf16.mxu0 0
        %2487 = vmatpush2.bf16.msra.mxu0 0
        %2488 = vmatprep.mubr.bf16.mxu0 0
        %2489 = vmatmul.mubr.bf16.gmra.mxu0 %v2402
        %v2490 = vpop.f32.mrf.mxu0
        %v2491 = vadd.f32 0.0, %v2490
        %v2492 = vpop.f32.mrf.mxu0
        %v2493 = vpop.f32.mrf.mxu0
        %v2494 = vpop.f32.mrf.mxu0
        %2495 = vdwg.mxu0
        %v2500 = vunpack.c.l.b16 %v2368
        %v2501 = vunpack.c.l.b16 %v2369
        %v2502 = vunpack.c.l.b16 %v2370
        %v2503 = vunpack.c.l.b16 %v2371
        %v2504 = vpack.c.b16 %v2501, %v2500
        %v2505 = vpack.c.b16 %v2503, %v2502
        %2508 = vmatprep.subr.bf16.mxu0 0
        %2509 = vmatpush1.bf16.msra.mxu0 0
        %2510 = vmatprep.subr.bf16.mxu0 0
        %2511 = vmatpush1.bf16.msra.mxu0 0
        %2512 = vmatprep.subr.bf16.mxu0 0
        %2513 = vmatpush1.bf16.msra.mxu0 0
        %2514 = vmatprep.subr.bf16.mxu0 0
        %2515 = vmatpush1.bf16.msra.mxu0 0
        %2516 = vmatprep.subr.bf16.mxu0 0
        %2517 = vmatpush1.bf16.msra.mxu0 0
        %2518 = vmatprep.subr.bf16.mxu0 0
        %2519 = vmatpush1.bf16.msra.mxu0 0
        %2520 = vmatprep.subr.bf16.mxu0 0
        %2521 = vmatpush1.bf16.msra.mxu0 %v2505
        %2522 = vmatprep.subr.bf16.mxu0 0
        %2523 = vmatpush1.bf16.msra.mxu0 %v2504
        %2524 = vmatprep.subr.bf16.mxu0 0
        %2525 = vmatpush2.bf16.msra.mxu0 0
        %2526 = vmatprep.subr.bf16.mxu0 0
        %2527 = vmatpush2.bf16.msra.mxu0 0
        %2528 = vmatprep.subr.bf16.mxu0 0
        %2529 = vmatpush2.bf16.msra.mxu0 0
        %2530 = vmatprep.subr.bf16.mxu0 0
        %2531 = vmatpush2.bf16.msra.mxu0 0
        %2532 = vmatprep.subr.bf16.mxu0 0
        %2533 = vmatpush2.bf16.msra.mxu0 0
        %2534 = vmatprep.subr.bf16.mxu0 0
        %2535 = vmatpush2.bf16.msra.mxu0 0
        %2536 = vmatprep.subr.bf16.mxu0 0
        %2537 = vmatpush2.bf16.msra.mxu0 0
        %2538 = vmatprep.subr.bf16.mxu0 0
        %2539 = vmatpush2.bf16.msra.mxu0 0
        %2540 = vmatprep.mubr.bf16.mxu0 0
        %2541 = vmatmul.mubr.bf16.gmra.mxu0 %v2402
        %v2542 = vpop.f32.mrf.mxu0
        %v2543 = vadd.f32 0.0, %v2542
        %v2544 = vpop.f32.mrf.mxu0
        %v2545 = vpop.f32.mrf.mxu0
        %v2546 = vpop.f32.mrf.mxu0
        %2547 = vdwg.mxu0
        %v2548 = vpack.c.bf16 %v2439, %v2439
        %v2549 = vpack.c.bf16 %v2491, %v2491
        %v2551 = vsel %vm778, %v2548, 0
        %v2554 = vsel %vm778, %v2549, 0
        %2556 = vmatprep.subr.bf16.mxu0 0
        %2557 = vmatpush1.bf16.xpose.msra.mxu0 0
        %2558 = vmatprep.subr.bf16.mxu0 0
        %2559 = vmatpush1.bf16.xpose.msra.mxu0 0
        %2560 = vmatprep.subr.bf16.mxu0 0
        %2561 = vmatpush1.bf16.xpose.msra.mxu0 0
        %2562 = vmatprep.subr.bf16.mxu0 0
        %2563 = vmatpush1.bf16.xpose.msra.mxu0 0
        %2564 = vmatprep.subr.bf16.mxu0 0
        %2565 = vmatpush1.bf16.xpose.msra.mxu0 0
        %2566 = vmatprep.subr.bf16.mxu0 0
        %2567 = vmatpush1.bf16.xpose.msra.mxu0 0
        %2568 = vmatprep.subr.bf16.mxu0 0
        %2569 = vmatpush1.bf16.xpose.msra.mxu0 0
        %2570 = vmatprep.subr.bf16.mxu0 0
        %2571 = vmatpush1.bf16.xpose.msra.mxu0 %v2554
        %2572 = vmatprep.subr.bf16.mxu0 0
        %2573 = vmatpush2.bf16.xpose.msra.mxu0 0
        %2574 = vmatprep.subr.bf16.mxu0 0
        %2575 = vmatpush2.bf16.xpose.msra.mxu0 0
        %2576 = vmatprep.subr.bf16.mxu0 0
        %2577 = vmatpush2.bf16.xpose.msra.mxu0 0
        %2578 = vmatprep.subr.bf16.mxu0 0
        %2579 = vmatpush2.bf16.xpose.msra.mxu0 0
        %2580 = vmatprep.subr.bf16.mxu0 0
        %2581 = vmatpush2.bf16.xpose.msra.mxu0 0
        %2582 = vmatprep.subr.bf16.mxu0 0
        %2583 = vmatpush2.bf16.xpose.msra.mxu0 0
        %2584 = vmatprep.subr.bf16.mxu0 0
        %2585 = vmatpush2.bf16.xpose.msra.mxu0 0
        %2586 = vmatprep.subr.bf16.mxu0 0
        %2587 = vmatpush2.bf16.xpose.msra.mxu0 0
        %2588 = vmatprep.mubr.bf16.mxu0 0
        %2589 = vmatmul.mubr.bf16.gmra.mxu0 %v2551
        %v2590 = vpop.f32.mrf.mxu0
        %v2591 = vadd.f32 0.0, %v2590
        %v2592 = vpop.f32.mrf.mxu0
        %v2593 = vpop.f32.mrf.mxu0
        %v2594 = vpop.f32.mrf.mxu0
        %2595 = vdwg.mxu0
        %v2596 = vmul.f32 %v2591, 0.17677669
        %v2597 = vsel %vm975, %v2596, -inf
        %2598 = vmax.xlane.f32.xlu0 %v2597
        %v2599 = vpop.xlane.xlu0 %2598
        %v2600 = vsub.f32 %v2596, %v2599
        %v2601 = vmul.f32 %v2600, 1.442695
        %v2602 = vpow.pop %v2601
        %v2603 = vsel %vm975, %v2602, 0.0
        %2604 = vadd.xlane.f32.xlu0 %v2603
        %v2605 = vpop.xlane.xlu0 %2604
        %v2606 = vrcp.pop %v2605
        %v2607 = vmul.f32 %v2602, %v2606
        %v2608 = vpack.c.bf16 %v2607, %v2607
        %v2609 = vpack.c.bf16 %v2543, %v2543
        %v2611 = vsel %vm975, %v2608, 0
        %v2614 = vsel %vm992, %v2609, 0
        %2616 = vmatprep.subr.bf16.mxu0 0
        %2617 = vmatpush1.bf16.msra.mxu0 0
        %2618 = vmatprep.subr.bf16.mxu0 0
        %2619 = vmatpush1.bf16.msra.mxu0 0
        %2620 = vmatprep.subr.bf16.mxu0 0
        %2621 = vmatpush1.bf16.msra.mxu0 0
        %2622 = vmatprep.subr.bf16.mxu0 0
        %2623 = vmatpush1.bf16.msra.mxu0 0
        %2624 = vmatprep.subr.bf16.mxu0 0
        %2625 = vmatpush1.bf16.msra.mxu0 0
        %2626 = vmatprep.subr.bf16.mxu0 0
        %2627 = vmatpush1.bf16.msra.mxu0 0
        %2628 = vmatprep.subr.bf16.mxu0 0
        %2629 = vmatpush1.bf16.msra.mxu0 0
        %2630 = vmatprep.subr.bf16.mxu0 0
        %2631 = vmatpush1.bf16.msra.mxu0 %v2614
        %2632 = vmatprep.subr.bf16.mxu0 0
        %2633 = vmatpush2.bf16.msra.mxu0 0
        %2634 = vmatprep.subr.bf16.mxu0 0
        %2635 = vmatpush2.bf16.msra.mxu0 0
        %2636 = vmatprep.subr.bf16.mxu0 0
        %2637 = vmatpush2.bf16.msra.mxu0 0
        %2638 = vmatprep.subr.bf16.mxu0 0
        %2639 = vmatpush2.bf16.msra.mxu0 0
        %2640 = vmatprep.subr.bf16.mxu0 0
        %2641 = vmatpush2.bf16.msra.mxu0 0
        %2642 = vmatprep.subr.bf16.mxu0 0
        %2643 = vmatpush2.bf16.msra.mxu0 0
        %2644 = vmatprep.subr.bf16.mxu0 0
        %2645 = vmatpush2.bf16.msra.mxu0 0
        %2646 = vmatprep.subr.bf16.mxu0 0
        %2647 = vmatpush2.bf16.msra.mxu0 0
        %2648 = vmatprep.mubr.bf16.mxu0 0
        %2649 = vmatmul.mubr.bf16.gmra.mxu0 %v2611
        %v2650 = vpop.f32.mrf.mxu0
        %v2651 = vadd.f32 0.0, %v2650
        %v2652 = vpop.f32.mrf.mxu0
        %v2653 = vpop.f32.mrf.mxu0
        %v2654 = vpop.f32.mrf.mxu0
        %2655 = vdwg.mxu0
        %v2656 = vpack.c.bf16 %v2651, %v2651
        %2658 = vrot.lane.b32.xlu0 %v2356, 96
        %v2659 = vpop.permute.xlu0 %2658
        %v2661 = vsel %vm778, %v2659, 0
        %2663 = vmatprep.subr.bf16.mxu0 0
        %2664 = vmatpush1.bf16.msra.mxu0 0
        %2665 = vmatprep.subr.bf16.mxu0 0
        %2666 = vmatpush1.bf16.msra.mxu0 0
        %2667 = vmatprep.subr.bf16.mxu0 0
        %2668 = vmatpush1.bf16.msra.mxu0 0
        %2669 = vmatprep.subr.bf16.mxu0 0
        %2670 = vmatpush1.bf16.msra.mxu0 0
        %2671 = vmatprep.subr.bf16.mxu0 0
        %2672 = vmatpush1.bf16.msra.mxu0 0
        %2673 = vmatprep.subr.bf16.mxu0 0
        %2674 = vmatpush1.bf16.msra.mxu0 0
        %2675 = vmatprep.subr.bf16.mxu0 0
        %2676 = vmatpush1.bf16.msra.mxu0 %v2398
        %2677 = vmatprep.subr.bf16.mxu0 0
        %2678 = vmatpush1.bf16.msra.mxu0 %v2397
        %2679 = vmatprep.subr.bf16.mxu0 0
        %2680 = vmatpush2.bf16.msra.mxu0 0
        %2681 = vmatprep.subr.bf16.mxu0 0
        %2682 = vmatpush2.bf16.msra.mxu0 0
        %2683 = vmatprep.subr.bf16.mxu0 0
        %2684 = vmatpush2.bf16.msra.mxu0 0
        %2685 = vmatprep.subr.bf16.mxu0 0
        %2686 = vmatpush2.bf16.msra.mxu0 0
        %2687 = vmatprep.subr.bf16.mxu0 0
        %2688 = vmatpush2.bf16.msra.mxu0 0
        %2689 = vmatprep.subr.bf16.mxu0 0
        %2690 = vmatpush2.bf16.msra.mxu0 0
        %2691 = vmatprep.subr.bf16.mxu0 0
        %2692 = vmatpush2.bf16.msra.mxu0 0
        %2693 = vmatprep.subr.bf16.mxu0 0
        %2694 = vmatpush2.bf16.msra.mxu0 0
        %2695 = vmatprep.mubr.bf16.mxu0 0
        %2696 = vmatmul.mubr.bf16.gmra.mxu0 %v2661
        %v2697 = vpop.f32.mrf.mxu0
        %v2698 = vadd.f32 0.0, %v2697
        %v2699 = vpop.f32.mrf.mxu0
        %v2700 = vpop.f32.mrf.mxu0
        %v2701 = vpop.f32.mrf.mxu0
        %2702 = vdwg.mxu0
        %2703 = vmatprep.subr.bf16.mxu0 0
        %2704 = vmatpush1.bf16.msra.mxu0 0
        %2705 = vmatprep.subr.bf16.mxu0 0
        %2706 = vmatpush1.bf16.msra.mxu0 0
        %2707 = vmatprep.subr.bf16.mxu0 0
        %2708 = vmatpush1.bf16.msra.mxu0 0
        %2709 = vmatprep.subr.bf16.mxu0 0
        %2710 = vmatpush1.bf16.msra.mxu0 0
        %2711 = vmatprep.subr.bf16.mxu0 0
        %2712 = vmatpush1.bf16.msra.mxu0 0
        %2713 = vmatprep.subr.bf16.mxu0 0
        %2714 = vmatpush1.bf16.msra.mxu0 0
        %2715 = vmatprep.subr.bf16.mxu0 0
        %2716 = vmatpush1.bf16.msra.mxu0 %v2453
        %2717 = vmatprep.subr.bf16.mxu0 0
        %2718 = vmatpush1.bf16.msra.mxu0 %v2452
        %2719 = vmatprep.subr.bf16.mxu0 0
        %2720 = vmatpush2.bf16.msra.mxu0 0
        %2721 = vmatprep.subr.bf16.mxu0 0
        %2722 = vmatpush2.bf16.msra.mxu0 0
        %2723 = vmatprep.subr.bf16.mxu0 0
        %2724 = vmatpush2.bf16.msra.mxu0 0
        %2725 = vmatprep.subr.bf16.mxu0 0
        %2726 = vmatpush2.bf16.msra.mxu0 0
        %2727 = vmatprep.subr.bf16.mxu0 0
        %2728 = vmatpush2.bf16.msra.mxu0 0
        %2729 = vmatprep.subr.bf16.mxu0 0
        %2730 = vmatpush2.bf16.msra.mxu0 0
        %2731 = vmatprep.subr.bf16.mxu0 0
        %2732 = vmatpush2.bf16.msra.mxu0 0
        %2733 = vmatprep.subr.bf16.mxu0 0
        %2734 = vmatpush2.bf16.msra.mxu0 0
        %2735 = vmatprep.mubr.bf16.mxu0 0
        %2736 = vmatmul.mubr.bf16.gmra.mxu0 %v2661
        %v2737 = vpop.f32.mrf.mxu0
        %v2738 = vadd.f32 0.0, %v2737
        %v2739 = vpop.f32.mrf.mxu0
        %v2740 = vpop.f32.mrf.mxu0
        %v2741 = vpop.f32.mrf.mxu0
        %2742 = vdwg.mxu0
        %2743 = vmatprep.subr.bf16.mxu0 0
        %2744 = vmatpush1.bf16.msra.mxu0 0
        %2745 = vmatprep.subr.bf16.mxu0 0
        %2746 = vmatpush1.bf16.msra.mxu0 0
        %2747 = vmatprep.subr.bf16.mxu0 0
        %2748 = vmatpush1.bf16.msra.mxu0 0
        %2749 = vmatprep.subr.bf16.mxu0 0
        %2750 = vmatpush1.bf16.msra.mxu0 0
        %2751 = vmatprep.subr.bf16.mxu0 0
        %2752 = vmatpush1.bf16.msra.mxu0 0
        %2753 = vmatprep.subr.bf16.mxu0 0
        %2754 = vmatpush1.bf16.msra.mxu0 0
        %2755 = vmatprep.subr.bf16.mxu0 0
        %2756 = vmatpush1.bf16.msra.mxu0 %v2505
        %2757 = vmatprep.subr.bf16.mxu0 0
        %2758 = vmatpush1.bf16.msra.mxu0 %v2504
        %2759 = vmatprep.subr.bf16.mxu0 0
        %2760 = vmatpush2.bf16.msra.mxu0 0
        %2761 = vmatprep.subr.bf16.mxu0 0
        %2762 = vmatpush2.bf16.msra.mxu0 0
        %2763 = vmatprep.subr.bf16.mxu0 0
        %2764 = vmatpush2.bf16.msra.mxu0 0
        %2765 = vmatprep.subr.bf16.mxu0 0
        %2766 = vmatpush2.bf16.msra.mxu0 0
        %2767 = vmatprep.subr.bf16.mxu0 0
        %2768 = vmatpush2.bf16.msra.mxu0 0
        %2769 = vmatprep.subr.bf16.mxu0 0
        %2770 = vmatpush2.bf16.msra.mxu0 0
        %2771 = vmatprep.subr.bf16.mxu0 0
        %2772 = vmatpush2.bf16.msra.mxu0 0
        %2773 = vmatprep.subr.bf16.mxu0 0
        %2774 = vmatpush2.bf16.msra.mxu0 0
        %2775 = vmatprep.mubr.bf16.mxu0 0
        %2776 = vmatmul.mubr.bf16.gmra.mxu0 %v2661
        %v2777 = vpop.f32.mrf.mxu0
        %v2778 = vadd.f32 0.0, %v2777
        %v2779 = vpop.f32.mrf.mxu0
        %v2780 = vpop.f32.mrf.mxu0
        %v2781 = vpop.f32.mrf.mxu0
        %2782 = vdwg.mxu0
        %v2783 = vpack.c.bf16 %v2698, %v2698
        %v2784 = vpack.c.bf16 %v2738, %v2738
        %v2786 = vsel %vm778, %v2783, 0
        %v2789 = vsel %vm778, %v2784, 0
        %2791 = vmatprep.subr.bf16.mxu0 0
        %2792 = vmatpush1.bf16.xpose.msra.mxu0 0
        %2793 = vmatprep.subr.bf16.mxu0 0
        %2794 = vmatpush1.bf16.xpose.msra.mxu0 0
        %2795 = vmatprep.subr.bf16.mxu0 0
        %2796 = vmatpush1.bf16.xpose.msra.mxu0 0
        %2797 = vmatprep.subr.bf16.mxu0 0
        %2798 = vmatpush1.bf16.xpose.msra.mxu0 0
        %2799 = vmatprep.subr.bf16.mxu0 0
        %2800 = vmatpush1.bf16.xpose.msra.mxu0 0
        %2801 = vmatprep.subr.bf16.mxu0 0
        %2802 = vmatpush1.bf16.xpose.msra.mxu0 0
        %2803 = vmatprep.subr.bf16.mxu0 0
        %2804 = vmatpush1.bf16.xpose.msra.mxu0 0
        %2805 = vmatprep.subr.bf16.mxu0 0
        %2806 = vmatpush1.bf16.xpose.msra.mxu0 %v2789
        %2807 = vmatprep.subr.bf16.mxu0 0
        %2808 = vmatpush2.bf16.xpose.msra.mxu0 0
        %2809 = vmatprep.subr.bf16.mxu0 0
        %2810 = vmatpush2.bf16.xpose.msra.mxu0 0
        %2811 = vmatprep.subr.bf16.mxu0 0
        %2812 = vmatpush2.bf16.xpose.msra.mxu0 0
        %2813 = vmatprep.subr.bf16.mxu0 0
        %2814 = vmatpush2.bf16.xpose.msra.mxu0 0
        %2815 = vmatprep.subr.bf16.mxu0 0
        %2816 = vmatpush2.bf16.xpose.msra.mxu0 0
        %2817 = vmatprep.subr.bf16.mxu0 0
        %2818 = vmatpush2.bf16.xpose.msra.mxu0 0
        %2819 = vmatprep.subr.bf16.mxu0 0
        %2820 = vmatpush2.bf16.xpose.msra.mxu0 0
        %2821 = vmatprep.subr.bf16.mxu0 0
        %2822 = vmatpush2.bf16.xpose.msra.mxu0 0
        %2823 = vmatprep.mubr.bf16.mxu0 0
        %2824 = vmatmul.mubr.bf16.gmra.mxu0 %v2786
        %v2825 = vpop.f32.mrf.mxu0
        %v2826 = vadd.f32 0.0, %v2825
        %v2827 = vpop.f32.mrf.mxu0
        %v2828 = vpop.f32.mrf.mxu0
        %v2829 = vpop.f32.mrf.mxu0
        %2830 = vdwg.mxu0
        %v2831 = vmul.f32 %v2826, 0.17677669
        %v2832 = vsel %vm975, %v2831, -inf
        %2833 = vmax.xlane.f32.xlu0 %v2832
        %v2834 = vpop.xlane.xlu0 %2833
        %v2835 = vsub.f32 %v2831, %v2834
        %v2836 = vmul.f32 %v2835, 1.442695
        %v2837 = vpow.pop %v2836
        %v2838 = vsel %vm975, %v2837, 0.0
        %2839 = vadd.xlane.f32.xlu0 %v2838
        %v2840 = vpop.xlane.xlu0 %2839
        %v2841 = vrcp.pop %v2840
        %v2842 = vmul.f32 %v2837, %v2841
        %v2843 = vpack.c.bf16 %v2842, %v2842
        %v2844 = vpack.c.bf16 %v2778, %v2778
        %v2846 = vsel %vm975, %v2843, 0
        %v2849 = vsel %vm992, %v2844, 0
        %2851 = vmatprep.subr.bf16.mxu0 0
        %2852 = vmatpush1.bf16.msra.mxu0 0
        %2853 = vmatprep.subr.bf16.mxu0 0
        %2854 = vmatpush1.bf16.msra.mxu0 0
        %2855 = vmatprep.subr.bf16.mxu0 0
        %2856 = vmatpush1.bf16.msra.mxu0 0
        %2857 = vmatprep.subr.bf16.mxu0 0
        %2858 = vmatpush1.bf16.msra.mxu0 0
        %2859 = vmatprep.subr.bf16.mxu0 0
        %2860 = vmatpush1.bf16.msra.mxu0 0
        %2861 = vmatprep.subr.bf16.mxu0 0
        %2862 = vmatpush1.bf16.msra.mxu0 0
        %2863 = vmatprep.subr.bf16.mxu0 0
        %2864 = vmatpush1.bf16.msra.mxu0 0
        %2865 = vmatprep.subr.bf16.mxu0 0
        %2866 = vmatpush1.bf16.msra.mxu0 %v2849
        %2867 = vmatprep.subr.bf16.mxu0 0
        %2868 = vmatpush2.bf16.msra.mxu0 0
        %2869 = vmatprep.subr.bf16.mxu0 0
        %2870 = vmatpush2.bf16.msra.mxu0 0
        %2871 = vmatprep.subr.bf16.mxu0 0
        %2872 = vmatpush2.bf16.msra.mxu0 0
        %2873 = vmatprep.subr.bf16.mxu0 0
        %2874 = vmatpush2.bf16.msra.mxu0 0
        %2875 = vmatprep.subr.bf16.mxu0 0
        %2876 = vmatpush2.bf16.msra.mxu0 0
        %2877 = vmatprep.subr.bf16.mxu0 0
        %2878 = vmatpush2.bf16.msra.mxu0 0
        %2879 = vmatprep.subr.bf16.mxu0 0
        %2880 = vmatpush2.bf16.msra.mxu0 0
        %2881 = vmatprep.subr.bf16.mxu0 0
        %2882 = vmatpush2.bf16.msra.mxu0 0
        %2883 = vmatprep.mubr.bf16.mxu0 0
        %2884 = vmatmul.mubr.bf16.gmra.mxu0 %v2846
        %v2885 = vpop.f32.mrf.mxu0
        %v2886 = vadd.f32 0.0, %v2885
        %v2887 = vpop.f32.mrf.mxu0
        %v2888 = vpop.f32.mrf.mxu0
        %v2889 = vpop.f32.mrf.mxu0
        %2890 = vdwg.mxu0
        %v2891 = vpack.c.bf16 %v2886, %v2886
        %v2896 = vunpack.c.l.b16 %v2377
        %v2897 = vunpack.c.l.b16 %v2378
        %v2898 = vunpack.c.l.b16 %v2379
        %v2899 = vunpack.c.l.b16 %v2380
        %v2900 = vpack.c.b16 %v2897, %v2896
        %v2901 = vpack.c.b16 %v2899, %v2898
        %v2905 = vsel %vm778, %v2891, 0
        %2907 = vmatprep.subr.bf16.mxu0 0
        %2908 = vmatpush1.bf16.msra.mxu0 0
        %2909 = vmatprep.subr.bf16.mxu0 0
        %2910 = vmatpush1.bf16.msra.mxu0 0
        %2911 = vmatprep.subr.bf16.mxu0 0
        %2912 = vmatpush1.bf16.msra.mxu0 0
        %2913 = vmatprep.subr.bf16.mxu0 0
        %2914 = vmatpush1.bf16.msra.mxu0 0
        %2915 = vmatprep.subr.bf16.mxu0 0
        %2916 = vmatpush1.bf16.msra.mxu0 0
        %2917 = vmatprep.subr.bf16.mxu0 0
        %2918 = vmatpush1.bf16.msra.mxu0 0
        %2919 = vmatprep.subr.bf16.mxu0 0
        %2920 = vmatpush1.bf16.msra.mxu0 %v2901
        %2921 = vmatprep.subr.bf16.mxu0 0
        %2922 = vmatpush1.bf16.msra.mxu0 %v2900
        %2923 = vmatprep.subr.bf16.mxu0 0
        %2924 = vmatpush2.bf16.msra.mxu0 0
        %2925 = vmatprep.subr.bf16.mxu0 0
        %2926 = vmatpush2.bf16.msra.mxu0 0
        %2927 = vmatprep.subr.bf16.mxu0 0
        %2928 = vmatpush2.bf16.msra.mxu0 0
        %2929 = vmatprep.subr.bf16.mxu0 0
        %2930 = vmatpush2.bf16.msra.mxu0 0
        %2931 = vmatprep.subr.bf16.mxu0 0
        %2932 = vmatpush2.bf16.msra.mxu0 0
        %2933 = vmatprep.subr.bf16.mxu0 0
        %2934 = vmatpush2.bf16.msra.mxu0 0
        %2935 = vmatprep.subr.bf16.mxu0 0
        %2936 = vmatpush2.bf16.msra.mxu0 0
        %2937 = vmatprep.subr.bf16.mxu0 0
        %2938 = vmatpush2.bf16.msra.mxu0 0
        %2939 = vmatprep.mubr.bf16.mxu0 0
        %2940 = vmatmul.mubr.bf16.gmra.mxu0 %v2905
        %v2941 = vpop.f32.mrf.mxu0
        %v2942 = vadd.f32 0.0, %v2941
        %v2943 = vpop.f32.mrf.mxu0
        %v2944 = vpop.f32.mrf.mxu0
        %v2945 = vpop.f32.mrf.mxu0
        %2946 = vdwg.mxu0
        %v2951 = vunpack.c.l.b16 %v2373
        %v2952 = vunpack.c.l.b16 %v2374
        %v2953 = vunpack.c.l.b16 %v2375
        %v2954 = vunpack.c.l.b16 %v2376
        %v2955 = vpack.c.b16 %v2952, %v2951
        %v2956 = vpack.c.b16 %v2954, %v2953
        %v2960 = vsel %vm778, %v2656, 0
        %2962 = vmatprep.subr.bf16.mxu0 0
        %2963 = vmatpush1.bf16.msra.mxu0 0
        %2964 = vmatprep.subr.bf16.mxu0 0
        %2965 = vmatpush1.bf16.msra.mxu0 0
        %2966 = vmatprep.subr.bf16.mxu0 0
        %2967 = vmatpush1.bf16.msra.mxu0 0
        %2968 = vmatprep.subr.bf16.mxu0 0
        %2969 = vmatpush1.bf16.msra.mxu0 0
        %2970 = vmatprep.subr.bf16.mxu0 0
        %2971 = vmatpush1.bf16.msra.mxu0 0
        %2972 = vmatprep.subr.bf16.mxu0 0
        %2973 = vmatpush1.bf16.msra.mxu0 0
        %2974 = vmatprep.subr.bf16.mxu0 0
        %2975 = vmatpush1.bf16.msra.mxu0 %v2956
        %2976 = vmatprep.subr.bf16.mxu0 0
        %2977 = vmatpush1.bf16.msra.mxu0 %v2955
        %2978 = vmatprep.subr.bf16.mxu0 0
        %2979 = vmatpush2.bf16.msra.mxu0 0
        %2980 = vmatprep.subr.bf16.mxu0 0
        %2981 = vmatpush2.bf16.msra.mxu0 0
        %2982 = vmatprep.subr.bf16.mxu0 0
        %2983 = vmatpush2.bf16.msra.mxu0 0
        %2984 = vmatprep.subr.bf16.mxu0 0
        %2985 = vmatpush2.bf16.msra.mxu0 0
        %2986 = vmatprep.subr.bf16.mxu0 0
        %2987 = vmatpush2.bf16.msra.mxu0 0
        %2988 = vmatprep.subr.bf16.mxu0 0
        %2989 = vmatpush2.bf16.msra.mxu0 0
        %2990 = vmatprep.subr.bf16.mxu0 0
        %2991 = vmatpush2.bf16.msra.mxu0 0
        %2992 = vmatprep.subr.bf16.mxu0 0
        %2993 = vmatpush2.bf16.msra.mxu0 0
        %2994 = vmatprep.mubr.bf16.mxu0 0
        %2995 = vmatmul.mubr.bf16.gmra.mxu0 %v2960
        %v2996 = vpop.f32.mrf.mxu0
        %v2997 = vadd.f32 %v2942, %v2996
        %v2998 = vpop.f32.mrf.mxu0
        %v2999 = vpop.f32.mrf.mxu0
        %v3000 = vpop.f32.mrf.mxu0
        %3001 = vdwg.mxu0
        %3002 = vrot.lane.b32.xlu0 %v2356, 64
        %v3003 = vpop.permute.xlu0 %3002
        %v3005 = vsel %vm778, %v3003, 0
        %3007 = vmatprep.subr.bf16.mxu0 0
        %3008 = vmatpush1.bf16.msra.mxu0 0
        %3009 = vmatprep.subr.bf16.mxu0 0
        %3010 = vmatpush1.bf16.msra.mxu0 0
        %3011 = vmatprep.subr.bf16.mxu0 0
        %3012 = vmatpush1.bf16.msra.mxu0 0
        %3013 = vmatprep.subr.bf16.mxu0 0
        %3014 = vmatpush1.bf16.msra.mxu0 0
        %3015 = vmatprep.subr.bf16.mxu0 0
        %3016 = vmatpush1.bf16.msra.mxu0 0
        %3017 = vmatprep.subr.bf16.mxu0 0
        %3018 = vmatpush1.bf16.msra.mxu0 0
        %3019 = vmatprep.subr.bf16.mxu0 0
        %3020 = vmatpush1.bf16.msra.mxu0 %v2398
        %3021 = vmatprep.subr.bf16.mxu0 0
        %3022 = vmatpush1.bf16.msra.mxu0 %v2397
        %3023 = vmatprep.subr.bf16.mxu0 0
        %3024 = vmatpush2.bf16.msra.mxu0 0
        %3025 = vmatprep.subr.bf16.mxu0 0
        %3026 = vmatpush2.bf16.msra.mxu0 0
        %3027 = vmatprep.subr.bf16.mxu0 0
        %3028 = vmatpush2.bf16.msra.mxu0 0
        %3029 = vmatprep.subr.bf16.mxu0 0
        %3030 = vmatpush2.bf16.msra.mxu0 0
        %3031 = vmatprep.subr.bf16.mxu0 0
        %3032 = vmatpush2.bf16.msra.mxu0 0
        %3033 = vmatprep.subr.bf16.mxu0 0
        %3034 = vmatpush2.bf16.msra.mxu0 0
        %3035 = vmatprep.subr.bf16.mxu0 0
        %3036 = vmatpush2.bf16.msra.mxu0 0
        %3037 = vmatprep.subr.bf16.mxu0 0
        %3038 = vmatpush2.bf16.msra.mxu0 0
        %3039 = vmatprep.mubr.bf16.mxu0 0
        %3040 = vmatmul.mubr.bf16.gmra.mxu0 %v3005
        %v3041 = vpop.f32.mrf.mxu0
        %v3042 = vadd.f32 0.0, %v3041
        %v3043 = vpop.f32.mrf.mxu0
        %v3044 = vpop.f32.mrf.mxu0
        %v3045 = vpop.f32.mrf.mxu0
        %3046 = vdwg.mxu0
        %3047 = vmatprep.subr.bf16.mxu0 0
        %3048 = vmatpush1.bf16.msra.mxu0 0
        %3049 = vmatprep.subr.bf16.mxu0 0
        %3050 = vmatpush1.bf16.msra.mxu0 0
        %3051 = vmatprep.subr.bf16.mxu0 0
        %3052 = vmatpush1.bf16.msra.mxu0 0
        %3053 = vmatprep.subr.bf16.mxu0 0
        %3054 = vmatpush1.bf16.msra.mxu0 0
        %3055 = vmatprep.subr.bf16.mxu0 0
        %3056 = vmatpush1.bf16.msra.mxu0 0
        %3057 = vmatprep.subr.bf16.mxu0 0
        %3058 = vmatpush1.bf16.msra.mxu0 0
        %3059 = vmatprep.subr.bf16.mxu0 0
        %3060 = vmatpush1.bf16.msra.mxu0 %v2453
        %3061 = vmatprep.subr.bf16.mxu0 0
        %3062 = vmatpush1.bf16.msra.mxu0 %v2452
        %3063 = vmatprep.subr.bf16.mxu0 0
        %3064 = vmatpush2.bf16.msra.mxu0 0
        %3065 = vmatprep.subr.bf16.mxu0 0
        %3066 = vmatpush2.bf16.msra.mxu0 0
        %3067 = vmatprep.subr.bf16.mxu0 0
        %3068 = vmatpush2.bf16.msra.mxu0 0
        %3069 = vmatprep.subr.bf16.mxu0 0
        %3070 = vmatpush2.bf16.msra.mxu0 0
        %3071 = vmatprep.subr.bf16.mxu0 0
        %3072 = vmatpush2.bf16.msra.mxu0 0
        %3073 = vmatprep.subr.bf16.mxu0 0
        %3074 = vmatpush2.bf16.msra.mxu0 0
        %3075 = vmatprep.subr.bf16.mxu0 0
        %3076 = vmatpush2.bf16.msra.mxu0 0
        %3077 = vmatprep.subr.bf16.mxu0 0
        %3078 = vmatpush2.bf16.msra.mxu0 0
        %3079 = vmatprep.mubr.bf16.mxu0 0
        %3080 = vmatmul.mubr.bf16.gmra.mxu0 %v3005
        %v3081 = vpop.f32.mrf.mxu0
        %v3082 = vadd.f32 0.0, %v3081
        %v3083 = vpop.f32.mrf.mxu0
        %v3084 = vpop.f32.mrf.mxu0
        %v3085 = vpop.f32.mrf.mxu0
        %3086 = vdwg.mxu0
        %3087 = vmatprep.subr.bf16.mxu0 0
        %3088 = vmatpush1.bf16.msra.mxu0 0
        %3089 = vmatprep.subr.bf16.mxu0 0
        %3090 = vmatpush1.bf16.msra.mxu0 0
        %3091 = vmatprep.subr.bf16.mxu0 0
        %3092 = vmatpush1.bf16.msra.mxu0 0
        %3093 = vmatprep.subr.bf16.mxu0 0
        %3094 = vmatpush1.bf16.msra.mxu0 0
        %3095 = vmatprep.subr.bf16.mxu0 0
        %3096 = vmatpush1.bf16.msra.mxu0 0
        %3097 = vmatprep.subr.bf16.mxu0 0
        %3098 = vmatpush1.bf16.msra.mxu0 0
        %3099 = vmatprep.subr.bf16.mxu0 0
        %3100 = vmatpush1.bf16.msra.mxu0 %v2505
        %3101 = vmatprep.subr.bf16.mxu0 0
        %3102 = vmatpush1.bf16.msra.mxu0 %v2504
        %3103 = vmatprep.subr.bf16.mxu0 0
        %3104 = vmatpush2.bf16.msra.mxu0 0
        %3105 = vmatprep.subr.bf16.mxu0 0
        %3106 = vmatpush2.bf16.msra.mxu0 0
        %3107 = vmatprep.subr.bf16.mxu0 0
        %3108 = vmatpush2.bf16.msra.mxu0 0
        %3109 = vmatprep.subr.bf16.mxu0 0
        %3110 = vmatpush2.bf16.msra.mxu0 0
        %3111 = vmatprep.subr.bf16.mxu0 0
        %3112 = vmatpush2.bf16.msra.mxu0 0
        %3113 = vmatprep.subr.bf16.mxu0 0
        %3114 = vmatpush2.bf16.msra.mxu0 0
        %3115 = vmatprep.subr.bf16.mxu0 0
        %3116 = vmatpush2.bf16.msra.mxu0 0
        %3117 = vmatprep.subr.bf16.mxu0 0
        %3118 = vmatpush2.bf16.msra.mxu0 0
        %3119 = vmatprep.mubr.bf16.mxu0 0
        %3120 = vmatmul.mubr.bf16.gmra.mxu0 %v3005
        %v3121 = vpop.f32.mrf.mxu0
        %v3122 = vadd.f32 0.0, %v3121
        %v3123 = vpop.f32.mrf.mxu0
        %v3124 = vpop.f32.mrf.mxu0
        %v3125 = vpop.f32.mrf.mxu0
        %3126 = vdwg.mxu0
        %v3127 = vpack.c.bf16 %v3042, %v3042
        %v3128 = vpack.c.bf16 %v3082, %v3082
        %v3130 = vsel %vm778, %v3127, 0
        %v3133 = vsel %vm778, %v3128, 0
        %3135 = vmatprep.subr.bf16.mxu0 0
        %3136 = vmatpush1.bf16.xpose.msra.mxu0 0
        %3137 = vmatprep.subr.bf16.mxu0 0
        %3138 = vmatpush1.bf16.xpose.msra.mxu0 0
        %3139 = vmatprep.subr.bf16.mxu0 0
        %3140 = vmatpush1.bf16.xpose.msra.mxu0 0
        %3141 = vmatprep.subr.bf16.mxu0 0
        %3142 = vmatpush1.bf16.xpose.msra.mxu0 0
        %3143 = vmatprep.subr.bf16.mxu0 0
        %3144 = vmatpush1.bf16.xpose.msra.mxu0 0
        %3145 = vmatprep.subr.bf16.mxu0 0
        %3146 = vmatpush1.bf16.xpose.msra.mxu0 0
        %3147 = vmatprep.subr.bf16.mxu0 0
        %3148 = vmatpush1.bf16.xpose.msra.mxu0 0
        %3149 = vmatprep.subr.bf16.mxu0 0
        %3150 = vmatpush1.bf16.xpose.msra.mxu0 %v3133
        %3151 = vmatprep.subr.bf16.mxu0 0
        %3152 = vmatpush2.bf16.xpose.msra.mxu0 0
        %3153 = vmatprep.subr.bf16.mxu0 0
        %3154 = vmatpush2.bf16.xpose.msra.mxu0 0
        %3155 = vmatprep.subr.bf16.mxu0 0
        %3156 = vmatpush2.bf16.xpose.msra.mxu0 0
        %3157 = vmatprep.subr.bf16.mxu0 0
        %3158 = vmatpush2.bf16.xpose.msra.mxu0 0
        %3159 = vmatprep.subr.bf16.mxu0 0
        %3160 = vmatpush2.bf16.xpose.msra.mxu0 0
        %3161 = vmatprep.subr.bf16.mxu0 0
        %3162 = vmatpush2.bf16.xpose.msra.mxu0 0
        %3163 = vmatprep.subr.bf16.mxu0 0
        %3164 = vmatpush2.bf16.xpose.msra.mxu0 0
        %3165 = vmatprep.subr.bf16.mxu0 0
        %3166 = vmatpush2.bf16.xpose.msra.mxu0 0
        %3167 = vmatprep.mubr.bf16.mxu0 0
        %3168 = vmatmul.mubr.bf16.gmra.mxu0 %v3130
        %v3169 = vpop.f32.mrf.mxu0
        %v3170 = vadd.f32 0.0, %v3169
        %v3171 = vpop.f32.mrf.mxu0
        %v3172 = vpop.f32.mrf.mxu0
        %v3173 = vpop.f32.mrf.mxu0
        %3174 = vdwg.mxu0
        %v3175 = vmul.f32 %v3170, 0.17677669
        %v3176 = vsel %vm975, %v3175, -inf
        %3177 = vmax.xlane.f32.xlu0 %v3176
        %v3178 = vpop.xlane.xlu0 %3177
        %v3179 = vsub.f32 %v3175, %v3178
        %v3180 = vmul.f32 %v3179, 1.442695
        %v3181 = vpow.pop %v3180
        %v3182 = vsel %vm975, %v3181, 0.0
        %3183 = vadd.xlane.f32.xlu0 %v3182
        %v3184 = vpop.xlane.xlu0 %3183
        %v3185 = vrcp.pop %v3184
        %v3186 = vmul.f32 %v3181, %v3185
        %v3187 = vpack.c.bf16 %v3186, %v3186
        %v3188 = vpack.c.bf16 %v3122, %v3122
        %v3190 = vsel %vm975, %v3187, 0
        %v3193 = vsel %vm992, %v3188, 0
        %3195 = vmatprep.subr.bf16.mxu0 0
        %3196 = vmatpush1.bf16.msra.mxu0 0
        %3197 = vmatprep.subr.bf16.mxu0 0
        %3198 = vmatpush1.bf16.msra.mxu0 0
        %3199 = vmatprep.subr.bf16.mxu0 0
        %3200 = vmatpush1.bf16.msra.mxu0 0
        %3201 = vmatprep.subr.bf16.mxu0 0
        %3202 = vmatpush1.bf16.msra.mxu0 0
        %3203 = vmatprep.subr.bf16.mxu0 0
        %3204 = vmatpush1.bf16.msra.mxu0 0
        %3205 = vmatprep.subr.bf16.mxu0 0
        %3206 = vmatpush1.bf16.msra.mxu0 0
        %3207 = vmatprep.subr.bf16.mxu0 0
        %3208 = vmatpush1.bf16.msra.mxu0 0
        %3209 = vmatprep.subr.bf16.mxu0 0
        %3210 = vmatpush1.bf16.msra.mxu0 %v3193
        %3211 = vmatprep.subr.bf16.mxu0 0
        %3212 = vmatpush2.bf16.msra.mxu0 0
        %3213 = vmatprep.subr.bf16.mxu0 0
        %3214 = vmatpush2.bf16.msra.mxu0 0
        %3215 = vmatprep.subr.bf16.mxu0 0
        %3216 = vmatpush2.bf16.msra.mxu0 0
        %3217 = vmatprep.subr.bf16.mxu0 0
        %3218 = vmatpush2.bf16.msra.mxu0 0
        %3219 = vmatprep.subr.bf16.mxu0 0
        %3220 = vmatpush2.bf16.msra.mxu0 0
        %3221 = vmatprep.subr.bf16.mxu0 0
        %3222 = vmatpush2.bf16.msra.mxu0 0
        %3223 = vmatprep.subr.bf16.mxu0 0
        %3224 = vmatpush2.bf16.msra.mxu0 0
        %3225 = vmatprep.subr.bf16.mxu0 0
        %3226 = vmatpush2.bf16.msra.mxu0 0
        %3227 = vmatprep.mubr.bf16.mxu0 0
        %3228 = vmatmul.mubr.bf16.gmra.mxu0 %v3190
        %v3229 = vpop.f32.mrf.mxu0
        %v3230 = vadd.f32 0.0, %v3229
        %v3231 = vpop.f32.mrf.mxu0
        %v3232 = vpop.f32.mrf.mxu0
        %v3233 = vpop.f32.mrf.mxu0
        %3234 = vdwg.mxu0
        %v3235 = vpack.c.bf16 %v3230, %v3230
        %v3240 = vunpack.c.l.b16 %v2381
        %v3241 = vunpack.c.l.b16 %v2382
        %v3242 = vunpack.c.l.b16 %v2383
        %v3243 = vunpack.c.l.b16 %v2384
        %v3244 = vpack.c.b16 %v3241, %v3240
        %v3245 = vpack.c.b16 %v3243, %v3242
        %v3249 = vsel %vm778, %v3235, 0
        %3251 = vmatprep.subr.bf16.mxu0 0
        %3252 = vmatpush1.bf16.msra.mxu0 0
        %3253 = vmatprep.subr.bf16.mxu0 0
        %3254 = vmatpush1.bf16.msra.mxu0 0
        %3255 = vmatprep.subr.bf16.mxu0 0
        %3256 = vmatpush1.bf16.msra.mxu0 0
        %3257 = vmatprep.subr.bf16.mxu0 0
        %3258 = vmatpush1.bf16.msra.mxu0 0
        %3259 = vmatprep.subr.bf16.mxu0 0
        %3260 = vmatpush1.bf16.msra.mxu0 0
        %3261 = vmatprep.subr.bf16.mxu0 0
        %3262 = vmatpush1.bf16.msra.mxu0 0
        %3263 = vmatprep.subr.bf16.mxu0 0
        %3264 = vmatpush1.bf16.msra.mxu0 %v3245
        %3265 = vmatprep.subr.bf16.mxu0 0
        %3266 = vmatpush1.bf16.msra.mxu0 %v3244
        %3267 = vmatprep.subr.bf16.mxu0 0
        %3268 = vmatpush2.bf16.msra.mxu0 0
        %3269 = vmatprep.subr.bf16.mxu0 0
        %3270 = vmatpush2.bf16.msra.mxu0 0
        %3271 = vmatprep.subr.bf16.mxu0 0
        %3272 = vmatpush2.bf16.msra.mxu0 0
        %3273 = vmatprep.subr.bf16.mxu0 0
        %3274 = vmatpush2.bf16.msra.mxu0 0
        %3275 = vmatprep.subr.bf16.mxu0 0
        %3276 = vmatpush2.bf16.msra.mxu0 0
        %3277 = vmatprep.subr.bf16.mxu0 0
        %3278 = vmatpush2.bf16.msra.mxu0 0
        %3279 = vmatprep.subr.bf16.mxu0 0
        %3280 = vmatpush2.bf16.msra.mxu0 0
        %3281 = vmatprep.subr.bf16.mxu0 0
        %3282 = vmatpush2.bf16.msra.mxu0 0
        %3283 = vmatprep.mubr.bf16.mxu0 0
        %3284 = vmatmul.mubr.bf16.gmra.mxu0 %v3249
        %v3285 = vpop.f32.mrf.mxu0
        %v3286 = vadd.f32 0.0, %v3285
        %v3287 = vpop.f32.mrf.mxu0
        %v3288 = vpop.f32.mrf.mxu0
        %v3289 = vpop.f32.mrf.mxu0
        %3290 = vdwg.mxu0
        %v3291 = vadd.f32 %v2997, %v3286
        %3292 = vrot.lane.b32.xlu0 %v2356, 32
        %v3293 = vpop.permute.xlu0 %3292
        %v3295 = vsel %vm778, %v3293, 0
        %3297 = vmatprep.subr.bf16.mxu0 0
        %3298 = vmatpush1.bf16.msra.mxu0 0
        %3299 = vmatprep.subr.bf16.mxu0 0
        %3300 = vmatpush1.bf16.msra.mxu0 0
        %3301 = vmatprep.subr.bf16.mxu0 0
        %3302 = vmatpush1.bf16.msra.mxu0 0
        %3303 = vmatprep.subr.bf16.mxu0 0
        %3304 = vmatpush1.bf16.msra.mxu0 0
        %3305 = vmatprep.subr.bf16.mxu0 0
        %3306 = vmatpush1.bf16.msra.mxu0 0
        %3307 = vmatprep.subr.bf16.mxu0 0
        %3308 = vmatpush1.bf16.msra.mxu0 0
        %3309 = vmatprep.subr.bf16.mxu0 0
        %3310 = vmatpush1.bf16.msra.mxu0 %v2398
        %3311 = vmatprep.subr.bf16.mxu0 0
        %3312 = vmatpush1.bf16.msra.mxu0 %v2397
        %3313 = vmatprep.subr.bf16.mxu0 0
        %3314 = vmatpush2.bf16.msra.mxu0 0
        %3315 = vmatprep.subr.bf16.mxu0 0
        %3316 = vmatpush2.bf16.msra.mxu0 0
        %3317 = vmatprep.subr.bf16.mxu0 0
        %3318 = vmatpush2.bf16.msra.mxu0 0
        %3319 = vmatprep.subr.bf16.mxu0 0
        %3320 = vmatpush2.bf16.msra.mxu0 0
        %3321 = vmatprep.subr.bf16.mxu0 0
        %3322 = vmatpush2.bf16.msra.mxu0 0
        %3323 = vmatprep.subr.bf16.mxu0 0
        %3324 = vmatpush2.bf16.msra.mxu0 0
        %3325 = vmatprep.subr.bf16.mxu0 0
        %3326 = vmatpush2.bf16.msra.mxu0 0
        %3327 = vmatprep.subr.bf16.mxu0 0
        %3328 = vmatpush2.bf16.msra.mxu0 0
        %3329 = vmatprep.mubr.bf16.mxu0 0
        %3330 = vmatmul.mubr.bf16.gmra.mxu0 %v3295
        %v3331 = vpop.f32.mrf.mxu0
        %v3332 = vadd.f32 0.0, %v3331
        %v3333 = vpop.f32.mrf.mxu0
        %v3334 = vpop.f32.mrf.mxu0
        %v3335 = vpop.f32.mrf.mxu0
        %3336 = vdwg.mxu0
        %3337 = vmatprep.subr.bf16.mxu0 0
        %3338 = vmatpush1.bf16.msra.mxu0 0
        %3339 = vmatprep.subr.bf16.mxu0 0
        %3340 = vmatpush1.bf16.msra.mxu0 0
        %3341 = vmatprep.subr.bf16.mxu0 0
        %3342 = vmatpush1.bf16.msra.mxu0 0
        %3343 = vmatprep.subr.bf16.mxu0 0
        %3344 = vmatpush1.bf16.msra.mxu0 0
        %3345 = vmatprep.subr.bf16.mxu0 0
        %3346 = vmatpush1.bf16.msra.mxu0 0
        %3347 = vmatprep.subr.bf16.mxu0 0
        %3348 = vmatpush1.bf16.msra.mxu0 0
        %3349 = vmatprep.subr.bf16.mxu0 0
        %3350 = vmatpush1.bf16.msra.mxu0 %v2453
        %3351 = vmatprep.subr.bf16.mxu0 0
        %3352 = vmatpush1.bf16.msra.mxu0 %v2452
        %3353 = vmatprep.subr.bf16.mxu0 0
        %3354 = vmatpush2.bf16.msra.mxu0 0
        %3355 = vmatprep.subr.bf16.mxu0 0
        %3356 = vmatpush2.bf16.msra.mxu0 0
        %3357 = vmatprep.subr.bf16.mxu0 0
        %3358 = vmatpush2.bf16.msra.mxu0 0
        %3359 = vmatprep.subr.bf16.mxu0 0
        %3360 = vmatpush2.bf16.msra.mxu0 0
        %3361 = vmatprep.subr.bf16.mxu0 0
        %3362 = vmatpush2.bf16.msra.mxu0 0
        %3363 = vmatprep.subr.bf16.mxu0 0
        %3364 = vmatpush2.bf16.msra.mxu0 0
        %3365 = vmatprep.subr.bf16.mxu0 0
        %3366 = vmatpush2.bf16.msra.mxu0 0
        %3367 = vmatprep.subr.bf16.mxu0 0
        %3368 = vmatpush2.bf16.msra.mxu0 0
        %3369 = vmatprep.mubr.bf16.mxu0 0
        %3370 = vmatmul.mubr.bf16.gmra.mxu0 %v3295
        %v3371 = vpop.f32.mrf.mxu0
        %v3372 = vadd.f32 0.0, %v3371
        %v3373 = vpop.f32.mrf.mxu0
        %v3374 = vpop.f32.mrf.mxu0
        %v3375 = vpop.f32.mrf.mxu0
        %3376 = vdwg.mxu0
        %3377 = vmatprep.subr.bf16.mxu0 0
        %3378 = vmatpush1.bf16.msra.mxu0 0
        %3379 = vmatprep.subr.bf16.mxu0 0
        %3380 = vmatpush1.bf16.msra.mxu0 0
        %3381 = vmatprep.subr.bf16.mxu0 0
        %3382 = vmatpush1.bf16.msra.mxu0 0
        %3383 = vmatprep.subr.bf16.mxu0 0
        %3384 = vmatpush1.bf16.msra.mxu0 0
        %3385 = vmatprep.subr.bf16.mxu0 0
        %3386 = vmatpush1.bf16.msra.mxu0 0
        %3387 = vmatprep.subr.bf16.mxu0 0
        %3388 = vmatpush1.bf16.msra.mxu0 0
        %3389 = vmatprep.subr.bf16.mxu0 0
        %3390 = vmatpush1.bf16.msra.mxu0 %v2505
        %3391 = vmatprep.subr.bf16.mxu0 0
        %3392 = vmatpush1.bf16.msra.mxu0 %v2504
        %3393 = vmatprep.subr.bf16.mxu0 0
        %3394 = vmatpush2.bf16.msra.mxu0 0
        %3395 = vmatprep.subr.bf16.mxu0 0
        %3396 = vmatpush2.bf16.msra.mxu0 0
        %3397 = vmatprep.subr.bf16.mxu0 0
        %3398 = vmatpush2.bf16.msra.mxu0 0
        %3399 = vmatprep.subr.bf16.mxu0 0
        %3400 = vmatpush2.bf16.msra.mxu0 0
        %3401 = vmatprep.subr.bf16.mxu0 0
        %3402 = vmatpush2.bf16.msra.mxu0 0
        %3403 = vmatprep.subr.bf16.mxu0 0
        %3404 = vmatpush2.bf16.msra.mxu0 0
        %3405 = vmatprep.subr.bf16.mxu0 0
        %3406 = vmatpush2.bf16.msra.mxu0 0
        %3407 = vmatprep.subr.bf16.mxu0 0
        %3408 = vmatpush2.bf16.msra.mxu0 0
        %3409 = vmatprep.mubr.bf16.mxu0 0
        %3410 = vmatmul.mubr.bf16.gmra.mxu0 %v3295
        %v3411 = vpop.f32.mrf.mxu0
        %v3412 = vadd.f32 0.0, %v3411
        %v3413 = vpop.f32.mrf.mxu0
        %v3414 = vpop.f32.mrf.mxu0
        %v3415 = vpop.f32.mrf.mxu0
        %3416 = vdwg.mxu0
        %v3417 = vpack.c.bf16 %v3332, %v3332
        %v3418 = vpack.c.bf16 %v3372, %v3372
        %v3420 = vsel %vm778, %v3417, 0
        %v3423 = vsel %vm778, %v3418, 0
        %3425 = vmatprep.subr.bf16.mxu0 0
        %3426 = vmatpush1.bf16.xpose.msra.mxu0 0
        %3427 = vmatprep.subr.bf16.mxu0 0
        %3428 = vmatpush1.bf16.xpose.msra.mxu0 0
        %3429 = vmatprep.subr.bf16.mxu0 0
        %3430 = vmatpush1.bf16.xpose.msra.mxu0 0
        %3431 = vmatprep.subr.bf16.mxu0 0
        %3432 = vmatpush1.bf16.xpose.msra.mxu0 0
        %3433 = vmatprep.subr.bf16.mxu0 0
        %3434 = vmatpush1.bf16.xpose.msra.mxu0 0
        %3435 = vmatprep.subr.bf16.mxu0 0
        %3436 = vmatpush1.bf16.xpose.msra.mxu0 0
        %3437 = vmatprep.subr.bf16.mxu0 0
        %3438 = vmatpush1.bf16.xpose.msra.mxu0 0
        %3439 = vmatprep.subr.bf16.mxu0 0
        %3440 = vmatpush1.bf16.xpose.msra.mxu0 %v3423
        %3441 = vmatprep.subr.bf16.mxu0 0
        %3442 = vmatpush2.bf16.xpose.msra.mxu0 0
        %3443 = vmatprep.subr.bf16.mxu0 0
        %3444 = vmatpush2.bf16.xpose.msra.mxu0 0
        %3445 = vmatprep.subr.bf16.mxu0 0
        %3446 = vmatpush2.bf16.xpose.msra.mxu0 0
        %3447 = vmatprep.subr.bf16.mxu0 0
        %3448 = vmatpush2.bf16.xpose.msra.mxu0 0
        %3449 = vmatprep.subr.bf16.mxu0 0
        %3450 = vmatpush2.bf16.xpose.msra.mxu0 0
        %3451 = vmatprep.subr.bf16.mxu0 0
        %3452 = vmatpush2.bf16.xpose.msra.mxu0 0
        %3453 = vmatprep.subr.bf16.mxu0 0
        %3454 = vmatpush2.bf16.xpose.msra.mxu0 0
        %3455 = vmatprep.subr.bf16.mxu0 0
        %3456 = vmatpush2.bf16.xpose.msra.mxu0 0
        %3457 = vmatprep.mubr.bf16.mxu0 0
        %3458 = vmatmul.mubr.bf16.gmra.mxu0 %v3420
        %v3459 = vpop.f32.mrf.mxu0
        %v3460 = vadd.f32 0.0, %v3459
        %v3461 = vpop.f32.mrf.mxu0
        %v3462 = vpop.f32.mrf.mxu0
        %v3463 = vpop.f32.mrf.mxu0
        %3464 = vdwg.mxu0
        %v3465 = vmul.f32 %v3460, 0.17677669
        %v3466 = vsel %vm975, %v3465, -inf
        %3467 = vmax.xlane.f32.xlu0 %v3466
        %v3468 = vpop.xlane.xlu0 %3467
        %v3469 = vsub.f32 %v3465, %v3468
        %v3470 = vmul.f32 %v3469, 1.442695
        %v3471 = vpow.pop %v3470
        %v3472 = vsel %vm975, %v3471, 0.0
        %3473 = vadd.xlane.f32.xlu0 %v3472
        %v3474 = vpop.xlane.xlu0 %3473
        %v3475 = vrcp.pop %v3474
        %v3476 = vmul.f32 %v3471, %v3475
        %v3477 = vpack.c.bf16 %v3476, %v3476
        %v3478 = vpack.c.bf16 %v3412, %v3412
        %v3480 = vsel %vm975, %v3477, 0
        %v3483 = vsel %vm992, %v3478, 0
        %3485 = vmatprep.subr.bf16.mxu0 0
        %3486 = vmatpush1.bf16.msra.mxu0 0
        %3487 = vmatprep.subr.bf16.mxu0 0
        %3488 = vmatpush1.bf16.msra.mxu0 0
        %3489 = vmatprep.subr.bf16.mxu0 0
        %3490 = vmatpush1.bf16.msra.mxu0 0
        %3491 = vmatprep.subr.bf16.mxu0 0
        %3492 = vmatpush1.bf16.msra.mxu0 0
        %3493 = vmatprep.subr.bf16.mxu0 0
        %3494 = vmatpush1.bf16.msra.mxu0 0
        %3495 = vmatprep.subr.bf16.mxu0 0
        %3496 = vmatpush1.bf16.msra.mxu0 0
        %3497 = vmatprep.subr.bf16.mxu0 0
        %3498 = vmatpush1.bf16.msra.mxu0 0
        %3499 = vmatprep.subr.bf16.mxu0 0
        %3500 = vmatpush1.bf16.msra.mxu0 %v3483
        %3501 = vmatprep.subr.bf16.mxu0 0
        %3502 = vmatpush2.bf16.msra.mxu0 0
        %3503 = vmatprep.subr.bf16.mxu0 0
        %3504 = vmatpush2.bf16.msra.mxu0 0
        %3505 = vmatprep.subr.bf16.mxu0 0
        %3506 = vmatpush2.bf16.msra.mxu0 0
        %3507 = vmatprep.subr.bf16.mxu0 0
        %3508 = vmatpush2.bf16.msra.mxu0 0
        %3509 = vmatprep.subr.bf16.mxu0 0
        %3510 = vmatpush2.bf16.msra.mxu0 0
        %3511 = vmatprep.subr.bf16.mxu0 0
        %3512 = vmatpush2.bf16.msra.mxu0 0
        %3513 = vmatprep.subr.bf16.mxu0 0
        %3514 = vmatpush2.bf16.msra.mxu0 0
        %3515 = vmatprep.subr.bf16.mxu0 0
        %3516 = vmatpush2.bf16.msra.mxu0 0
        %3517 = vmatprep.mubr.bf16.mxu0 0
        %3518 = vmatmul.mubr.bf16.gmra.mxu0 %v3480
        %v3519 = vpop.f32.mrf.mxu0
        %v3520 = vadd.f32 0.0, %v3519
        %v3521 = vpop.f32.mrf.mxu0
        %v3522 = vpop.f32.mrf.mxu0
        %v3523 = vpop.f32.mrf.mxu0
        %3524 = vdwg.mxu0
        %v3525 = vpack.c.bf16 %v3520, %v3520
        %v3530 = vunpack.c.l.b16 %v2385
        %v3531 = vunpack.c.l.b16 %v2386
        %v3532 = vunpack.c.l.b16 %v2387
        %v3533 = vunpack.c.l.b16 %v2388
        %v3534 = vpack.c.b16 %v3531, %v3530
        %v3535 = vpack.c.b16 %v3533, %v3532
        %v3539 = vsel %vm778, %v3525, 0
        %3541 = vmatprep.subr.bf16.mxu0 0
        %3542 = vmatpush1.bf16.msra.mxu0 0
        %3543 = vmatprep.subr.bf16.mxu0 0
        %3544 = vmatpush1.bf16.msra.mxu0 0
        %3545 = vmatprep.subr.bf16.mxu0 0
        %3546 = vmatpush1.bf16.msra.mxu0 0
        %3547 = vmatprep.subr.bf16.mxu0 0
        %3548 = vmatpush1.bf16.msra.mxu0 0
        %3549 = vmatprep.subr.bf16.mxu0 0
        %3550 = vmatpush1.bf16.msra.mxu0 0
        %3551 = vmatprep.subr.bf16.mxu0 0
        %3552 = vmatpush1.bf16.msra.mxu0 0
        %3553 = vmatprep.subr.bf16.mxu0 0
        %3554 = vmatpush1.bf16.msra.mxu0 %v3535
        %3555 = vmatprep.subr.bf16.mxu0 0
        %3556 = vmatpush1.bf16.msra.mxu0 %v3534
        %3557 = vmatprep.subr.bf16.mxu0 0
        %3558 = vmatpush2.bf16.msra.mxu0 0
        %3559 = vmatprep.subr.bf16.mxu0 0
        %3560 = vmatpush2.bf16.msra.mxu0 0
        %3561 = vmatprep.subr.bf16.mxu0 0
        %3562 = vmatpush2.bf16.msra.mxu0 0
        %3563 = vmatprep.subr.bf16.mxu0 0
        %3564 = vmatpush2.bf16.msra.mxu0 0
        %3565 = vmatprep.subr.bf16.mxu0 0
        %3566 = vmatpush2.bf16.msra.mxu0 0
        %3567 = vmatprep.subr.bf16.mxu0 0
        %3568 = vmatpush2.bf16.msra.mxu0 0
        %3569 = vmatprep.subr.bf16.mxu0 0
        %3570 = vmatpush2.bf16.msra.mxu0 0
        %3571 = vmatprep.subr.bf16.mxu0 0
        %3572 = vmatpush2.bf16.msra.mxu0 0
        %3573 = vmatprep.mubr.bf16.mxu0 0
        %3574 = vmatmul.mubr.bf16.gmra.mxu0 %v3539
        %v3575 = vpop.f32.mrf.mxu0
        %v3576 = vadd.f32 0.0, %v3575
        %v3577 = vpop.f32.mrf.mxu0
        %v3578 = vpop.f32.mrf.mxu0
        %v3579 = vpop.f32.mrf.mxu0
        %3580 = vdwg.mxu0
        %v3581 = vadd.f32 %v3291, %v3576
        %s3582 = scalar_lea.vmem %s7, 1
        %v3583 = vld [vmem:[%s3582] sm:$0x1]
        %v3585 = vlaneseq
        %v3586 = vshrl.u32 %v3585, 7
        %v3587 = vsub.s32 0, %v3586
        %v3588 = vrot.slane %v3583, %v3587
        %v3590 = vadd.f32 %v3581, %v3588
        %v3591 = vadd.f32 %v3590, %v2355
        %s3592 = scalar_lea.vmem %s8, 1
        %v3593 = vld [vmem:[%s3592] sm:$0x1]
        %s3594 = scalar_lea.vmem %s9, 1
        %v3595 = vld [vmem:[%s3594] sm:$0x1]
        %3596 = vadd.xlane.f32.xlu0 %v3591
        %v3597 = vpop.xlane.xlu0 %3596
        %v3598 = vmul.f32 %v3597, %v1975
        %v3599 = vsub.f32 %v3591, %v3598
        %v3600 = vmul.f32 %v3599, %v3599
        %3601 = vadd.xlane.f32.xlu0 %v3600
        %v3602 = vpop.xlane.xlu0 %3601
        %v3603 = vmul.f32 %v3602, %v1975
        %v3604 = vadd.f32 %v3603, 1e-05
        %v3605 = vrsqrt.pop %v3604
        %v3606 = vmul.f32 %v3599, %v3605
        %v3608 = vlaneseq
        %v3609 = vshrl.u32 %v3608, 7
        %v3610 = vsub.s32 0, %v3609
        %v3611 = vrot.slane %v3593, %v3610
        %v3613 = vmul.f32 %v3606, %v3611
        %v3615 = vlaneseq
        %v3616 = vshrl.u32 %v3615, 7
        %v3617 = vsub.s32 0, %v3616
        %v3618 = vrot.slane %v3595, %v3617
        %v3620 = vadd.f32 %v3613, %v3618
        %v3621 = vpack.c.bf16 %v3620, %v3620
        %s3622 = scalar_lea.vmem [#allocation14], 128
        %v3623 = vld [vmem:[%s3622] sm:$0xff]
        %v3624 = vld [vmem:[%s3622 + $0x8] sm:$0xff]
        %v3625 = vld [vmem:[%s3622 + $0x10] sm:$0xff]
        %v3626 = vld [vmem:[%s3622 + $0x18] sm:$0xff]
        %v3627 = vld [vmem:[%s3622 + $0x20] sm:$0xff]
        %v3628 = vld [vmem:[%s3622 + $0x28] sm:$0xff]
        %v3629 = vld [vmem:[%s3622 + $0x30] sm:$0xff]
        %v3630 = vld [vmem:[%s3622 + $0x38] sm:$0xff]
        %v3631 = vld [vmem:[%s3622 + $0x40] sm:$0xff]
        %v3632 = vld [vmem:[%s3622 + $0x48] sm:$0xff]
        %v3633 = vld [vmem:[%s3622 + $0x50] sm:$0xff]
        %v3634 = vld [vmem:[%s3622 + $0x58] sm:$0xff]
        %v3635 = vld [vmem:[%s3622 + $0x60] sm:$0xff]
        %v3636 = vld [vmem:[%s3622 + $0x68] sm:$0xff]
        %v3637 = vld [vmem:[%s3622 + $0x70] sm:$0xff]
        %v3638 = vld [vmem:[%s3622 + $0x78] sm:$0xff]
        %s3639 = scalar_lea.vmem %s13, 2
        %v3640 = vld [vmem:[%s3639] sm:$0x3]
        %v3642 = vlaneseq
        %v3643 = vshrl.u32 %v3642, 7
        %v3644 = vsub.s32 0, %v3643
        %v3645 = vrot.slane %v3640, %v3644
        %v3646 = vlaneseq
        %v3647 = vshrl.u32 %v3646, 7
        %v3648 = vsub.s32 1, %v3647
        %v3649 = vrot.slane %v3640, %v3648
        %v3668 = vunpack.c.l.b16 %v3623
        %v3669 = vunpack.c.h.b16 %v3623
        %v3670 = vunpack.c.l.b16 %v3624
        %v3671 = vunpack.c.h.b16 %v3624
        %v3672 = vunpack.c.l.b16 %v3625
        %v3673 = vunpack.c.h.b16 %v3625
        %v3674 = vunpack.c.l.b16 %v3626
        %v3675 = vunpack.c.h.b16 %v3626
        %v3676 = vunpack.c.l.b16 %v3627
        %v3677 = vunpack.c.h.b16 %v3627
        %v3678 = vunpack.c.l.b16 %v3628
        %v3679 = vunpack.c.h.b16 %v3628
        %v3680 = vunpack.c.l.b16 %v3629
        %v3681 = vunpack.c.h.b16 %v3629
        %v3682 = vunpack.c.l.b16 %v3630
        %v3683 = vunpack.c.h.b16 %v3630
        %v3684 = vunpack.c.l.b16 %v3631
        %v3685 = vunpack.c.h.b16 %v3631
        %v3686 = vunpack.c.l.b16 %v3632
        %v3687 = vunpack.c.h.b16 %v3632
        %v3688 = vunpack.c.l.b16 %v3633
        %v3689 = vunpack.c.h.b16 %v3633
        %v3690 = vunpack.c.l.b16 %v3634
        %v3691 = vunpack.c.h.b16 %v3634
        %v3692 = vunpack.c.l.b16 %v3635
        %v3693 = vunpack.c.h.b16 %v3635
        %v3694 = vunpack.c.l.b16 %v3636
        %v3695 = vunpack.c.h.b16 %v3636
        %v3696 = vunpack.c.l.b16 %v3637
        %v3697 = vunpack.c.h.b16 %v3637
        %v3698 = vunpack.c.l.b16 %v3638
        %v3699 = vunpack.c.h.b16 %v3638
        %v3700 = vpack.c.b16 %v3670, %v3668
        %v3701 = vpack.c.b16 %v3671, %v3669
        %v3702 = vpack.c.b16 %v3674, %v3672
        %v3703 = vpack.c.b16 %v3675, %v3673
        %v3704 = vpack.c.b16 %v3678, %v3676
        %v3705 = vpack.c.b16 %v3679, %v3677
        %v3706 = vpack.c.b16 %v3682, %v3680
        %v3707 = vpack.c.b16 %v3683, %v3681
        %v3708 = vpack.c.b16 %v3686, %v3684
        %v3709 = vpack.c.b16 %v3687, %v3685
        %v3710 = vpack.c.b16 %v3690, %v3688
        %v3711 = vpack.c.b16 %v3691, %v3689
        %v3712 = vpack.c.b16 %v3694, %v3692
        %v3713 = vpack.c.b16 %v3695, %v3693
        %v3714 = vpack.c.b16 %v3698, %v3696
        %v3715 = vpack.c.b16 %v3699, %v3697
        %3732 = vmatprep.subr.bf16.mxu0 %v3715
        %3733 = vmatpush1.bf16.msra.mxu0 %v3714
        %3734 = vmatprep.subr.bf16.mxu0 %v3713
        %3735 = vmatpush1.bf16.msra.mxu0 %v3712
        %3736 = vmatprep.subr.bf16.mxu0 %v3711
        %3737 = vmatpush1.bf16.msra.mxu0 %v3710
        %3738 = vmatprep.subr.bf16.mxu0 %v3709
        %3739 = vmatpush1.bf16.msra.mxu0 %v3708
        %3740 = vmatprep.subr.bf16.mxu0 %v3707
        %3741 = vmatpush1.bf16.msra.mxu0 %v3706
        %3742 = vmatprep.subr.bf16.mxu0 %v3705
        %3743 = vmatpush1.bf16.msra.mxu0 %v3704
        %3744 = vmatprep.subr.bf16.mxu0 %v3703
        %3745 = vmatpush1.bf16.msra.mxu0 %v3702
        %3746 = vmatprep.subr.bf16.mxu0 %v3701
        %3747 = vmatpush1.bf16.msra.mxu0 %v3700
        %3748 = vmatprep.subr.bf16.mxu0 0
        %3749 = vmatpush2.bf16.msra.mxu0 0
        %3750 = vmatprep.subr.bf16.mxu0 0
        %3751 = vmatpush2.bf16.msra.mxu0 0
        %3752 = vmatprep.subr.bf16.mxu0 0
        %3753 = vmatpush2.bf16.msra.mxu0 0
        %3754 = vmatprep.subr.bf16.mxu0 0
        %3755 = vmatpush2.bf16.msra.mxu0 0
        %3756 = vmatprep.subr.bf16.mxu0 0
        %3757 = vmatpush2.bf16.msra.mxu0 0
        %3758 = vmatprep.subr.bf16.mxu0 0
        %3759 = vmatpush2.bf16.msra.mxu0 0
        %3760 = vmatprep.subr.bf16.mxu0 0
        %3761 = vmatpush2.bf16.msra.mxu0 0
        %3762 = vmatprep.subr.bf16.mxu0 0
        %3763 = vmatpush2.bf16.msra.mxu0 0
        %3764 = vmatprep.mubr.bf16.mxu0 0
        %3765 = vmatmul.mubr.bf16.gmra.mxu0 %v3621
        %v3766 = vpop.f32.mrf.mxu0
        %v3767 = vadd.f32 %v3645, %v3766
        %v3768 = vpop.f32.mrf.mxu0
        %v3769 = vadd.f32 %v3649, %v3768
        %v3770 = vpop.f32.mrf.mxu0
        %v3771 = vpop.f32.mrf.mxu0
        %3772 = vdwg.mxu0
        %v3773 = vmax.f32 %v3767, 0.0
        %v3774 = vmax.f32 %v3769, 0.0
        %v3775 = vpack.c.bf16 %v3773, %v3773
        %v3776 = vpack.c.bf16 %v3774, %v3774
        %s3777 = scalar_lea.vmem [#allocation16], 128
        %v3778 = vld [vmem:[%s3777] sm:$0xf]
        %v3779 = vld [vmem:[%s3777 + $0x4] sm:$0xf]
        %v3780 = vld [vmem:[%s3777 + $0x8] sm:$0xf]
        %v3781 = vld [vmem:[%s3777 + $0xc] sm:$0xf]
        %v3782 = vld [vmem:[%s3777 + $0x10] sm:$0xf]
        %v3783 = vld [vmem:[%s3777 + $0x14] sm:$0xf]
        %v3784 = vld [vmem:[%s3777 + $0x18] sm:$0xf]
        %v3785 = vld [vmem:[%s3777 + $0x1c] sm:$0xf]
        %v3786 = vld [vmem:[%s3777 + $0x20] sm:$0xf]
        %v3787 = vld [vmem:[%s3777 + $0x24] sm:$0xf]
        %v3788 = vld [vmem:[%s3777 + $0x28] sm:$0xf]
        %v3789 = vld [vmem:[%s3777 + $0x2c] sm:$0xf]
        %v3790 = vld [vmem:[%s3777 + $0x30] sm:$0xf]
        %v3791 = vld [vmem:[%s3777 + $0x34] sm:$0xf]
        %v3792 = vld [vmem:[%s3777 + $0x38] sm:$0xf]
        %v3793 = vld [vmem:[%s3777 + $0x3c] sm:$0xf]
        %v3794 = vld [vmem:[%s3777 + $0x40] sm:$0xf]
        %v3795 = vld [vmem:[%s3777 + $0x44] sm:$0xf]
        %v3796 = vld [vmem:[%s3777 + $0x48] sm:$0xf]
        %v3797 = vld [vmem:[%s3777 + $0x4c] sm:$0xf]
        %v3798 = vld [vmem:[%s3777 + $0x50] sm:$0xf]
        %v3799 = vld [vmem:[%s3777 + $0x54] sm:$0xf]
        %v3800 = vld [vmem:[%s3777 + $0x58] sm:$0xf]
        %v3801 = vld [vmem:[%s3777 + $0x5c] sm:$0xf]
        %v3802 = vld [vmem:[%s3777 + $0x60] sm:$0xf]
        %v3803 = vld [vmem:[%s3777 + $0x64] sm:$0xf]
        %v3804 = vld [vmem:[%s3777 + $0x68] sm:$0xf]
        %v3805 = vld [vmem:[%s3777 + $0x6c] sm:$0xf]
        %v3806 = vld [vmem:[%s3777 + $0x70] sm:$0xf]
        %v3807 = vld [vmem:[%s3777 + $0x74] sm:$0xf]
        %v3808 = vld [vmem:[%s3777 + $0x78] sm:$0xf]
        %v3809 = vld [vmem:[%s3777 + $0x7c] sm:$0xf]
        %s3810 = scalar_lea.vmem %s15, 1
        %v3811 = vld [vmem:[%s3810] sm:$0x1]
        %v3813 = vlaneseq
        %v3814 = vshrl.u32 %v3813, 7
        %v3815 = vsub.s32 0, %v3814
        %v3816 = vrot.slane %v3811, %v3815
        %v3850 = vunpack.c.l.b16 %v3778
        %v3851 = vunpack.c.l.b16 %v3779
        %v3852 = vunpack.c.l.b16 %v3780
        %v3853 = vunpack.c.l.b16 %v3781
        %v3854 = vunpack.c.l.b16 %v3782
        %v3855 = vunpack.c.l.b16 %v3783
        %v3856 = vunpack.c.l.b16 %v3784
        %v3857 = vunpack.c.l.b16 %v3785
        %v3858 = vunpack.c.l.b16 %v3786
        %v3859 = vunpack.c.l.b16 %v3787
        %v3860 = vunpack.c.l.b16 %v3788
        %v3861 = vunpack.c.l.b16 %v3789
        %v3862 = vunpack.c.l.b16 %v3790
        %v3863 = vunpack.c.l.b16 %v3791
        %v3864 = vunpack.c.l.b16 %v3792
        %v3865 = vunpack.c.l.b16 %v3793
        %v3866 = vunpack.c.l.b16 %v3794
        %v3867 = vunpack.c.l.b16 %v3795
        %v3868 = vunpack.c.l.b16 %v3796
        %v3869 = vunpack.c.l.b16 %v3797
        %v3870 = vunpack.c.l.b16 %v3798
        %v3871 = vunpack.c.l.b16 %v3799
        %v3872 = vunpack.c.l.b16 %v3800
        %v3873 = vunpack.c.l.b16 %v3801
        %v3874 = vunpack.c.l.b16 %v3802
        %v3875 = vunpack.c.l.b16 %v3803
        %v3876 = vunpack.c.l.b16 %v3804
        %v3877 = vunpack.c.l.b16 %v3805
        %v3878 = vunpack.c.l.b16 %v3806
        %v3879 = vunpack.c.l.b16 %v3807
        %v3880 = vunpack.c.l.b16 %v3808
        %v3881 = vunpack.c.l.b16 %v3809
        %v3882 = vpack.c.b16 %v3851, %v3850
        %v3883 = vpack.c.b16 %v3853, %v3852
        %v3884 = vpack.c.b16 %v3855, %v3854
        %v3885 = vpack.c.b16 %v3857, %v3856
        %v3886 = vpack.c.b16 %v3859, %v3858
        %v3887 = vpack.c.b16 %v3861, %v3860
        %v3888 = vpack.c.b16 %v3863, %v3862
        %v3889 = vpack.c.b16 %v3865, %v3864
        %v3890 = vpack.c.b16 %v3867, %v3866
        %v3891 = vpack.c.b16 %v3869, %v3868
        %v3892 = vpack.c.b16 %v3871, %v3870
        %v3893 = vpack.c.b16 %v3873, %v3872
        %v3894 = vpack.c.b16 %v3875, %v3874
        %v3895 = vpack.c.b16 %v3877, %v3876
        %v3896 = vpack.c.b16 %v3879, %v3878
        %v3897 = vpack.c.b16 %v3881, %v3880
        %3914 = vmatprep.subr.bf16.mxu0 0
        %3915 = vmatpush1.bf16.msra.mxu0 %v3889
        %3916 = vmatprep.subr.bf16.mxu0 0
        %3917 = vmatpush1.bf16.msra.mxu0 %v3888
        %3918 = vmatprep.subr.bf16.mxu0 0
        %3919 = vmatpush1.bf16.msra.mxu0 %v3887
        %3920 = vmatprep.subr.bf16.mxu0 0
        %3921 = vmatpush1.bf16.msra.mxu0 %v3886
        %3922 = vmatprep.subr.bf16.mxu0 0
        %3923 = vmatpush1.bf16.msra.mxu0 %v3885
        %3924 = vmatprep.subr.bf16.mxu0 0
        %3925 = vmatpush1.bf16.msra.mxu0 %v3884
        %3926 = vmatprep.subr.bf16.mxu0 0
        %3927 = vmatpush1.bf16.msra.mxu0 %v3883
        %3928 = vmatprep.subr.bf16.mxu0 0
        %3929 = vmatpush1.bf16.msra.mxu0 %v3882
        %3930 = vmatprep.subr.bf16.mxu0 0
        %3931 = vmatpush2.bf16.msra.mxu0 %v3897
        %3932 = vmatprep.subr.bf16.mxu0 0
        %3933 = vmatpush2.bf16.msra.mxu0 %v3896
        %3934 = vmatprep.subr.bf16.mxu0 0
        %3935 = vmatpush2.bf16.msra.mxu0 %v3895
        %3936 = vmatprep.subr.bf16.mxu0 0
        %3937 = vmatpush2.bf16.msra.mxu0 %v3894
        %3938 = vmatprep.subr.bf16.mxu0 0
        %3939 = vmatpush2.bf16.msra.mxu0 %v3893
        %3940 = vmatprep.subr.bf16.mxu0 0
        %3941 = vmatpush2.bf16.msra.mxu0 %v3892
        %3942 = vmatprep.subr.bf16.mxu0 0
        %3943 = vmatpush2.bf16.msra.mxu0 %v3891
        %3944 = vmatprep.subr.bf16.mxu0 0
        %3945 = vmatpush2.bf16.msra.mxu0 %v3890
        %3946 = vmatprep.mubr.bf16.mxu0 %v3776
        %3947 = vmatmul.mubr.bf16.gmra.mxu0 %v3775
        %v3948 = vpop.f32.mrf.mxu0
        %v3949 = vadd.f32 %v3816, %v3948
        %v3950 = vpop.f32.mrf.mxu0
        %v3951 = vpop.f32.mrf.mxu0
        %v3952 = vpop.f32.mrf.mxu0
        %3953 = vdwg.mxu0
        %v3954 = vadd.f32 %v3949, %v3620
        %s3955 = scalar_lea.vmem %s10, 1
        %v3956 = vld [vmem:[%s3955] sm:$0x1]
        %s3957 = scalar_lea.vmem %s11, 1
        %v3958 = vld [vmem:[%s3957] sm:$0x1]
        %3959 = vadd.xlane.f32.xlu0 %v3954
        %v3960 = vpop.xlane.xlu0 %3959
        %v3961 = vmul.f32 %v3960, %v1975
        %v3962 = vsub.f32 %v3954, %v3961
        %v3963 = vmul.f32 %v3962, %v3962
        %3964 = vadd.xlane.f32.xlu0 %v3963
        %v3965 = vpop.xlane.xlu0 %3964
        %v3966 = vmul.f32 %v3965, %v1975
        %v3967 = vadd.f32 %v3966, 1e-05
        %v3968 = vrsqrt.pop %v3967
        %v3969 = vmul.f32 %v3962, %v3968
        %v3971 = vlaneseq
        %v3972 = vshrl.u32 %v3971, 7
        %v3973 = vsub.s32 0, %v3972
        %v3974 = vrot.slane %v3956, %v3973
        %v3976 = vmul.f32 %v3969, %v3974
        %v3978 = vlaneseq
        %v3979 = vshrl.u32 %v3978, 7
        %v3980 = vsub.s32 0, %v3979
        %v3981 = vrot.slane %v3958, %v3980
        %v3983 = vadd.f32 %v3976, %v3981
        %3984 = vst [vmem:[%s650] sm:$0xff] %v3983
        %s3985 = sand.u32 %s386, 1
        %s3986 = scalar_lea.sflag [#allocation4], %s3985
        %s3987 = sand.u32 %s386, 1
        %s3988 = smul.addr %s3987, 8
        %s3989 = scalar_lea.vmem [#allocation17], %s3988
        // Predicated region
        $region121: #{tpu_custom_call.1} parent=83 // pred_check
          %p3990 = pneg %p396
        $region122: #{tpu_custom_call.1} parent=83 // pred_check_branch
          %3992 = sbr.rel (%p3990) target = $region124
        $region123: #{tpu_custom_call.1} parent=83 // pred_region
          %s3994 = ssub.s32 128, 128
          %3995 = vsyncadd %s3986, %s3994
          %s3996 = smul.addr %s37, 128
          %s3997 = scalar_lea.hbm %s16, %s3996
          %s3999 = sshll.u32 %s3989, 4
          %s4000 = int_to_ptr.vmem [resolvable:$true] %s3999
          %4002 = dma.vmem_to_hbm [thread:$0]  %s4000, 128, %s3997, %s3986
        $region124: #{tpu_custom_call.1} parent=83 // pred_fallthru
          _
      $region84: #{tpu_custom_call.1} parent=5 // pred_fallthru
        _
      %p4003 = scmp.le.s32.totalorder 2, %s32
      // Predicated region
      $region125: #{tpu_custom_call.1} parent=5 // pred_check
        %p4004 = pneg %p4003
      $region126: #{tpu_custom_call.1} parent=5 // pred_check_branch
        %4006 = sbr.rel (%p4004) target = $region128
      $region127: #{tpu_custom_call.1} parent=5 // pred_region
        %s4007 = ssub.s32 %s32, 2
        // Predicated region
        $region129: #{tpu_custom_call.1} parent=127 // pred_check
          %p4008 = pneg %p402
        $region130: #{tpu_custom_call.1} parent=127 // pred_check_branch
          %4010 = sbr.rel (%p4008) target = $region132
        $region131: #{tpu_custom_call.1} parent=127 // pred_region
          %s4011 = sand.u32 %s387, 1
          %s4012 = scalar_lea.sflag [#allocation4], %s4011
          %s4013 = sand.u32 %s387, 1
          %s4014 = smul.addr %s4013, 8
          %s4015 = scalar_lea.vmem [#allocation17], %s4014
          %4016 = dma.done %s4012, 128
        $region132: #{tpu_custom_call.1} parent=127 // pred_fallthru
          _
      $region128: #{tpu_custom_call.1} parent=5 // pred_fallthru
        _
    $region6: #{tpu_custom_call.1} parent=1 // loop_footer
      %s36 = sadd.s32 1, %s32
    $region7: #{tpu_custom_call.1} parent=1 // loop_footer_branch
      %31 = sbr.rel target = $region3
    $region8: #{tpu_custom_call.1} parent=1 // loop_exit
      _
    %4017 = vsyncpa [#allocation3], 1
    %s4018 = scalar_lea.sflag [#allocation3], 1
    %4019 = vsyncpa %s4018, 1
    %4020 = vsyncpa [#allocation6], 1
    %4021 = vsyncpa [#allocation9], 1
    %4022 = vsyncpa [#allocation12], 1
    %4023 = vsyncpa [#allocation15], 1
    %4024 = vsyncpa [#allocation4], 1
    %s4025 = scalar_lea.sflag [#allocation4], 1
    %4026 = vsyncpa %s4025, 1

</llo_original>
